<compile_context>
chip_gen: v6e
topology: v6e:2x2x1
jax: 0.10.0
libtpu: 0.0.40
codegen_flags: <defaults>
</compile_context>

<pallas_src>
import functools

import jax
import jax.numpy as jnp
from jax import lax
from jax.experimental import pallas as pl
from jax.experimental.pallas import tpu as pltpu

INPUT_DIM = 64
LATENT_DIM = 16
HIDDEN_DIM = 32

_HP = lax.Precision.HIGHEST


def autoencoder_kernel(x_ref,
                       w1t_ref, b1_ref,
                       wmt_ref, bm_ref,
                       w4t_ref, b4_ref,
                       out_ref):
    """Fused encoder+decoder MLP, batch-major.

    x_ref  : (TB, 64)   batch tile in natural HBM layout
    w1t_ref: (64, 32)   encoder.0 weight, pre-transposed to (in, out)
    wmt_ref: (32, 32)   fused middle weight (w3 @ w2).T
    w4t_ref: (32, 64)   decoder.2 weight, pre-transposed
    b*_ref : (1, out)   broadcast along the batch (sublane) axis
    out_ref: (TB, 64)
    """
    x = x_ref[...]

    # encoder.0 + ReLU
    h1 = jnp.dot(x, w1t_ref[...], preferred_element_type=jnp.float32,
                 precision=_HP) + b1_ref[...]
    h1 = jnp.maximum(h1, 0.0)

    # encoder.2 fused with decoder.0 (no activation in between), then ReLU
    h2 = jnp.dot(h1, wmt_ref[...], preferred_element_type=jnp.float32,
                 precision=_HP) + bm_ref[...]
    h2 = jnp.maximum(h2, 0.0)

    # decoder.2
    y = jnp.dot(h2, w4t_ref[...], preferred_element_type=jnp.float32,
                precision=_HP) + b4_ref[...]

    out_ref[...] = y.astype(out_ref.dtype)


def _round_up(n, m):
    return ((n + m - 1) // m) * m


@functools.partial(jax.jit, static_argnames=("tb",))
def simple_autoencoder(x, params, tb=8192):
    """x: [B, INPUT_DIM] float32. params: PyTorch-layout weights, (out,) biases."""
    B = x.shape[0]

    # Batch tile on the sublane axis: multiple of 8, capped at `tb`, and capped
    # at ~B/2 so the parallel grid has >=2 steps (v7x megacore + pipelining).
    half = _round_up(max(8, -(-B // 2)), 8)
    TB = max(8, min(tb, half))
    grid = -(-B // TB)          # ceil-div; last block is masked by Pallas

    # One-time (tiny) weight plumbing: transpose to (in, out), fuse the middle
    # pair, reshape biases to (1, out) for lane-wise broadcast.
    w1t = params["w1"].T                                              # (64, 32)
    wmt = jnp.dot(params["w3"], params["w2"], precision=_HP).T        # (32, 32)
    bm = jnp.dot(params["w3"], params["b2"], precision=_HP) + params["b3"]
    w4t = params["w4"].T                                              # (32, 64)

    b1 = params["b1"].reshape(1, HIDDEN_DIM)
    bm = bm.reshape(1, HIDDEN_DIM)
    b4 = params["b4"].reshape(1, INPUT_DIM)

    batch_spec = pl.BlockSpec((TB, INPUT_DIM), lambda i: (i, 0))

    def const_spec(shape):
        # Weight/bias stays VMEM-resident across all grid iterations.
        return pl.BlockSpec(shape, lambda i: (0, 0))

    # VMEM budget: double-buffered in+out tiles + intermediates + headroom,
    # capped well under v7x's 64 MiB physical VMEM.
    tile_bytes = TB * INPUT_DIM * 4
    vmem_limit_bytes = max(8 << 20, min(6 * tile_bytes + (4 << 20), 48 << 20))

    out = pl.pallas_call(
        autoencoder_kernel,
        out_shape=jax.ShapeDtypeStruct((B, INPUT_DIM), jnp.float32),
        grid=(grid,),
        in_specs=[
            batch_spec,
            const_spec((INPUT_DIM, HIDDEN_DIM)),  const_spec((1, HIDDEN_DIM)),
            const_spec((HIDDEN_DIM, HIDDEN_DIM)), const_spec((1, HIDDEN_DIM)),
            const_spec((HIDDEN_DIM, INPUT_DIM)),  const_spec((1, INPUT_DIM)),
        ],
        out_specs=batch_spec,
        compiler_params=pltpu.CompilerParams(
            dimension_semantics=("parallel",),
            vmem_limit_bytes=vmem_limit_bytes),
    )(x, w1t, b1, wmt, bm, w4t, b4)

    return out


def init_params(key):
    """PyTorch nn.Linear-style uniform fan-in init, (out, in) weights, (out,) biases."""
    def linear(key, fan_in, fan_out):
        kw, kb = jax.random.split(key)
        bound = 1.0 / jnp.sqrt(jnp.float32(fan_in))
        w = jax.random.uniform(kw, (fan_out, fan_in), jnp.float32, -bound, bound)
        b = jax.random.uniform(kb, (fan_out,), jnp.float32, -bound, bound)
        return w, b

    k1, k2, k3, k4 = jax.random.split(key, 4)
    w1, b1 = linear(k1, INPUT_DIM, HIDDEN_DIM)    # encoder.0
    w2, b2 = linear(k2, HIDDEN_DIM, LATENT_DIM)   # encoder.2
    w3, b3 = linear(k3, LATENT_DIM, HIDDEN_DIM)   # decoder.0
    w4, b4 = linear(k4, HIDDEN_DIM, INPUT_DIM)    # decoder.2
    return {"w1": w1, "b1": b1, "w2": w2, "b2": b2,
            "w3": w3, "b3": b3, "w4": w4, "b4": b4}


def reference_forward(x, p):
    """Pure-JAX reference matching PyTorch nn.Linear semantics (y = x @ W.T + b)."""
    h = jnp.maximum(jnp.dot(x, p["w1"].T, precision=_HP) + p["b1"], 0.0)
    z = jnp.dot(h, p["w2"].T, precision=_HP) + p["b2"]
    h2 = jnp.maximum(jnp.dot(z, p["w3"].T, precision=_HP) + p["b3"], 0.0)
    return jnp.dot(h2, p["w4"].T, precision=_HP) + p["b4"]


if __name__ == "__main__":
    key = jax.random.PRNGKey(0)
    kx, kp = jax.random.split(key)
    params = init_params(kp)

    # Batch of 200: multi-step grid (TB=104 -> 2 steps) with a ragged last block.
    for batch in (200, 8):
        x = jax.random.normal(jax.random.fold_in(kx, batch),
                              (batch, INPUT_DIM), jnp.float32)
        out = jax.block_until_ready(simple_autoencoder(x, params))
        ref = reference_forward(x, params)
        assert out.shape == (batch, INPUT_DIM)
        assert jnp.allclose(out, ref, atol=1e-4, rtol=1e-4), \
            f"mismatch vs reference at batch={batch}"

    print("KERNEL_OK")
</pallas_src>

<mosaic_0001>
module attributes {stable_mosaic.version = 11 : i64} {
  func.func @autoencoder_kernel(%arg0: i32, %arg1: memref<104x64xf32, #tpu.memory_space<vmem>>, %arg2: memref<64x32xf32, #tpu.memory_space<vmem>>, %arg3: memref<1x32xf32, #tpu.memory_space<vmem>>, %arg4: memref<32x32xf32, #tpu.memory_space<vmem>>, %arg5: memref<1x32xf32, #tpu.memory_space<vmem>>, %arg6: memref<32x64xf32, #tpu.memory_space<vmem>>, %arg7: memref<1x64xf32, #tpu.memory_space<vmem>>, %arg8: memref<104x64xf32, #tpu.memory_space<vmem>>) attributes {dimension_semantics = [#tpu.dimension_semantics<parallel>], iteration_bounds = array<i64: 2>, scalar_prefetch = 0 : i64, scratch_operands = 0 : i64, tpu.core_type = #tpu.core_type<tc>, window_params = [{transform_indices = @transform_0, window_bounds = array<i64: 104, 64>}, {pipeline_mode = #tpu.pipeline_mode<synchronous>, transform_indices = @transform_1, window_bounds = array<i64: 64, 32>}, {pipeline_mode = #tpu.pipeline_mode<synchronous>, transform_indices = @transform_2, window_bounds = array<i64: 1, 32>}, {pipeline_mode = #tpu.pipeline_mode<synchronous>, transform_indices = @transform_3, window_bounds = array<i64: 32, 32>}, {pipeline_mode = #tpu.pipeline_mode<synchronous>, transform_indices = @transform_4, window_bounds = array<i64: 1, 32>}, {pipeline_mode = #tpu.pipeline_mode<synchronous>, transform_indices = @transform_5, window_bounds = array<i64: 32, 64>}, {pipeline_mode = #tpu.pipeline_mode<synchronous>, transform_indices = @transform_6, window_bounds = array<i64: 1, 64>}, {transform_indices = @transform_7, window_bounds = array<i64: 104, 64>}]} {
    %c0 = arith.constant 0 : index
    %c0_0 = arith.constant 0 : index
    %0 = vector.load %arg1[%c0, %c0_0] : memref<104x64xf32, #tpu.memory_space<vmem>>, vector<104x64xf32>
    %c0_1 = arith.constant 0 : index
    %c0_2 = arith.constant 0 : index
    %1 = vector.load %arg2[%c0_1, %c0_2] : memref<64x32xf32, #tpu.memory_space<vmem>>, vector<64x32xf32>
    %cst = arith.constant dense<0.000000e+00> : vector<104x32xf32>
    %2 = tpu.matmul %0, %1, %cst {dimension_numbers = #tpu.dot_dimension_numbers<[1], [0], [0], [1], [0, 0, 1, 1], [], []>, precision = #tpu.contract_precision<fp32>} : vector<104x64xf32>, vector<64x32xf32>, vector<104x32xf32> -> vector<104x32xf32>
    %c0_3 = arith.constant 0 : index
    %c0_4 = arith.constant 0 : index
    %3 = vector.load %arg3[%c0_3, %c0_4] : memref<1x32xf32, #tpu.memory_space<vmem>>, vector<1x32xf32>
    %4 = vector.broadcast %3 : vector<1x32xf32> to vector<104x32xf32>
    %5 = arith.addf %2, %4 : vector<104x32xf32>
    %cst_5 = arith.constant 0.000000e+00 : f32
    %6 = vector.broadcast %cst_5 : f32 to vector<104x32xf32>
    %7 = arith.maximumf %5, %6 : vector<104x32xf32>
    %c0_6 = arith.constant 0 : index
    %c0_7 = arith.constant 0 : index
    %8 = vector.load %arg4[%c0_6, %c0_7] : memref<32x32xf32, #tpu.memory_space<vmem>>, vector<32x32xf32>
    %cst_8 = arith.constant dense<0.000000e+00> : vector<104x32xf32>
    %9 = tpu.matmul %7, %8, %cst_8 {dimension_numbers = #tpu.dot_dimension_numbers<[1], [0], [0], [1], [0, 0, 1, 1], [], []>, precision = #tpu.contract_precision<fp32>} : vector<104x32xf32>, vector<32x32xf32>, vector<104x32xf32> -> vector<104x32xf32>
    %c0_9 = arith.constant 0 : index
    %c0_10 = arith.constant 0 : index
    %10 = vector.load %arg5[%c0_9, %c0_10] : memref<1x32xf32, #tpu.memory_space<vmem>>, vector<1x32xf32>
    %11 = vector.broadcast %10 : vector<1x32xf32> to vector<104x32xf32>
    %12 = arith.addf %9, %11 : vector<104x32xf32>
    %cst_11 = arith.constant 0.000000e+00 : f32
    %13 = vector.broadcast %cst_11 : f32 to vector<104x32xf32>
    %14 = arith.maximumf %12, %13 : vector<104x32xf32>
    %c0_12 = arith.constant 0 : index
    %c0_13 = arith.constant 0 : index
    %15 = vector.load %arg6[%c0_12, %c0_13] : memref<32x64xf32, #tpu.memory_space<vmem>>, vector<32x64xf32>
    %cst_14 = arith.constant dense<0.000000e+00> : vector<104x64xf32>
    %16 = tpu.matmul %14, %15, %cst_14 {dimension_numbers = #tpu.dot_dimension_numbers<[1], [0], [0], [1], [0, 0, 1, 1], [], []>, precision = #tpu.contract_precision<fp32>} : vector<104x32xf32>, vector<32x64xf32>, vector<104x64xf32> -> vector<104x64xf32>
    %c0_15 = arith.constant 0 : index
    %c0_16 = arith.constant 0 : index
    %17 = vector.load %arg7[%c0_15, %c0_16] : memref<1x64xf32, #tpu.memory_space<vmem>>, vector<1x64xf32>
    %18 = vector.broadcast %17 : vector<1x64xf32> to vector<104x64xf32>
    %19 = arith.addf %16, %18 : vector<104x64xf32>
    %c0_17 = arith.constant 0 : index
    %c0_18 = arith.constant 0 : index
    %20 = vector.load %arg8[%c0_17, %c0_18] : memref<104x64xf32, #tpu.memory_space<vmem>>, vector<104x64xf32>
    tpu.vector_store %arg8[%c0_17, %c0_18], %19 {strides = array<i32>} : memref<104x64xf32, #tpu.memory_space<vmem>>, vector<104x64xf32>,
    return
  }
  func.func @transform_0(%arg0: i32) -> (i32, i32) {
    %c0_i32 = arith.constant 0 : i32
    %c0_i32_0 = arith.constant 0 : i32
    return %arg0, %c0_i32 : i32, i32
  }
  func.func @transform_1(%arg0: i32) -> (i32, i32) {
    %c0_i32 = arith.constant 0 : i32
    %c0_i32_0 = arith.constant 0 : i32
    %c0_i32_1 = arith.constant 0 : i32
    return %c0_i32, %c0_i32_0 : i32, i32
  }
  func.func @transform_2(%arg0: i32) -> (i32, i32) {
    %c0_i32 = arith.constant 0 : i32
    %c0_i32_0 = arith.constant 0 : i32
    %c0_i32_1 = arith.constant 0 : i32
    return %c0_i32, %c0_i32_0 : i32, i32
  }
  func.func @transform_3(%arg0: i32) -> (i32, i32) {
    %c0_i32 = arith.constant 0 : i32
    %c0_i32_0 = arith.constant 0 : i32
    %c0_i32_1 = arith.constant 0 : i32
    return %c0_i32, %c0_i32_0 : i32, i32
  }
  func.func @transform_4(%arg0: i32) -> (i32, i32) {
    %c0_i32 = arith.constant 0 : i32
    %c0_i32_0 = arith.constant 0 : i32
    %c0_i32_1 = arith.constant 0 : i32
    return %c0_i32, %c0_i32_0 : i32, i32
  }
  func.func @transform_5(%arg0: i32) -> (i32, i32) {
    %c0_i32 = arith.constant 0 : i32
    %c0_i32_0 = arith.constant 0 : i32
    %c0_i32_1 = arith.constant 0 : i32
    return %c0_i32, %c0_i32_0 : i32, i32
  }
  func.func @transform_6(%arg0: i32) -> (i32, i32) {
    %c0_i32 = arith.constant 0 : i32
    %c0_i32_0 = arith.constant 0 : i32
    %c0_i32_1 = arith.constant 0 : i32
    return %c0_i32, %c0_i32_0 : i32, i32
  }
  func.func @transform_7(%arg0: i32) -> (i32, i32) {
    %c0_i32 = arith.constant 0 : i32
    %c0_i32_0 = arith.constant 0 : i32
    return %arg0, %c0_i32 : i32, i32
  }
}

</mosaic_0001>

<llo_original>
// kernel: simple_autoencoder.1
$region0: #{simple_autoencoder.1}
  #allocation0 [shape = 'u32[]', space=smem, size = 0x4, offset = 0x4, fixed_abs, tag = 'smem constant byte address 0x4 - core index']
  #allocation1 [shape = 'u32[144,128]{1,0:T(1,128)}', space=vmem, size = 0x12000, scoped, tag = 'internal scratch']
  %s0 = inlined_call_operand.vmem [shape: f32[200,64], index: 0, kind: input, shape index: {}]
  %s1 = inlined_call_operand.vmem [shape: f32[64,32], index: 1, kind: input, shape index: {}]
  %s2 = inlined_call_operand.vmem [shape: f32[1,32], index: 2, kind: input, shape index: {}]
  %s3 = inlined_call_operand.vmem [shape: f32[32,32], index: 3, kind: input, shape index: {}]
  %s4 = inlined_call_operand.vmem [shape: f32[1,32], index: 4, kind: input, shape index: {}]
  %s5 = inlined_call_operand.vmem [shape: f32[32,64], index: 5, kind: input, shape index: {}]
  %s6 = inlined_call_operand.vmem [shape: f32[1,64], index: 6, kind: input, shape index: {}]
  %s7 = inlined_call_operand.vmem [shape: f32[200,64], index: 7, kind: output, shape index: {}]
  %s8 = sld [smem:[#allocation0]]
  $region109: #{simple_autoencoder.1} parent=0
    _
  %s10 = ssub.s32 1, %s8
  %s11 = scalar_select 0, %s10, %s8
  $region1: #{simple_autoencoder.1} parent=0
    #allocation2 [shape = 'u8[106496]{0}', space=vmem, size = 0x1a000, scoped, tag = 'output window, operand 0']
    loop: start=0, step=1, limit=4
    $region2: #{simple_autoencoder.1} parent=1 // loop_pre_header
      _
    $region3: #{simple_autoencoder.1} parent=1 // loop_header
      %s13 = sphi 0, %s17
      %p14 = scmp.ge.s32.totalorder %s13, 4
      %s23 = sphi 0, %s25
      %s26 = sphi 0, %s23
      %s27 = sphi 0, %s26
      %s43 = sphi 0, %s27
      %s47 = sphi 0, %s47
      %s49 = sphi 0, %s47
      %s50 = sphi 0, %s49
      %s64 = sphi 0, %s50
      %s68 = sphi 0, %s68
      %s70 = sphi 0, %s68
      %s71 = sphi 0, %s70
      %s85 = sphi 0, %s71
      %s89 = sphi 0, %s89
      %s91 = sphi 0, %s89
      %s92 = sphi 0, %s91
      %s106 = sphi 0, %s92
      %s110 = sphi 0, %s110
      %s112 = sphi 0, %s110
      %s113 = sphi 0, %s112
      %s127 = sphi 0, %s113
      %s131 = sphi 0, %s131
      %s133 = sphi 0, %s131
      %s134 = sphi 0, %s133
      %s148 = sphi 0, %s134
      %s152 = sphi 0, %s152
      %s154 = sphi 0, %s152
      %s155 = sphi 0, %s154
      %s169 = sphi 0, %s155
      %s175 = sphi 0, %s177
      %s178 = sphi 0, %s175
      %s179 = sphi 0, %s178
      %s195 = sphi 0, %s179
    $region4: #{simple_autoencoder.1} parent=1 // loop_header_branch
      %16 = sbr.rel (%p14) target = $region8
    $region5: #{simple_autoencoder.1} parent=1 // loop_body
      %s18 = ssub.s32 %s13, 1
      %s19 = ssub.s32 %s13, 2
      %s20 = sadd.s32 %s13, 1
      %s21 = ssub.s32 %s13, %s20
      %p22 = scmp.eq.s32.totalorder %s21, 0
      %s24 = sadd.s32 %s23, 1
      %s25 = scalar_select %p22, %s23, %s24
      %p28 = pneg %p22
      %p29 = scmp.eq.s32.totalorder %s13, 1
      %p30 = por %p28, %p29
      %p31 = scmp.ne.s32.totalorder %s23, %s26
      %p32 = scmp.eq.s32.totalorder %s13, 0
      %p33 = por %p31, %p32
      %p34 = scmp.ne.s32.totalorder %s23, %s26
      %p35 = scmp.eq.s32.totalorder %s18, 1
      %p36 = por %p34, %p35
      %p37 = scmp.ne.s32.totalorder %s26, %s27
      %p38 = scmp.eq.s32.totalorder %s18, 0
      %p39 = por %p37, %p38
      %p40 = scmp.ne.s32.totalorder %s26, %s27
      %p41 = scmp.eq.s32.totalorder %s19, 1
      %p42 = por %p40, %p41
      %p44 = scmp.ne.s32.totalorder %s27, %s43
      %p45 = scmp.eq.s32.totalorder %s19, 0
      %p46 = por %p44, %p45
      %s48 = sadd.s32 %s47, 1
      %p51 = scmp.eq.s32.totalorder %s13, 1
      %p52 = scmp.ne.s32.totalorder %s47, %s49
      %p53 = scmp.eq.s32.totalorder %s13, 0
      %p54 = por %p52, %p53
      %p55 = scmp.ne.s32.totalorder %s47, %s49
      %p56 = scmp.eq.s32.totalorder %s18, 1
      %p57 = por %p55, %p56
      %p58 = scmp.ne.s32.totalorder %s49, %s50
      %p59 = scmp.eq.s32.totalorder %s18, 0
      %p60 = por %p58, %p59
      %p61 = scmp.ne.s32.totalorder %s49, %s50
      %p62 = scmp.eq.s32.totalorder %s19, 1
      %p63 = por %p61, %p62
      %p65 = scmp.ne.s32.totalorder %s50, %s64
      %p66 = scmp.eq.s32.totalorder %s19, 0
      %p67 = por %p65, %p66
      %s69 = sadd.s32 %s68, 1
      %p72 = scmp.eq.s32.totalorder %s13, 1
      %p73 = scmp.ne.s32.totalorder %s68, %s70
      %p74 = scmp.eq.s32.totalorder %s13, 0
      %p75 = por %p73, %p74
      %p76 = scmp.ne.s32.totalorder %s68, %s70
      %p77 = scmp.eq.s32.totalorder %s18, 1
      %p78 = por %p76, %p77
      %p79 = scmp.ne.s32.totalorder %s70, %s71
      %p80 = scmp.eq.s32.totalorder %s18, 0
      %p81 = por %p79, %p80
      %p82 = scmp.ne.s32.totalorder %s70, %s71
      %p83 = scmp.eq.s32.totalorder %s19, 1
      %p84 = por %p82, %p83
      %p86 = scmp.ne.s32.totalorder %s71, %s85
      %p87 = scmp.eq.s32.totalorder %s19, 0
      %p88 = por %p86, %p87
      %s90 = sadd.s32 %s89, 1
      %p93 = scmp.eq.s32.totalorder %s13, 1
      %p94 = scmp.ne.s32.totalorder %s89, %s91
      %p95 = scmp.eq.s32.totalorder %s13, 0
      %p96 = por %p94, %p95
      %p97 = scmp.ne.s32.totalorder %s89, %s91
      %p98 = scmp.eq.s32.totalorder %s18, 1
      %p99 = por %p97, %p98
      %p100 = scmp.ne.s32.totalorder %s91, %s92
      %p101 = scmp.eq.s32.totalorder %s18, 0
      %p102 = por %p100, %p101
      %p103 = scmp.ne.s32.totalorder %s91, %s92
      %p104 = scmp.eq.s32.totalorder %s19, 1
      %p105 = por %p103, %p104
      %p107 = scmp.ne.s32.totalorder %s92, %s106
      %p108 = scmp.eq.s32.totalorder %s19, 0
      %p109 = por %p107, %p108
      %s111 = sadd.s32 %s110, 1
      %p114 = scmp.eq.s32.totalorder %s13, 1
      %p115 = scmp.ne.s32.totalorder %s110, %s112
      %p116 = scmp.eq.s32.totalorder %s13, 0
      %p117 = por %p115, %p116
      %p118 = scmp.ne.s32.totalorder %s110, %s112
      %p119 = scmp.eq.s32.totalorder %s18, 1
      %p120 = por %p118, %p119
      %p121 = scmp.ne.s32.totalorder %s112, %s113
      %p122 = scmp.eq.s32.totalorder %s18, 0
      %p123 = por %p121, %p122
      %p124 = scmp.ne.s32.totalorder %s112, %s113
      %p125 = scmp.eq.s32.totalorder %s19, 1
      %p126 = por %p124, %p125
      %p128 = scmp.ne.s32.totalorder %s113, %s127
      %p129 = scmp.eq.s32.totalorder %s19, 0
      %p130 = por %p128, %p129
      %s132 = sadd.s32 %s131, 1
      %p135 = scmp.eq.s32.totalorder %s13, 1
      %p136 = scmp.ne.s32.totalorder %s131, %s133
      %p137 = scmp.eq.s32.totalorder %s13, 0
      %p138 = por %p136, %p137
      %p139 = scmp.ne.s32.totalorder %s131, %s133
      %p140 = scmp.eq.s32.totalorder %s18, 1
      %p141 = por %p139, %p140
      %p142 = scmp.ne.s32.totalorder %s133, %s134
      %p143 = scmp.eq.s32.totalorder %s18, 0
      %p144 = por %p142, %p143
      %p145 = scmp.ne.s32.totalorder %s133, %s134
      %p146 = scmp.eq.s32.totalorder %s19, 1
      %p147 = por %p145, %p146
      %p149 = scmp.ne.s32.totalorder %s134, %s148
      %p150 = scmp.eq.s32.totalorder %s19, 0
      %p151 = por %p149, %p150
      %s153 = sadd.s32 %s152, 1
      %p156 = scmp.eq.s32.totalorder %s13, 1
      %p157 = scmp.ne.s32.totalorder %s152, %s154
      %p158 = scmp.eq.s32.totalorder %s13, 0
      %p159 = por %p157, %p158
      %p160 = scmp.ne.s32.totalorder %s152, %s154
      %p161 = scmp.eq.s32.totalorder %s18, 1
      %p162 = por %p160, %p161
      %p163 = scmp.ne.s32.totalorder %s154, %s155
      %p164 = scmp.eq.s32.totalorder %s18, 0
      %p165 = por %p163, %p164
      %p166 = scmp.ne.s32.totalorder %s154, %s155
      %p167 = scmp.eq.s32.totalorder %s19, 1
      %p168 = por %p166, %p167
      %p170 = scmp.ne.s32.totalorder %s155, %s169
      %p171 = scmp.eq.s32.totalorder %s19, 0
      %p172 = por %p170, %p171
      %s173 = ssub.s32 %s13, %s20
      %p174 = scmp.eq.s32.totalorder %s173, 0
      %s176 = sadd.s32 %s175, 1
      %s177 = scalar_select %p174, %s175, %s176
      %p180 = pneg %p174
      %p181 = scmp.eq.s32.totalorder %s13, 1
      %p182 = por %p180, %p181
      %p183 = scmp.ne.s32.totalorder %s175, %s178
      %p184 = scmp.eq.s32.totalorder %s13, 0
      %p185 = por %p183, %p184
      %p186 = scmp.ne.s32.totalorder %s175, %s178
      %p187 = scmp.eq.s32.totalorder %s18, 1
      %p188 = por %p186, %p187
      %p189 = scmp.ne.s32.totalorder %s178, %s179
      %p190 = scmp.eq.s32.totalorder %s18, 0
      %p191 = por %p189, %p190
      %p192 = scmp.ne.s32.totalorder %s178, %s179
      %p193 = scmp.eq.s32.totalorder %s19, 1
      %p194 = por %p192, %p193
      %p196 = scmp.ne.s32.totalorder %s179, %s195
      %p197 = scmp.eq.s32.totalorder %s19, 0
      %p198 = por %p196, %p197
      %p199 = scmp.le.s32.totalorder 1, %s13
      %p200 = scmp.lt.s32.totalorder %s13, 3
      %p201 = pnand %p199, %p200
      %p202 = pneg %p201
      // Predicated region
      $region9: #{simple_autoencoder.1} parent=5 // pred_check
        _
      $region10: #{simple_autoencoder.1} parent=5 // pred_check_branch
        %204 = sbr.rel (%p201) target = $region12
      $region11: #{simple_autoencoder.1} parent=5 // pred_region
        %s205 = ssub.s32 %s13, 1
        // Predicated region
        $region13: #{simple_autoencoder.1} parent=11 // pred_check
          %p206 = pneg %p60
        $region14: #{simple_autoencoder.1} parent=11 // pred_check_branch
          %208 = sbr.rel (%p206) target = $region16
        $region15: #{simple_autoencoder.1} parent=11 // pred_region
          _
        $region16: #{simple_autoencoder.1} parent=11 // pred_fallthru
          _
        // Predicated region
        $region17: #{simple_autoencoder.1} parent=11 // pred_check
          %p209 = pneg %p81
        $region18: #{simple_autoencoder.1} parent=11 // pred_check_branch
          %211 = sbr.rel (%p209) target = $region20
        $region19: #{simple_autoencoder.1} parent=11 // pred_region
          _
        $region20: #{simple_autoencoder.1} parent=11 // pred_fallthru
          _
        // Predicated region
        $region21: #{simple_autoencoder.1} parent=11 // pred_check
          %p212 = pneg %p102
        $region22: #{simple_autoencoder.1} parent=11 // pred_check_branch
          %214 = sbr.rel (%p212) target = $region24
        $region23: #{simple_autoencoder.1} parent=11 // pred_region
          _
        $region24: #{simple_autoencoder.1} parent=11 // pred_fallthru
          _
        // Predicated region
        $region25: #{simple_autoencoder.1} parent=11 // pred_check
          %p215 = pneg %p123
        $region26: #{simple_autoencoder.1} parent=11 // pred_check_branch
          %217 = sbr.rel (%p215) target = $region28
        $region27: #{simple_autoencoder.1} parent=11 // pred_region
          _
        $region28: #{simple_autoencoder.1} parent=11 // pred_fallthru
          _
        // Predicated region
        $region29: #{simple_autoencoder.1} parent=11 // pred_check
          %p218 = pneg %p144
        $region30: #{simple_autoencoder.1} parent=11 // pred_check_branch
          %220 = sbr.rel (%p218) target = $region32
        $region31: #{simple_autoencoder.1} parent=11 // pred_region
          _
        $region32: #{simple_autoencoder.1} parent=11 // pred_fallthru
          _
        // Predicated region
        $region33: #{simple_autoencoder.1} parent=11 // pred_check
          %p221 = pneg %p165
        $region34: #{simple_autoencoder.1} parent=11 // pred_check_branch
          %223 = sbr.rel (%p221) target = $region36
        $region35: #{simple_autoencoder.1} parent=11 // pred_region
          _
        $region36: #{simple_autoencoder.1} parent=11 // pred_fallthru
          _
      $region12: #{simple_autoencoder.1} parent=5 // pred_fallthru
        _
      %p224 = scmp.lt.s32.totalorder %s13, 2
      // Predicated region
      $region37: #{simple_autoencoder.1} parent=5 // pred_check
        %p225 = pneg %p224
      $region38: #{simple_autoencoder.1} parent=5 // pred_check_branch
        %227 = sbr.rel (%p225) target = $region40
      $region39: #{simple_autoencoder.1} parent=5 // pred_region
        // Predicated region
        $region41: #{simple_autoencoder.1} parent=39 // pred_check
          %p228 = pneg %p33
        $region42: #{simple_autoencoder.1} parent=39 // pred_check_branch
          %230 = sbr.rel (%p228) target = $region44
        $region43: #{simple_autoencoder.1} parent=39 // pred_region
          %s231 = smul.u32 13, %s13
          %s232 = ssub.s32 25, %s231
          %p233 = scmp.lt.s32.totalorder %s232, 13
          %s234 = scalar_select %p233, %s232, 13
          %s235 = smul.u32 128, %s234
          %p236 = scmp.lt.s32.totalorder %s231, 24
          %s237 = scalar_select %p236, %s231, 24
          %s238 = smul.addr %s237, 8
          %s239 = scalar_lea.vmem %s0, %s238
          %s240 = smul.u32 13, %s13
          %s241 = ssub.s32 25, %s240
          %p242 = scmp.lt.s32.totalorder %s241, 13
          %s243 = scalar_select %p242, %s241, 13
          %s244 = smul.u32 128, %s243
        $region44: #{simple_autoencoder.1} parent=39 // pred_fallthru
          _
      $region40: #{simple_autoencoder.1} parent=5 // pred_fallthru
        _
      %p245 = scmp.le.s32.totalorder 1, %s13
      %p246 = scmp.lt.s32.totalorder %s13, 3
      %p247 = pnand %p245, %p246
      %p248 = pneg %p247
      // Predicated region
      $region45: #{simple_autoencoder.1} parent=5 // pred_check
        _
      $region46: #{simple_autoencoder.1} parent=5 // pred_check_branch
        %250 = sbr.rel (%p247) target = $region48
      $region47: #{simple_autoencoder.1} parent=5 // pred_region
        %s251 = ssub.s32 %s13, 1
        %s252 = smul.u32 13, %s18
        %s253 = ssub.s32 25, %s252
        %p254 = scmp.lt.s32.totalorder %s253, 13
        %s255 = scalar_select %p254, %s253, 13
        %s256 = smul.u32 128, %s255
        %p257 = scmp.lt.s32.totalorder %s252, 24
        %s258 = scalar_select %p257, %s252, 24
        %s259 = smul.addr %s258, 8
        %s260 = scalar_lea.vmem %s0, %s259
        %p261 = pneg %p39
        %p262 = pneg %p36
        %p263 = pneg %p60
        %p264 = pneg %p57
        %p265 = pneg %p81
        %p266 = pneg %p78
        %p267 = pneg %p102
        %p268 = pneg %p99
        %p269 = pneg %p123
        %p270 = pneg %p120
        %p271 = pneg %p144
        %p272 = pneg %p141
        %p273 = pneg %p165
        %p274 = pneg %p162
        %p275 = pneg %p191
        %p276 = pneg %p188
        %s277 = sand.u32 %s178, 1
        %s278 = sand.u32 %s178, 1
        %s279 = smul.addr %s278, 104
        %s280 = scalar_lea.vmem [#allocation2], %s279
        %s281 = smul.u32 13, %s18
        %s282 = ssub.s32 25, %s281
        %p283 = scmp.lt.s32.totalorder %s282, 13
        %s284 = scalar_select %p283, %s282, 13
        %s285 = smul.u32 128, %s284
        %p286 = scmp.lt.s32.totalorder %s281, 24
        %s287 = scalar_select %p286, %s281, 24
        %s288 = smul.addr %s287, 8
        %s289 = scalar_lea.vmem %s0, %s288
        %s290 = smul.u32 13, %s18
        %s291 = ssub.s32 25, %s290
        %p292 = scmp.lt.s32.totalorder %s291, 13
        %s293 = scalar_select %p292, %s291, 13
        %s294 = smul.u32 128, %s293
        %s295 = smul.u32 13, %s18
        %s296 = ssub.s32 25, %s295
        %p297 = scmp.lt.s32.totalorder %s296, 13
        %s298 = scalar_select %p297, %s296, 13
        %s299 = smul.u32 128, %s298
        %v300 = vld [vmem:[%s289] sm:$0xff]
        %v301 = vld [vmem:[%s289 + $0x8] sm:$0xff]
        %v302 = vld [vmem:[%s289 + $0x10] sm:$0xff]
        %v303 = vld [vmem:[%s289 + $0x18] sm:$0xff]
        %v304 = vld [vmem:[%s289 + $0x20] sm:$0xff]
        %v305 = vld [vmem:[%s289 + $0x28] sm:$0xff]
        %v306 = vld [vmem:[%s289 + $0x30] sm:$0xff]
        %v307 = vld [vmem:[%s289 + $0x38] sm:$0xff]
        %v308 = vld [vmem:[%s289 + $0x40] sm:$0xff]
        %v309 = vld [vmem:[%s289 + $0x48] sm:$0xff]
        %v310 = vld [vmem:[%s289 + $0x50] sm:$0xff]
        %v311 = vld [vmem:[%s289 + $0x58] sm:$0xff]
        %v312 = vld [vmem:[%s289 + $0x60] sm:$0xff]
        %v313 = vld [vmem:[%s1] sm:$0xff]
        %v314 = vld [vmem:[%s1 + $0x8] sm:$0xff]
        %v315 = vld [vmem:[%s1 + $0x10] sm:$0xff]
        %v316 = vld [vmem:[%s1 + $0x18] sm:$0xff]
        %v317 = vld [vmem:[%s1 + $0x20] sm:$0xff]
        %v318 = vld [vmem:[%s1 + $0x28] sm:$0xff]
        %v319 = vld [vmem:[%s1 + $0x30] sm:$0xff]
        %v320 = vld [vmem:[%s1 + $0x38] sm:$0xff]
        %v321 = vld [vmem:[%s2] sm:$0x1]
        %v323 = vlaneseq
        %v324 = vshrl.u32 %v323, 7
        %v325 = vsub.s32 0, %v324
        %v326 = vrot.slane %v321, %v325
        %vm328 = vcmask 523264
        %v330 = vsel %vm328, %v300, 0
        %v333 = vsel %vm328, %v301, 0
        %v336 = vsel %vm328, %v302, 0
        %v339 = vsel %vm328, %v303, 0
        %v342 = vsel %vm328, %v304, 0
        %v345 = vsel %vm328, %v305, 0
        %v348 = vsel %vm328, %v306, 0
        %v351 = vsel %vm328, %v307, 0
        %v354 = vsel %vm328, %v308, 0
        %v357 = vsel %vm328, %v309, 0
        %v360 = vsel %vm328, %v310, 0
        %v363 = vsel %vm328, %v311, 0
        %v366 = vsel %vm328, %v312, 0
        %368 = vmatprep.subr.mxu0 0.0
        %369 = vmatpush1.msra.mxu0 0.0
        %370 = vmatprep.subr.mxu0 0.0
        %371 = vmatpush1.msra.mxu0 0.0
        %372 = vmatprep.subr.mxu0 0.0
        %373 = vmatpush1.msra.mxu0 0.0
        %374 = vmatprep.subr.mxu0 0.0
        %375 = vmatpush1.msra.mxu0 0.0
        %376 = vmatprep.subr.mxu0 0.0
        %377 = vmatpush1.msra.mxu0 0.0
        %378 = vmatprep.subr.mxu0 0.0
        %379 = vmatpush1.msra.mxu0 0.0
        %380 = vmatprep.subr.mxu0 0.0
        %381 = vmatpush1.msra.mxu0 0.0
        %382 = vmatprep.subr.mxu0 0.0
        %383 = vmatpush1.msra.mxu0 0.0
        %384 = vmatprep.subr.mxu0 0.0
        %v385 = vand.u32 %v320, 4294901760
        %386 = vmatpush1.msra.mxu0 %v385
        %387 = vmatprep.subr.mxu0 0.0
        %v388 = vand.u32 %v319, 4294901760
        %389 = vmatpush1.msra.mxu0 %v388
        %390 = vmatprep.subr.mxu0 0.0
        %v391 = vand.u32 %v318, 4294901760
        %392 = vmatpush1.msra.mxu0 %v391
        %393 = vmatprep.subr.mxu0 0.0
        %v394 = vand.u32 %v317, 4294901760
        %395 = vmatpush1.msra.mxu0 %v394
        %396 = vmatprep.subr.mxu0 0.0
        %v397 = vand.u32 %v316, 4294901760
        %398 = vmatpush1.msra.mxu0 %v397
        %399 = vmatprep.subr.mxu0 0.0
        %v400 = vand.u32 %v315, 4294901760
        %401 = vmatpush1.msra.mxu0 %v400
        %402 = vmatprep.subr.mxu0 0.0
        %v403 = vand.u32 %v314, 4294901760
        %404 = vmatpush1.msra.mxu0 %v403
        %405 = vmatprep.subr.mxu0 0.0
        %v406 = vand.u32 %v313, 4294901760
        %407 = vmatpush1.msra.mxu0 %v406
        %408 = vmatprep.subr.mxu0 0.0
        %409 = vmatpush2.msra.mxu0 0.0
        %410 = vmatprep.subr.mxu0 0.0
        %411 = vmatpush2.msra.mxu0 0.0
        %412 = vmatprep.subr.mxu0 0.0
        %413 = vmatpush2.msra.mxu0 0.0
        %414 = vmatprep.subr.mxu0 0.0
        %415 = vmatpush2.msra.mxu0 0.0
        %416 = vmatprep.subr.mxu0 0.0
        %417 = vmatpush2.msra.mxu0 0.0
        %418 = vmatprep.subr.mxu0 0.0
        %419 = vmatpush2.msra.mxu0 0.0
        %420 = vmatprep.subr.mxu0 0.0
        %421 = vmatpush2.msra.mxu0 0.0
        %422 = vmatprep.subr.mxu0 0.0
        %423 = vmatpush2.msra.mxu0 0.0
        %424 = vmatprep.subr.mxu0 0.0
        %425 = vmatpush2.msra.mxu0 0.0
        %426 = vmatprep.subr.mxu0 0.0
        %427 = vmatpush2.msra.mxu0 0.0
        %428 = vmatprep.subr.mxu0 0.0
        %429 = vmatpush2.msra.mxu0 0.0
        %430 = vmatprep.subr.mxu0 0.0
        %431 = vmatpush2.msra.mxu0 0.0
        %432 = vmatprep.subr.mxu0 0.0
        %433 = vmatpush2.msra.mxu0 0.0
        %434 = vmatprep.subr.mxu0 0.0
        %435 = vmatpush2.msra.mxu0 0.0
        %436 = vmatprep.subr.mxu0 0.0
        %437 = vmatpush2.msra.mxu0 0.0
        %438 = vmatprep.subr.mxu0 0.0
        %439 = vmatpush2.msra.mxu0 0.0
        %440 = vmatprep.mubr.f32.mxu0 0.0
        %v441 = vand.u32 %v330, 4294901760
        %v442 = vsub.f32 %v330, %v441
        %v443 = vand.u32 %v442, 4294901760
        %v444 = vsub.f32 %v442, %v443
        %v445 = vand.u32 %v444, 4294901760
        %446 = vmatmul.mubr.f32.gmra.mxu0 %v445
        %v447 = vpop.f32.mrf.mxu0
        %v448 = vadd.f32 %v326, %v447
        %v449 = vpop.f32.mrf.mxu0
        %450 = vmatprep.mubr.f32.mxu0 0.0
        %v451 = vand.u32 %v333, 4294901760
        %v452 = vsub.f32 %v333, %v451
        %v453 = vand.u32 %v452, 4294901760
        %v454 = vsub.f32 %v452, %v453
        %v455 = vand.u32 %v454, 4294901760
        %456 = vmatmul.mubr.f32.gmra.mxu0 %v455
        %v457 = vpop.f32.mrf.mxu0
        %v458 = vadd.f32 %v326, %v457
        %v459 = vpop.f32.mrf.mxu0
        %460 = vmatprep.mubr.f32.mxu0 0.0
        %v461 = vand.u32 %v336, 4294901760
        %v462 = vsub.f32 %v336, %v461
        %v463 = vand.u32 %v462, 4294901760
        %v464 = vsub.f32 %v462, %v463
        %v465 = vand.u32 %v464, 4294901760
        %466 = vmatmul.mubr.f32.gmra.mxu0 %v465
        %v467 = vpop.f32.mrf.mxu0
        %v468 = vadd.f32 %v326, %v467
        %v469 = vpop.f32.mrf.mxu0
        %470 = vmatprep.mubr.f32.mxu0 0.0
        %v471 = vand.u32 %v339, 4294901760
        %v472 = vsub.f32 %v339, %v471
        %v473 = vand.u32 %v472, 4294901760
        %v474 = vsub.f32 %v472, %v473
        %v475 = vand.u32 %v474, 4294901760
        %476 = vmatmul.mubr.f32.gmra.mxu0 %v475
        %v477 = vpop.f32.mrf.mxu0
        %v478 = vadd.f32 %v326, %v477
        %v479 = vpop.f32.mrf.mxu0
        %480 = vmatprep.mubr.f32.mxu0 0.0
        %v481 = vand.u32 %v342, 4294901760
        %v482 = vsub.f32 %v342, %v481
        %v483 = vand.u32 %v482, 4294901760
        %v484 = vsub.f32 %v482, %v483
        %v485 = vand.u32 %v484, 4294901760
        %486 = vmatmul.mubr.f32.gmra.mxu0 %v485
        %v487 = vpop.f32.mrf.mxu0
        %v488 = vadd.f32 %v326, %v487
        %v489 = vpop.f32.mrf.mxu0
        %490 = vmatprep.mubr.f32.mxu0 0.0
        %v491 = vand.u32 %v345, 4294901760
        %v492 = vsub.f32 %v345, %v491
        %v493 = vand.u32 %v492, 4294901760
        %v494 = vsub.f32 %v492, %v493
        %v495 = vand.u32 %v494, 4294901760
        %496 = vmatmul.mubr.f32.gmra.mxu0 %v495
        %v497 = vpop.f32.mrf.mxu0
        %v498 = vadd.f32 %v326, %v497
        %v499 = vpop.f32.mrf.mxu0
        %500 = vmatprep.mubr.f32.mxu0 0.0
        %v501 = vand.u32 %v348, 4294901760
        %v502 = vsub.f32 %v348, %v501
        %v503 = vand.u32 %v502, 4294901760
        %v504 = vsub.f32 %v502, %v503
        %v505 = vand.u32 %v504, 4294901760
        %506 = vmatmul.mubr.f32.gmra.mxu0 %v505
        %v507 = vpop.f32.mrf.mxu0
        %v508 = vadd.f32 %v326, %v507
        %v509 = vpop.f32.mrf.mxu0
        %510 = vmatprep.mubr.f32.mxu0 0.0
        %v511 = vand.u32 %v351, 4294901760
        %v512 = vsub.f32 %v351, %v511
        %v513 = vand.u32 %v512, 4294901760
        %v514 = vsub.f32 %v512, %v513
        %v515 = vand.u32 %v514, 4294901760
        %516 = vmatmul.mubr.f32.gmra.mxu0 %v515
        %v517 = vpop.f32.mrf.mxu0
        %v518 = vadd.f32 %v326, %v517
        %v519 = vpop.f32.mrf.mxu0
        %520 = vmatprep.mubr.f32.mxu0 0.0
        %v521 = vand.u32 %v354, 4294901760
        %v522 = vsub.f32 %v354, %v521
        %v523 = vand.u32 %v522, 4294901760
        %v524 = vsub.f32 %v522, %v523
        %v525 = vand.u32 %v524, 4294901760
        %526 = vmatmul.mubr.f32.gmra.mxu0 %v525
        %v527 = vpop.f32.mrf.mxu0
        %v528 = vadd.f32 %v326, %v527
        %v529 = vpop.f32.mrf.mxu0
        %530 = vmatprep.mubr.f32.mxu0 0.0
        %v531 = vand.u32 %v357, 4294901760
        %v532 = vsub.f32 %v357, %v531
        %v533 = vand.u32 %v532, 4294901760
        %v534 = vsub.f32 %v532, %v533
        %v535 = vand.u32 %v534, 4294901760
        %536 = vmatmul.mubr.f32.gmra.mxu0 %v535
        %v537 = vpop.f32.mrf.mxu0
        %v538 = vadd.f32 %v326, %v537
        %v539 = vpop.f32.mrf.mxu0
        %540 = vmatprep.mubr.f32.mxu0 0.0
        %v541 = vand.u32 %v360, 4294901760
        %v542 = vsub.f32 %v360, %v541
        %v543 = vand.u32 %v542, 4294901760
        %v544 = vsub.f32 %v542, %v543
        %v545 = vand.u32 %v544, 4294901760
        %546 = vmatmul.mubr.f32.gmra.mxu0 %v545
        %v547 = vpop.f32.mrf.mxu0
        %v548 = vadd.f32 %v326, %v547
        %v549 = vpop.f32.mrf.mxu0
        %550 = vmatprep.mubr.f32.mxu0 0.0
        %v551 = vand.u32 %v363, 4294901760
        %v552 = vsub.f32 %v363, %v551
        %v553 = vand.u32 %v552, 4294901760
        %v554 = vsub.f32 %v552, %v553
        %v555 = vand.u32 %v554, 4294901760
        %556 = vmatmul.mubr.f32.gmra.mxu0 %v555
        %v557 = vpop.f32.mrf.mxu0
        %v558 = vadd.f32 %v326, %v557
        %v559 = vpop.f32.mrf.mxu0
        %560 = vmatprep.mubr.f32.mxu0 0.0
        %v561 = vand.u32 %v366, 4294901760
        %v562 = vsub.f32 %v366, %v561
        %v563 = vand.u32 %v562, 4294901760
        %v564 = vsub.f32 %v562, %v563
        %v565 = vand.u32 %v564, 4294901760
        %566 = vmatmul.mubr.f32.gmra.mxu0 %v565
        %v567 = vpop.f32.mrf.mxu0
        %v568 = vadd.f32 %v326, %v567
        %v569 = vpop.f32.mrf.mxu0
        %570 = vdwg.mxu0
        %571 = vmatprep.subr.mxu0 0.0
        %572 = vmatpush1.msra.mxu0 0.0
        %573 = vmatprep.subr.mxu0 0.0
        %574 = vmatpush1.msra.mxu0 0.0
        %575 = vmatprep.subr.mxu0 0.0
        %576 = vmatpush1.msra.mxu0 0.0
        %577 = vmatprep.subr.mxu0 0.0
        %578 = vmatpush1.msra.mxu0 0.0
        %579 = vmatprep.subr.mxu0 0.0
        %580 = vmatpush1.msra.mxu0 0.0
        %581 = vmatprep.subr.mxu0 0.0
        %582 = vmatpush1.msra.mxu0 0.0
        %583 = vmatprep.subr.mxu0 0.0
        %584 = vmatpush1.msra.mxu0 0.0
        %585 = vmatprep.subr.mxu0 0.0
        %586 = vmatpush1.msra.mxu0 0.0
        %587 = vmatprep.subr.mxu0 0.0
        %v588 = vand.u32 %v320, 4294901760
        %v589 = vsub.f32 %v320, %v588
        %v590 = vand.u32 %v589, 4294901760
        %v591 = vsub.f32 %v589, %v590
        %v592 = vand.u32 %v591, 4294901760
        %593 = vmatpush1.msra.mxu0 %v592
        %594 = vmatprep.subr.mxu0 0.0
        %v595 = vand.u32 %v319, 4294901760
        %v596 = vsub.f32 %v319, %v595
        %v597 = vand.u32 %v596, 4294901760
        %v598 = vsub.f32 %v596, %v597
        %v599 = vand.u32 %v598, 4294901760
        %600 = vmatpush1.msra.mxu0 %v599
        %601 = vmatprep.subr.mxu0 0.0
        %v602 = vand.u32 %v318, 4294901760
        %v603 = vsub.f32 %v318, %v602
        %v604 = vand.u32 %v603, 4294901760
        %v605 = vsub.f32 %v603, %v604
        %v606 = vand.u32 %v605, 4294901760
        %607 = vmatpush1.msra.mxu0 %v606
        %608 = vmatprep.subr.mxu0 0.0
        %v609 = vand.u32 %v317, 4294901760
        %v610 = vsub.f32 %v317, %v609
        %v611 = vand.u32 %v610, 4294901760
        %v612 = vsub.f32 %v610, %v611
        %v613 = vand.u32 %v612, 4294901760
        %614 = vmatpush1.msra.mxu0 %v613
        %615 = vmatprep.subr.mxu0 0.0
        %v616 = vand.u32 %v316, 4294901760
        %v617 = vsub.f32 %v316, %v616
        %v618 = vand.u32 %v617, 4294901760
        %v619 = vsub.f32 %v617, %v618
        %v620 = vand.u32 %v619, 4294901760
        %621 = vmatpush1.msra.mxu0 %v620
        %622 = vmatprep.subr.mxu0 0.0
        %v623 = vand.u32 %v315, 4294901760
        %v624 = vsub.f32 %v315, %v623
        %v625 = vand.u32 %v624, 4294901760
        %v626 = vsub.f32 %v624, %v625
        %v627 = vand.u32 %v626, 4294901760
        %628 = vmatpush1.msra.mxu0 %v627
        %629 = vmatprep.subr.mxu0 0.0
        %v630 = vand.u32 %v314, 4294901760
        %v631 = vsub.f32 %v314, %v630
        %v632 = vand.u32 %v631, 4294901760
        %v633 = vsub.f32 %v631, %v632
        %v634 = vand.u32 %v633, 4294901760
        %635 = vmatpush1.msra.mxu0 %v634
        %636 = vmatprep.subr.mxu0 0.0
        %v637 = vand.u32 %v313, 4294901760
        %v638 = vsub.f32 %v313, %v637
        %v639 = vand.u32 %v638, 4294901760
        %v640 = vsub.f32 %v638, %v639
        %v641 = vand.u32 %v640, 4294901760
        %642 = vmatpush1.msra.mxu0 %v641
        %643 = vmatprep.subr.mxu0 0.0
        %644 = vmatpush2.msra.mxu0 0.0
        %645 = vmatprep.subr.mxu0 0.0
        %646 = vmatpush2.msra.mxu0 0.0
        %647 = vmatprep.subr.mxu0 0.0
        %648 = vmatpush2.msra.mxu0 0.0
        %649 = vmatprep.subr.mxu0 0.0
        %650 = vmatpush2.msra.mxu0 0.0
        %651 = vmatprep.subr.mxu0 0.0
        %652 = vmatpush2.msra.mxu0 0.0
        %653 = vmatprep.subr.mxu0 0.0
        %654 = vmatpush2.msra.mxu0 0.0
        %655 = vmatprep.subr.mxu0 0.0
        %656 = vmatpush2.msra.mxu0 0.0
        %657 = vmatprep.subr.mxu0 0.0
        %658 = vmatpush2.msra.mxu0 0.0
        %659 = vmatprep.subr.mxu0 0.0
        %660 = vmatpush2.msra.mxu0 0.0
        %661 = vmatprep.subr.mxu0 0.0
        %662 = vmatpush2.msra.mxu0 0.0
        %663 = vmatprep.subr.mxu0 0.0
        %664 = vmatpush2.msra.mxu0 0.0
        %665 = vmatprep.subr.mxu0 0.0
        %666 = vmatpush2.msra.mxu0 0.0
        %667 = vmatprep.subr.mxu0 0.0
        %668 = vmatpush2.msra.mxu0 0.0
        %669 = vmatprep.subr.mxu0 0.0
        %670 = vmatpush2.msra.mxu0 0.0
        %671 = vmatprep.subr.mxu0 0.0
        %672 = vmatpush2.msra.mxu0 0.0
        %673 = vmatprep.subr.mxu0 0.0
        %674 = vmatpush2.msra.mxu0 0.0
        %675 = vmatprep.mubr.f32.mxu0 0.0
        %v676 = vand.u32 %v330, 4294901760
        %677 = vmatmul.mubr.f32.gmra.mxu0 %v676
        %v678 = vpop.f32.mrf.mxu0
        %v679 = vadd.f32 %v448, %v678
        %v680 = vpop.f32.mrf.mxu0
        %681 = vmatprep.mubr.f32.mxu0 0.0
        %v682 = vand.u32 %v333, 4294901760
        %683 = vmatmul.mubr.f32.gmra.mxu0 %v682
        %v684 = vpop.f32.mrf.mxu0
        %v685 = vadd.f32 %v458, %v684
        %v686 = vpop.f32.mrf.mxu0
        %687 = vmatprep.mubr.f32.mxu0 0.0
        %v688 = vand.u32 %v336, 4294901760
        %689 = vmatmul.mubr.f32.gmra.mxu0 %v688
        %v690 = vpop.f32.mrf.mxu0
        %v691 = vadd.f32 %v468, %v690
        %v692 = vpop.f32.mrf.mxu0
        %693 = vmatprep.mubr.f32.mxu0 0.0
        %v694 = vand.u32 %v339, 4294901760
        %695 = vmatmul.mubr.f32.gmra.mxu0 %v694
        %v696 = vpop.f32.mrf.mxu0
        %v697 = vadd.f32 %v478, %v696
        %v698 = vpop.f32.mrf.mxu0
        %699 = vmatprep.mubr.f32.mxu0 0.0
        %v700 = vand.u32 %v342, 4294901760
        %701 = vmatmul.mubr.f32.gmra.mxu0 %v700
        %v702 = vpop.f32.mrf.mxu0
        %v703 = vadd.f32 %v488, %v702
        %v704 = vpop.f32.mrf.mxu0
        %705 = vmatprep.mubr.f32.mxu0 0.0
        %v706 = vand.u32 %v345, 4294901760
        %707 = vmatmul.mubr.f32.gmra.mxu0 %v706
        %v708 = vpop.f32.mrf.mxu0
        %v709 = vadd.f32 %v498, %v708
        %v710 = vpop.f32.mrf.mxu0
        %711 = vmatprep.mubr.f32.mxu0 0.0
        %v712 = vand.u32 %v348, 4294901760
        %713 = vmatmul.mubr.f32.gmra.mxu0 %v712
        %v714 = vpop.f32.mrf.mxu0
        %v715 = vadd.f32 %v508, %v714
        %v716 = vpop.f32.mrf.mxu0
        %717 = vmatprep.mubr.f32.mxu0 0.0
        %v718 = vand.u32 %v351, 4294901760
        %719 = vmatmul.mubr.f32.gmra.mxu0 %v718
        %v720 = vpop.f32.mrf.mxu0
        %v721 = vadd.f32 %v518, %v720
        %v722 = vpop.f32.mrf.mxu0
        %723 = vmatprep.mubr.f32.mxu0 0.0
        %v724 = vand.u32 %v354, 4294901760
        %725 = vmatmul.mubr.f32.gmra.mxu0 %v724
        %v726 = vpop.f32.mrf.mxu0
        %v727 = vadd.f32 %v528, %v726
        %v728 = vpop.f32.mrf.mxu0
        %729 = vmatprep.mubr.f32.mxu0 0.0
        %v730 = vand.u32 %v357, 4294901760
        %731 = vmatmul.mubr.f32.gmra.mxu0 %v730
        %v732 = vpop.f32.mrf.mxu0
        %v733 = vadd.f32 %v538, %v732
        %v734 = vpop.f32.mrf.mxu0
        %735 = vmatprep.mubr.f32.mxu0 0.0
        %v736 = vand.u32 %v360, 4294901760
        %737 = vmatmul.mubr.f32.gmra.mxu0 %v736
        %v738 = vpop.f32.mrf.mxu0
        %v739 = vadd.f32 %v548, %v738
        %v740 = vpop.f32.mrf.mxu0
        %741 = vmatprep.mubr.f32.mxu0 0.0
        %v742 = vand.u32 %v363, 4294901760
        %743 = vmatmul.mubr.f32.gmra.mxu0 %v742
        %v744 = vpop.f32.mrf.mxu0
        %v745 = vadd.f32 %v558, %v744
        %v746 = vpop.f32.mrf.mxu0
        %747 = vmatprep.mubr.f32.mxu0 0.0
        %v748 = vand.u32 %v366, 4294901760
        %749 = vmatmul.mubr.f32.gmra.mxu0 %v748
        %v750 = vpop.f32.mrf.mxu0
        %v751 = vadd.f32 %v568, %v750
        %v752 = vpop.f32.mrf.mxu0
        %753 = vdwg.mxu0
        %754 = vmatprep.subr.mxu0 0.0
        %755 = vmatpush1.msra.mxu0 0.0
        %756 = vmatprep.subr.mxu0 0.0
        %757 = vmatpush1.msra.mxu0 0.0
        %758 = vmatprep.subr.mxu0 0.0
        %759 = vmatpush1.msra.mxu0 0.0
        %760 = vmatprep.subr.mxu0 0.0
        %761 = vmatpush1.msra.mxu0 0.0
        %762 = vmatprep.subr.mxu0 0.0
        %763 = vmatpush1.msra.mxu0 0.0
        %764 = vmatprep.subr.mxu0 0.0
        %765 = vmatpush1.msra.mxu0 0.0
        %766 = vmatprep.subr.mxu0 0.0
        %767 = vmatpush1.msra.mxu0 0.0
        %768 = vmatprep.subr.mxu0 0.0
        %769 = vmatpush1.msra.mxu0 0.0
        %770 = vmatprep.subr.mxu0 0.0
        %v771 = vand.u32 %v320, 4294901760
        %v772 = vsub.f32 %v320, %v771
        %773 = vmatpush1.msra.mxu0 %v772
        %774 = vmatprep.subr.mxu0 0.0
        %v775 = vand.u32 %v319, 4294901760
        %v776 = vsub.f32 %v319, %v775
        %777 = vmatpush1.msra.mxu0 %v776
        %778 = vmatprep.subr.mxu0 0.0
        %v779 = vand.u32 %v318, 4294901760
        %v780 = vsub.f32 %v318, %v779
        %781 = vmatpush1.msra.mxu0 %v780
        %782 = vmatprep.subr.mxu0 0.0
        %v783 = vand.u32 %v317, 4294901760
        %v784 = vsub.f32 %v317, %v783
        %785 = vmatpush1.msra.mxu0 %v784
        %786 = vmatprep.subr.mxu0 0.0
        %v787 = vand.u32 %v316, 4294901760
        %v788 = vsub.f32 %v316, %v787
        %789 = vmatpush1.msra.mxu0 %v788
        %790 = vmatprep.subr.mxu0 0.0
        %v791 = vand.u32 %v315, 4294901760
        %v792 = vsub.f32 %v315, %v791
        %793 = vmatpush1.msra.mxu0 %v792
        %794 = vmatprep.subr.mxu0 0.0
        %v795 = vand.u32 %v314, 4294901760
        %v796 = vsub.f32 %v314, %v795
        %797 = vmatpush1.msra.mxu0 %v796
        %798 = vmatprep.subr.mxu0 0.0
        %v799 = vand.u32 %v313, 4294901760
        %v800 = vsub.f32 %v313, %v799
        %801 = vmatpush1.msra.mxu0 %v800
        %802 = vmatprep.subr.mxu0 0.0
        %803 = vmatpush2.msra.mxu0 0.0
        %804 = vmatprep.subr.mxu0 0.0
        %805 = vmatpush2.msra.mxu0 0.0
        %806 = vmatprep.subr.mxu0 0.0
        %807 = vmatpush2.msra.mxu0 0.0
        %808 = vmatprep.subr.mxu0 0.0
        %809 = vmatpush2.msra.mxu0 0.0
        %810 = vmatprep.subr.mxu0 0.0
        %811 = vmatpush2.msra.mxu0 0.0
        %812 = vmatprep.subr.mxu0 0.0
        %813 = vmatpush2.msra.mxu0 0.0
        %814 = vmatprep.subr.mxu0 0.0
        %815 = vmatpush2.msra.mxu0 0.0
        %816 = vmatprep.subr.mxu0 0.0
        %817 = vmatpush2.msra.mxu0 0.0
        %818 = vmatprep.subr.mxu0 0.0
        %819 = vmatpush2.msra.mxu0 0.0
        %820 = vmatprep.subr.mxu0 0.0
        %821 = vmatpush2.msra.mxu0 0.0
        %822 = vmatprep.subr.mxu0 0.0
        %823 = vmatpush2.msra.mxu0 0.0
        %824 = vmatprep.subr.mxu0 0.0
        %825 = vmatpush2.msra.mxu0 0.0
        %826 = vmatprep.subr.mxu0 0.0
        %827 = vmatpush2.msra.mxu0 0.0
        %828 = vmatprep.subr.mxu0 0.0
        %829 = vmatpush2.msra.mxu0 0.0
        %830 = vmatprep.subr.mxu0 0.0
        %831 = vmatpush2.msra.mxu0 0.0
        %832 = vmatprep.subr.mxu0 0.0
        %833 = vmatpush2.msra.mxu0 0.0
        %834 = vmatprep.mubr.f32.mxu0 0.0
        %v835 = vand.u32 %v330, 4294901760
        %v836 = vsub.f32 %v330, %v835
        %837 = vmatmul.mubr.f32.gmra.mxu0 %v836
        %v838 = vpop.f32.mrf.mxu0
        %v839 = vadd.f32 %v679, %v838
        %v840 = vpop.f32.mrf.mxu0
        %841 = vmatprep.mubr.f32.mxu0 0.0
        %v842 = vand.u32 %v333, 4294901760
        %v843 = vsub.f32 %v333, %v842
        %844 = vmatmul.mubr.f32.gmra.mxu0 %v843
        %v845 = vpop.f32.mrf.mxu0
        %v846 = vadd.f32 %v685, %v845
        %v847 = vpop.f32.mrf.mxu0
        %848 = vmatprep.mubr.f32.mxu0 0.0
        %v849 = vand.u32 %v336, 4294901760
        %v850 = vsub.f32 %v336, %v849
        %851 = vmatmul.mubr.f32.gmra.mxu0 %v850
        %v852 = vpop.f32.mrf.mxu0
        %v853 = vadd.f32 %v691, %v852
        %v854 = vpop.f32.mrf.mxu0
        %855 = vmatprep.mubr.f32.mxu0 0.0
        %v856 = vand.u32 %v339, 4294901760
        %v857 = vsub.f32 %v339, %v856
        %858 = vmatmul.mubr.f32.gmra.mxu0 %v857
        %v859 = vpop.f32.mrf.mxu0
        %v860 = vadd.f32 %v697, %v859
        %v861 = vpop.f32.mrf.mxu0
        %862 = vmatprep.mubr.f32.mxu0 0.0
        %v863 = vand.u32 %v342, 4294901760
        %v864 = vsub.f32 %v342, %v863
        %865 = vmatmul.mubr.f32.gmra.mxu0 %v864
        %v866 = vpop.f32.mrf.mxu0
        %v867 = vadd.f32 %v703, %v866
        %v868 = vpop.f32.mrf.mxu0
        %869 = vmatprep.mubr.f32.mxu0 0.0
        %v870 = vand.u32 %v345, 4294901760
        %v871 = vsub.f32 %v345, %v870
        %872 = vmatmul.mubr.f32.gmra.mxu0 %v871
        %v873 = vpop.f32.mrf.mxu0
        %v874 = vadd.f32 %v709, %v873
        %v875 = vpop.f32.mrf.mxu0
        %876 = vmatprep.mubr.f32.mxu0 0.0
        %v877 = vand.u32 %v348, 4294901760
        %v878 = vsub.f32 %v348, %v877
        %879 = vmatmul.mubr.f32.gmra.mxu0 %v878
        %v880 = vpop.f32.mrf.mxu0
        %v881 = vadd.f32 %v715, %v880
        %v882 = vpop.f32.mrf.mxu0
        %883 = vmatprep.mubr.f32.mxu0 0.0
        %v884 = vand.u32 %v351, 4294901760
        %v885 = vsub.f32 %v351, %v884
        %886 = vmatmul.mubr.f32.gmra.mxu0 %v885
        %v887 = vpop.f32.mrf.mxu0
        %v888 = vadd.f32 %v721, %v887
        %v889 = vpop.f32.mrf.mxu0
        %890 = vmatprep.mubr.f32.mxu0 0.0
        %v891 = vand.u32 %v354, 4294901760
        %v892 = vsub.f32 %v354, %v891
        %893 = vmatmul.mubr.f32.gmra.mxu0 %v892
        %v894 = vpop.f32.mrf.mxu0
        %v895 = vadd.f32 %v727, %v894
        %v896 = vpop.f32.mrf.mxu0
        %897 = vmatprep.mubr.f32.mxu0 0.0
        %v898 = vand.u32 %v357, 4294901760
        %v899 = vsub.f32 %v357, %v898
        %900 = vmatmul.mubr.f32.gmra.mxu0 %v899
        %v901 = vpop.f32.mrf.mxu0
        %v902 = vadd.f32 %v733, %v901
        %v903 = vpop.f32.mrf.mxu0
        %904 = vmatprep.mubr.f32.mxu0 0.0
        %v905 = vand.u32 %v360, 4294901760
        %v906 = vsub.f32 %v360, %v905
        %907 = vmatmul.mubr.f32.gmra.mxu0 %v906
        %v908 = vpop.f32.mrf.mxu0
        %v909 = vadd.f32 %v739, %v908
        %v910 = vpop.f32.mrf.mxu0
        %911 = vmatprep.mubr.f32.mxu0 0.0
        %v912 = vand.u32 %v363, 4294901760
        %v913 = vsub.f32 %v363, %v912
        %914 = vmatmul.mubr.f32.gmra.mxu0 %v913
        %v915 = vpop.f32.mrf.mxu0
        %v916 = vadd.f32 %v745, %v915
        %v917 = vpop.f32.mrf.mxu0
        %918 = vmatprep.mubr.f32.mxu0 0.0
        %v919 = vand.u32 %v366, 4294901760
        %v920 = vsub.f32 %v366, %v919
        %921 = vmatmul.mubr.f32.gmra.mxu0 %v920
        %v922 = vpop.f32.mrf.mxu0
        %v923 = vadd.f32 %v751, %v922
        %v924 = vpop.f32.mrf.mxu0
        %925 = vdwg.mxu0
        %926 = vmatprep.subr.mxu0 0.0
        %927 = vmatpush1.msra.mxu0 0.0
        %928 = vmatprep.subr.mxu0 0.0
        %929 = vmatpush1.msra.mxu0 0.0
        %930 = vmatprep.subr.mxu0 0.0
        %931 = vmatpush1.msra.mxu0 0.0
        %932 = vmatprep.subr.mxu0 0.0
        %933 = vmatpush1.msra.mxu0 0.0
        %934 = vmatprep.subr.mxu0 0.0
        %935 = vmatpush1.msra.mxu0 0.0
        %936 = vmatprep.subr.mxu0 0.0
        %937 = vmatpush1.msra.mxu0 0.0
        %938 = vmatprep.subr.mxu0 0.0
        %939 = vmatpush1.msra.mxu0 0.0
        %940 = vmatprep.subr.mxu0 0.0
        %941 = vmatpush1.msra.mxu0 0.0
        %942 = vmatprep.subr.mxu0 0.0
        %v943 = vand.u32 %v320, 4294901760
        %944 = vmatpush1.msra.mxu0 %v943
        %945 = vmatprep.subr.mxu0 0.0
        %v946 = vand.u32 %v319, 4294901760
        %947 = vmatpush1.msra.mxu0 %v946
        %948 = vmatprep.subr.mxu0 0.0
        %v949 = vand.u32 %v318, 4294901760
        %950 = vmatpush1.msra.mxu0 %v949
        %951 = vmatprep.subr.mxu0 0.0
        %v952 = vand.u32 %v317, 4294901760
        %953 = vmatpush1.msra.mxu0 %v952
        %954 = vmatprep.subr.mxu0 0.0
        %v955 = vand.u32 %v316, 4294901760
        %956 = vmatpush1.msra.mxu0 %v955
        %957 = vmatprep.subr.mxu0 0.0
        %v958 = vand.u32 %v315, 4294901760
        %959 = vmatpush1.msra.mxu0 %v958
        %960 = vmatprep.subr.mxu0 0.0
        %v961 = vand.u32 %v314, 4294901760
        %962 = vmatpush1.msra.mxu0 %v961
        %963 = vmatprep.subr.mxu0 0.0
        %v964 = vand.u32 %v313, 4294901760
        %965 = vmatpush1.msra.mxu0 %v964
        %966 = vmatprep.subr.mxu0 0.0
        %967 = vmatpush2.msra.mxu0 0.0
        %968 = vmatprep.subr.mxu0 0.0
        %969 = vmatpush2.msra.mxu0 0.0
        %970 = vmatprep.subr.mxu0 0.0
        %971 = vmatpush2.msra.mxu0 0.0
        %972 = vmatprep.subr.mxu0 0.0
        %973 = vmatpush2.msra.mxu0 0.0
        %974 = vmatprep.subr.mxu0 0.0
        %975 = vmatpush2.msra.mxu0 0.0
        %976 = vmatprep.subr.mxu0 0.0
        %977 = vmatpush2.msra.mxu0 0.0
        %978 = vmatprep.subr.mxu0 0.0
        %979 = vmatpush2.msra.mxu0 0.0
        %980 = vmatprep.subr.mxu0 0.0
        %981 = vmatpush2.msra.mxu0 0.0
        %982 = vmatprep.subr.mxu0 0.0
        %983 = vmatpush2.msra.mxu0 0.0
        %984 = vmatprep.subr.mxu0 0.0
        %985 = vmatpush2.msra.mxu0 0.0
        %986 = vmatprep.subr.mxu0 0.0
        %987 = vmatpush2.msra.mxu0 0.0
        %988 = vmatprep.subr.mxu0 0.0
        %989 = vmatpush2.msra.mxu0 0.0
        %990 = vmatprep.subr.mxu0 0.0
        %991 = vmatpush2.msra.mxu0 0.0
        %992 = vmatprep.subr.mxu0 0.0
        %993 = vmatpush2.msra.mxu0 0.0
        %994 = vmatprep.subr.mxu0 0.0
        %995 = vmatpush2.msra.mxu0 0.0
        %996 = vmatprep.subr.mxu0 0.0
        %997 = vmatpush2.msra.mxu0 0.0
        %998 = vmatprep.mubr.f32.mxu0 0.0
        %v999 = vand.u32 %v330, 4294901760
        %v1000 = vsub.f32 %v330, %v999
        %v1001 = vand.u32 %v1000, 4294901760
        %1002 = vmatmul.mubr.f32.gmra.mxu0 %v1001
        %v1003 = vpop.f32.mrf.mxu0
        %v1004 = vadd.f32 %v839, %v1003
        %v1005 = vpop.f32.mrf.mxu0
        %1006 = vmatprep.mubr.f32.mxu0 0.0
        %v1007 = vand.u32 %v333, 4294901760
        %v1008 = vsub.f32 %v333, %v1007
        %v1009 = vand.u32 %v1008, 4294901760
        %1010 = vmatmul.mubr.f32.gmra.mxu0 %v1009
        %v1011 = vpop.f32.mrf.mxu0
        %v1012 = vadd.f32 %v846, %v1011
        %v1013 = vpop.f32.mrf.mxu0
        %1014 = vmatprep.mubr.f32.mxu0 0.0
        %v1015 = vand.u32 %v336, 4294901760
        %v1016 = vsub.f32 %v336, %v1015
        %v1017 = vand.u32 %v1016, 4294901760
        %1018 = vmatmul.mubr.f32.gmra.mxu0 %v1017
        %v1019 = vpop.f32.mrf.mxu0
        %v1020 = vadd.f32 %v853, %v1019
        %v1021 = vpop.f32.mrf.mxu0
        %1022 = vmatprep.mubr.f32.mxu0 0.0
        %v1023 = vand.u32 %v339, 4294901760
        %v1024 = vsub.f32 %v339, %v1023
        %v1025 = vand.u32 %v1024, 4294901760
        %1026 = vmatmul.mubr.f32.gmra.mxu0 %v1025
        %v1027 = vpop.f32.mrf.mxu0
        %v1028 = vadd.f32 %v860, %v1027
        %v1029 = vpop.f32.mrf.mxu0
        %1030 = vmatprep.mubr.f32.mxu0 0.0
        %v1031 = vand.u32 %v342, 4294901760
        %v1032 = vsub.f32 %v342, %v1031
        %v1033 = vand.u32 %v1032, 4294901760
        %1034 = vmatmul.mubr.f32.gmra.mxu0 %v1033
        %v1035 = vpop.f32.mrf.mxu0
        %v1036 = vadd.f32 %v867, %v1035
        %v1037 = vpop.f32.mrf.mxu0
        %1038 = vmatprep.mubr.f32.mxu0 0.0
        %v1039 = vand.u32 %v345, 4294901760
        %v1040 = vsub.f32 %v345, %v1039
        %v1041 = vand.u32 %v1040, 4294901760
        %1042 = vmatmul.mubr.f32.gmra.mxu0 %v1041
        %v1043 = vpop.f32.mrf.mxu0
        %v1044 = vadd.f32 %v874, %v1043
        %v1045 = vpop.f32.mrf.mxu0
        %1046 = vmatprep.mubr.f32.mxu0 0.0
        %v1047 = vand.u32 %v348, 4294901760
        %v1048 = vsub.f32 %v348, %v1047
        %v1049 = vand.u32 %v1048, 4294901760
        %1050 = vmatmul.mubr.f32.gmra.mxu0 %v1049
        %v1051 = vpop.f32.mrf.mxu0
        %v1052 = vadd.f32 %v881, %v1051
        %v1053 = vpop.f32.mrf.mxu0
        %1054 = vmatprep.mubr.f32.mxu0 0.0
        %v1055 = vand.u32 %v351, 4294901760
        %v1056 = vsub.f32 %v351, %v1055
        %v1057 = vand.u32 %v1056, 4294901760
        %1058 = vmatmul.mubr.f32.gmra.mxu0 %v1057
        %v1059 = vpop.f32.mrf.mxu0
        %v1060 = vadd.f32 %v888, %v1059
        %v1061 = vpop.f32.mrf.mxu0
        %1062 = vmatprep.mubr.f32.mxu0 0.0
        %v1063 = vand.u32 %v354, 4294901760
        %v1064 = vsub.f32 %v354, %v1063
        %v1065 = vand.u32 %v1064, 4294901760
        %1066 = vmatmul.mubr.f32.gmra.mxu0 %v1065
        %v1067 = vpop.f32.mrf.mxu0
        %v1068 = vadd.f32 %v895, %v1067
        %v1069 = vpop.f32.mrf.mxu0
        %1070 = vmatprep.mubr.f32.mxu0 0.0
        %v1071 = vand.u32 %v357, 4294901760
        %v1072 = vsub.f32 %v357, %v1071
        %v1073 = vand.u32 %v1072, 4294901760
        %1074 = vmatmul.mubr.f32.gmra.mxu0 %v1073
        %v1075 = vpop.f32.mrf.mxu0
        %v1076 = vadd.f32 %v902, %v1075
        %v1077 = vpop.f32.mrf.mxu0
        %1078 = vmatprep.mubr.f32.mxu0 0.0
        %v1079 = vand.u32 %v360, 4294901760
        %v1080 = vsub.f32 %v360, %v1079
        %v1081 = vand.u32 %v1080, 4294901760
        %1082 = vmatmul.mubr.f32.gmra.mxu0 %v1081
        %v1083 = vpop.f32.mrf.mxu0
        %v1084 = vadd.f32 %v909, %v1083
        %v1085 = vpop.f32.mrf.mxu0
        %1086 = vmatprep.mubr.f32.mxu0 0.0
        %v1087 = vand.u32 %v363, 4294901760
        %v1088 = vsub.f32 %v363, %v1087
        %v1089 = vand.u32 %v1088, 4294901760
        %1090 = vmatmul.mubr.f32.gmra.mxu0 %v1089
        %v1091 = vpop.f32.mrf.mxu0
        %v1092 = vadd.f32 %v916, %v1091
        %v1093 = vpop.f32.mrf.mxu0
        %1094 = vmatprep.mubr.f32.mxu0 0.0
        %v1095 = vand.u32 %v366, 4294901760
        %v1096 = vsub.f32 %v366, %v1095
        %v1097 = vand.u32 %v1096, 4294901760
        %1098 = vmatmul.mubr.f32.gmra.mxu0 %v1097
        %v1099 = vpop.f32.mrf.mxu0
        %v1100 = vadd.f32 %v923, %v1099
        %v1101 = vpop.f32.mrf.mxu0
        %1102 = vdwg.mxu0
        %1103 = vmatprep.subr.mxu0 0.0
        %1104 = vmatpush1.msra.mxu0 0.0
        %1105 = vmatprep.subr.mxu0 0.0
        %1106 = vmatpush1.msra.mxu0 0.0
        %1107 = vmatprep.subr.mxu0 0.0
        %1108 = vmatpush1.msra.mxu0 0.0
        %1109 = vmatprep.subr.mxu0 0.0
        %1110 = vmatpush1.msra.mxu0 0.0
        %1111 = vmatprep.subr.mxu0 0.0
        %1112 = vmatpush1.msra.mxu0 0.0
        %1113 = vmatprep.subr.mxu0 0.0
        %1114 = vmatpush1.msra.mxu0 0.0
        %1115 = vmatprep.subr.mxu0 0.0
        %1116 = vmatpush1.msra.mxu0 0.0
        %1117 = vmatprep.subr.mxu0 0.0
        %1118 = vmatpush1.msra.mxu0 0.0
        %1119 = vmatprep.subr.mxu0 0.0
        %v1120 = vand.u32 %v320, 4294901760
        %v1121 = vsub.f32 %v320, %v1120
        %v1122 = vand.u32 %v1121, 4294901760
        %1123 = vmatpush1.msra.mxu0 %v1122
        %1124 = vmatprep.subr.mxu0 0.0
        %v1125 = vand.u32 %v319, 4294901760
        %v1126 = vsub.f32 %v319, %v1125
        %v1127 = vand.u32 %v1126, 4294901760
        %1128 = vmatpush1.msra.mxu0 %v1127
        %1129 = vmatprep.subr.mxu0 0.0
        %v1130 = vand.u32 %v318, 4294901760
        %v1131 = vsub.f32 %v318, %v1130
        %v1132 = vand.u32 %v1131, 4294901760
        %1133 = vmatpush1.msra.mxu0 %v1132
        %1134 = vmatprep.subr.mxu0 0.0
        %v1135 = vand.u32 %v317, 4294901760
        %v1136 = vsub.f32 %v317, %v1135
        %v1137 = vand.u32 %v1136, 4294901760
        %1138 = vmatpush1.msra.mxu0 %v1137
        %1139 = vmatprep.subr.mxu0 0.0
        %v1140 = vand.u32 %v316, 4294901760
        %v1141 = vsub.f32 %v316, %v1140
        %v1142 = vand.u32 %v1141, 4294901760
        %1143 = vmatpush1.msra.mxu0 %v1142
        %1144 = vmatprep.subr.mxu0 0.0
        %v1145 = vand.u32 %v315, 4294901760
        %v1146 = vsub.f32 %v315, %v1145
        %v1147 = vand.u32 %v1146, 4294901760
        %1148 = vmatpush1.msra.mxu0 %v1147
        %1149 = vmatprep.subr.mxu0 0.0
        %v1150 = vand.u32 %v314, 4294901760
        %v1151 = vsub.f32 %v314, %v1150
        %v1152 = vand.u32 %v1151, 4294901760
        %1153 = vmatpush1.msra.mxu0 %v1152
        %1154 = vmatprep.subr.mxu0 0.0
        %v1155 = vand.u32 %v313, 4294901760
        %v1156 = vsub.f32 %v313, %v1155
        %v1157 = vand.u32 %v1156, 4294901760
        %1158 = vmatpush1.msra.mxu0 %v1157
        %1159 = vmatprep.subr.mxu0 0.0
        %1160 = vmatpush2.msra.mxu0 0.0
        %1161 = vmatprep.subr.mxu0 0.0
        %1162 = vmatpush2.msra.mxu0 0.0
        %1163 = vmatprep.subr.mxu0 0.0
        %1164 = vmatpush2.msra.mxu0 0.0
        %1165 = vmatprep.subr.mxu0 0.0
        %1166 = vmatpush2.msra.mxu0 0.0
        %1167 = vmatprep.subr.mxu0 0.0
        %1168 = vmatpush2.msra.mxu0 0.0
        %1169 = vmatprep.subr.mxu0 0.0
        %1170 = vmatpush2.msra.mxu0 0.0
        %1171 = vmatprep.subr.mxu0 0.0
        %1172 = vmatpush2.msra.mxu0 0.0
        %1173 = vmatprep.subr.mxu0 0.0
        %1174 = vmatpush2.msra.mxu0 0.0
        %1175 = vmatprep.subr.mxu0 0.0
        %1176 = vmatpush2.msra.mxu0 0.0
        %1177 = vmatprep.subr.mxu0 0.0
        %1178 = vmatpush2.msra.mxu0 0.0
        %1179 = vmatprep.subr.mxu0 0.0
        %1180 = vmatpush2.msra.mxu0 0.0
        %1181 = vmatprep.subr.mxu0 0.0
        %1182 = vmatpush2.msra.mxu0 0.0
        %1183 = vmatprep.subr.mxu0 0.0
        %1184 = vmatpush2.msra.mxu0 0.0
        %1185 = vmatprep.subr.mxu0 0.0
        %1186 = vmatpush2.msra.mxu0 0.0
        %1187 = vmatprep.subr.mxu0 0.0
        %1188 = vmatpush2.msra.mxu0 0.0
        %1189 = vmatprep.subr.mxu0 0.0
        %1190 = vmatpush2.msra.mxu0 0.0
        %1191 = vmatprep.mubr.f32.mxu0 0.0
        %v1192 = vand.u32 %v330, 4294901760
        %1193 = vmatmul.mubr.f32.gmra.mxu0 %v1192
        %v1194 = vpop.f32.mrf.mxu0
        %v1195 = vadd.f32 %v1004, %v1194
        %v1196 = vpop.f32.mrf.mxu0
        %1197 = vmatprep.mubr.f32.mxu0 0.0
        %v1198 = vand.u32 %v333, 4294901760
        %1199 = vmatmul.mubr.f32.gmra.mxu0 %v1198
        %v1200 = vpop.f32.mrf.mxu0
        %v1201 = vadd.f32 %v1012, %v1200
        %v1202 = vpop.f32.mrf.mxu0
        %1203 = vmatprep.mubr.f32.mxu0 0.0
        %v1204 = vand.u32 %v336, 4294901760
        %1205 = vmatmul.mubr.f32.gmra.mxu0 %v1204
        %v1206 = vpop.f32.mrf.mxu0
        %v1207 = vadd.f32 %v1020, %v1206
        %v1208 = vpop.f32.mrf.mxu0
        %1209 = vmatprep.mubr.f32.mxu0 0.0
        %v1210 = vand.u32 %v339, 4294901760
        %1211 = vmatmul.mubr.f32.gmra.mxu0 %v1210
        %v1212 = vpop.f32.mrf.mxu0
        %v1213 = vadd.f32 %v1028, %v1212
        %v1214 = vpop.f32.mrf.mxu0
        %1215 = vmatprep.mubr.f32.mxu0 0.0
        %v1216 = vand.u32 %v342, 4294901760
        %1217 = vmatmul.mubr.f32.gmra.mxu0 %v1216
        %v1218 = vpop.f32.mrf.mxu0
        %v1219 = vadd.f32 %v1036, %v1218
        %v1220 = vpop.f32.mrf.mxu0
        %1221 = vmatprep.mubr.f32.mxu0 0.0
        %v1222 = vand.u32 %v345, 4294901760
        %1223 = vmatmul.mubr.f32.gmra.mxu0 %v1222
        %v1224 = vpop.f32.mrf.mxu0
        %v1225 = vadd.f32 %v1044, %v1224
        %v1226 = vpop.f32.mrf.mxu0
        %1227 = vmatprep.mubr.f32.mxu0 0.0
        %v1228 = vand.u32 %v348, 4294901760
        %1229 = vmatmul.mubr.f32.gmra.mxu0 %v1228
        %v1230 = vpop.f32.mrf.mxu0
        %v1231 = vadd.f32 %v1052, %v1230
        %v1232 = vpop.f32.mrf.mxu0
        %1233 = vmatprep.mubr.f32.mxu0 0.0
        %v1234 = vand.u32 %v351, 4294901760
        %1235 = vmatmul.mubr.f32.gmra.mxu0 %v1234
        %v1236 = vpop.f32.mrf.mxu0
        %v1237 = vadd.f32 %v1060, %v1236
        %v1238 = vpop.f32.mrf.mxu0
        %1239 = vmatprep.mubr.f32.mxu0 0.0
        %v1240 = vand.u32 %v354, 4294901760
        %1241 = vmatmul.mubr.f32.gmra.mxu0 %v1240
        %v1242 = vpop.f32.mrf.mxu0
        %v1243 = vadd.f32 %v1068, %v1242
        %v1244 = vpop.f32.mrf.mxu0
        %1245 = vmatprep.mubr.f32.mxu0 0.0
        %v1246 = vand.u32 %v357, 4294901760
        %1247 = vmatmul.mubr.f32.gmra.mxu0 %v1246
        %v1248 = vpop.f32.mrf.mxu0
        %v1249 = vadd.f32 %v1076, %v1248
        %v1250 = vpop.f32.mrf.mxu0
        %1251 = vmatprep.mubr.f32.mxu0 0.0
        %v1252 = vand.u32 %v360, 4294901760
        %1253 = vmatmul.mubr.f32.gmra.mxu0 %v1252
        %v1254 = vpop.f32.mrf.mxu0
        %v1255 = vadd.f32 %v1084, %v1254
        %v1256 = vpop.f32.mrf.mxu0
        %1257 = vmatprep.mubr.f32.mxu0 0.0
        %v1258 = vand.u32 %v363, 4294901760
        %1259 = vmatmul.mubr.f32.gmra.mxu0 %v1258
        %v1260 = vpop.f32.mrf.mxu0
        %v1261 = vadd.f32 %v1092, %v1260
        %v1262 = vpop.f32.mrf.mxu0
        %1263 = vmatprep.mubr.f32.mxu0 0.0
        %v1264 = vand.u32 %v366, 4294901760
        %1265 = vmatmul.mubr.f32.gmra.mxu0 %v1264
        %v1266 = vpop.f32.mrf.mxu0
        %v1267 = vadd.f32 %v1100, %v1266
        %v1268 = vpop.f32.mrf.mxu0
        %1269 = vdwg.mxu0
        %1270 = vmatprep.subr.mxu0 0.0
        %1271 = vmatpush1.msra.mxu0 0.0
        %1272 = vmatprep.subr.mxu0 0.0
        %1273 = vmatpush1.msra.mxu0 0.0
        %1274 = vmatprep.subr.mxu0 0.0
        %1275 = vmatpush1.msra.mxu0 0.0
        %1276 = vmatprep.subr.mxu0 0.0
        %1277 = vmatpush1.msra.mxu0 0.0
        %1278 = vmatprep.subr.mxu0 0.0
        %1279 = vmatpush1.msra.mxu0 0.0
        %1280 = vmatprep.subr.mxu0 0.0
        %1281 = vmatpush1.msra.mxu0 0.0
        %1282 = vmatprep.subr.mxu0 0.0
        %1283 = vmatpush1.msra.mxu0 0.0
        %1284 = vmatprep.subr.mxu0 0.0
        %1285 = vmatpush1.msra.mxu0 0.0
        %1286 = vmatprep.subr.mxu0 0.0
        %v1287 = vand.u32 %v320, 4294901760
        %1288 = vmatpush1.msra.mxu0 %v1287
        %1289 = vmatprep.subr.mxu0 0.0
        %v1290 = vand.u32 %v319, 4294901760
        %1291 = vmatpush1.msra.mxu0 %v1290
        %1292 = vmatprep.subr.mxu0 0.0
        %v1293 = vand.u32 %v318, 4294901760
        %1294 = vmatpush1.msra.mxu0 %v1293
        %1295 = vmatprep.subr.mxu0 0.0
        %v1296 = vand.u32 %v317, 4294901760
        %1297 = vmatpush1.msra.mxu0 %v1296
        %1298 = vmatprep.subr.mxu0 0.0
        %v1299 = vand.u32 %v316, 4294901760
        %1300 = vmatpush1.msra.mxu0 %v1299
        %1301 = vmatprep.subr.mxu0 0.0
        %v1302 = vand.u32 %v315, 4294901760
        %1303 = vmatpush1.msra.mxu0 %v1302
        %1304 = vmatprep.subr.mxu0 0.0
        %v1305 = vand.u32 %v314, 4294901760
        %1306 = vmatpush1.msra.mxu0 %v1305
        %1307 = vmatprep.subr.mxu0 0.0
        %v1308 = vand.u32 %v313, 4294901760
        %1309 = vmatpush1.msra.mxu0 %v1308
        %1310 = vmatprep.subr.mxu0 0.0
        %1311 = vmatpush2.msra.mxu0 0.0
        %1312 = vmatprep.subr.mxu0 0.0
        %1313 = vmatpush2.msra.mxu0 0.0
        %1314 = vmatprep.subr.mxu0 0.0
        %1315 = vmatpush2.msra.mxu0 0.0
        %1316 = vmatprep.subr.mxu0 0.0
        %1317 = vmatpush2.msra.mxu0 0.0
        %1318 = vmatprep.subr.mxu0 0.0
        %1319 = vmatpush2.msra.mxu0 0.0
        %1320 = vmatprep.subr.mxu0 0.0
        %1321 = vmatpush2.msra.mxu0 0.0
        %1322 = vmatprep.subr.mxu0 0.0
        %1323 = vmatpush2.msra.mxu0 0.0
        %1324 = vmatprep.subr.mxu0 0.0
        %1325 = vmatpush2.msra.mxu0 0.0
        %1326 = vmatprep.subr.mxu0 0.0
        %1327 = vmatpush2.msra.mxu0 0.0
        %1328 = vmatprep.subr.mxu0 0.0
        %1329 = vmatpush2.msra.mxu0 0.0
        %1330 = vmatprep.subr.mxu0 0.0
        %1331 = vmatpush2.msra.mxu0 0.0
        %1332 = vmatprep.subr.mxu0 0.0
        %1333 = vmatpush2.msra.mxu0 0.0
        %1334 = vmatprep.subr.mxu0 0.0
        %1335 = vmatpush2.msra.mxu0 0.0
        %1336 = vmatprep.subr.mxu0 0.0
        %1337 = vmatpush2.msra.mxu0 0.0
        %1338 = vmatprep.subr.mxu0 0.0
        %1339 = vmatpush2.msra.mxu0 0.0
        %1340 = vmatprep.subr.mxu0 0.0
        %1341 = vmatpush2.msra.mxu0 0.0
        %1342 = vmatprep.mubr.f32.mxu0 0.0
        %v1343 = vand.u32 %v330, 4294901760
        %1344 = vmatmul.mubr.f32.gmra.mxu0 %v1343
        %v1345 = vpop.f32.mrf.mxu0
        %v1346 = vadd.f32 %v1195, %v1345
        %v1347 = vpop.f32.mrf.mxu0
        %1348 = vmatprep.mubr.f32.mxu0 0.0
        %v1349 = vand.u32 %v333, 4294901760
        %1350 = vmatmul.mubr.f32.gmra.mxu0 %v1349
        %v1351 = vpop.f32.mrf.mxu0
        %v1352 = vadd.f32 %v1201, %v1351
        %v1353 = vpop.f32.mrf.mxu0
        %1354 = vmatprep.mubr.f32.mxu0 0.0
        %v1355 = vand.u32 %v336, 4294901760
        %1356 = vmatmul.mubr.f32.gmra.mxu0 %v1355
        %v1357 = vpop.f32.mrf.mxu0
        %v1358 = vadd.f32 %v1207, %v1357
        %v1359 = vpop.f32.mrf.mxu0
        %1360 = vmatprep.mubr.f32.mxu0 0.0
        %v1361 = vand.u32 %v339, 4294901760
        %1362 = vmatmul.mubr.f32.gmra.mxu0 %v1361
        %v1363 = vpop.f32.mrf.mxu0
        %v1364 = vadd.f32 %v1213, %v1363
        %v1365 = vpop.f32.mrf.mxu0
        %1366 = vmatprep.mubr.f32.mxu0 0.0
        %v1367 = vand.u32 %v342, 4294901760
        %1368 = vmatmul.mubr.f32.gmra.mxu0 %v1367
        %v1369 = vpop.f32.mrf.mxu0
        %v1370 = vadd.f32 %v1219, %v1369
        %v1371 = vpop.f32.mrf.mxu0
        %1372 = vmatprep.mubr.f32.mxu0 0.0
        %v1373 = vand.u32 %v345, 4294901760
        %1374 = vmatmul.mubr.f32.gmra.mxu0 %v1373
        %v1375 = vpop.f32.mrf.mxu0
        %v1376 = vadd.f32 %v1225, %v1375
        %v1377 = vpop.f32.mrf.mxu0
        %1378 = vmatprep.mubr.f32.mxu0 0.0
        %v1379 = vand.u32 %v348, 4294901760
        %1380 = vmatmul.mubr.f32.gmra.mxu0 %v1379
        %v1381 = vpop.f32.mrf.mxu0
        %v1382 = vadd.f32 %v1231, %v1381
        %v1383 = vpop.f32.mrf.mxu0
        %1384 = vmatprep.mubr.f32.mxu0 0.0
        %v1385 = vand.u32 %v351, 4294901760
        %1386 = vmatmul.mubr.f32.gmra.mxu0 %v1385
        %v1387 = vpop.f32.mrf.mxu0
        %v1388 = vadd.f32 %v1237, %v1387
        %v1389 = vpop.f32.mrf.mxu0
        %1390 = vmatprep.mubr.f32.mxu0 0.0
        %v1391 = vand.u32 %v354, 4294901760
        %1392 = vmatmul.mubr.f32.gmra.mxu0 %v1391
        %v1393 = vpop.f32.mrf.mxu0
        %v1394 = vadd.f32 %v1243, %v1393
        %v1395 = vpop.f32.mrf.mxu0
        %1396 = vmatprep.mubr.f32.mxu0 0.0
        %v1397 = vand.u32 %v357, 4294901760
        %1398 = vmatmul.mubr.f32.gmra.mxu0 %v1397
        %v1399 = vpop.f32.mrf.mxu0
        %v1400 = vadd.f32 %v1249, %v1399
        %v1401 = vpop.f32.mrf.mxu0
        %1402 = vmatprep.mubr.f32.mxu0 0.0
        %v1403 = vand.u32 %v360, 4294901760
        %1404 = vmatmul.mubr.f32.gmra.mxu0 %v1403
        %v1405 = vpop.f32.mrf.mxu0
        %v1406 = vadd.f32 %v1255, %v1405
        %v1407 = vpop.f32.mrf.mxu0
        %1408 = vmatprep.mubr.f32.mxu0 0.0
        %v1409 = vand.u32 %v363, 4294901760
        %1410 = vmatmul.mubr.f32.gmra.mxu0 %v1409
        %v1411 = vpop.f32.mrf.mxu0
        %v1412 = vadd.f32 %v1261, %v1411
        %v1413 = vpop.f32.mrf.mxu0
        %1414 = vmatprep.mubr.f32.mxu0 0.0
        %v1415 = vand.u32 %v366, 4294901760
        %1416 = vmatmul.mubr.f32.gmra.mxu0 %v1415
        %v1417 = vpop.f32.mrf.mxu0
        %v1418 = vadd.f32 %v1267, %v1417
        %v1419 = vpop.f32.mrf.mxu0
        %1420 = vdwg.mxu0
        %v1421 = vmax.f32 %v1346, 0.0
        %v1422 = vmax.f32 %v1352, 0.0
        %v1423 = vmax.f32 %v1358, 0.0
        %v1424 = vmax.f32 %v1364, 0.0
        %v1425 = vmax.f32 %v1370, 0.0
        %v1426 = vmax.f32 %v1376, 0.0
        %v1427 = vmax.f32 %v1382, 0.0
        %v1428 = vmax.f32 %v1388, 0.0
        %v1429 = vmax.f32 %v1394, 0.0
        %v1430 = vmax.f32 %v1400, 0.0
        %v1431 = vmax.f32 %v1406, 0.0
        %v1432 = vmax.f32 %v1412, 0.0
        %v1433 = vmax.f32 %v1418, 0.0
        %v1434 = vld [vmem:[%s3] sm:$0xff]
        %v1435 = vld [vmem:[%s3 + $0x8] sm:$0xff]
        %v1436 = vld [vmem:[%s3 + $0x10] sm:$0xff]
        %v1437 = vld [vmem:[%s3 + $0x18] sm:$0xff]
        %v1438 = vld [vmem:[%s4] sm:$0x1]
        %v1440 = vlaneseq
        %v1441 = vshrl.u32 %v1440, 7
        %v1442 = vsub.s32 0, %v1441
        %v1443 = vrot.slane %v1438, %v1442
        %vm1445 = vcmask 261120
        %v1447 = vsel %vm1445, %v1421, 0
        %v1450 = vsel %vm1445, %v1422, 0
        %v1453 = vsel %vm1445, %v1423, 0
        %v1456 = vsel %vm1445, %v1424, 0
        %v1459 = vsel %vm1445, %v1425, 0
        %v1462 = vsel %vm1445, %v1426, 0
        %v1465 = vsel %vm1445, %v1427, 0
        %v1468 = vsel %vm1445, %v1428, 0
        %v1471 = vsel %vm1445, %v1429, 0
        %v1474 = vsel %vm1445, %v1430, 0
        %v1477 = vsel %vm1445, %v1431, 0
        %v1480 = vsel %vm1445, %v1432, 0
        %v1483 = vsel %vm1445, %v1433, 0
        %1485 = vmatprep.subr.mxu0 0.0
        %1486 = vmatpush1.msra.mxu0 0.0
        %1487 = vmatprep.subr.mxu0 0.0
        %1488 = vmatpush1.msra.mxu0 0.0
        %1489 = vmatprep.subr.mxu0 0.0
        %1490 = vmatpush1.msra.mxu0 0.0
        %1491 = vmatprep.subr.mxu0 0.0
        %1492 = vmatpush1.msra.mxu0 0.0
        %1493 = vmatprep.subr.mxu0 0.0
        %1494 = vmatpush1.msra.mxu0 0.0
        %1495 = vmatprep.subr.mxu0 0.0
        %1496 = vmatpush1.msra.mxu0 0.0
        %1497 = vmatprep.subr.mxu0 0.0
        %1498 = vmatpush1.msra.mxu0 0.0
        %1499 = vmatprep.subr.mxu0 0.0
        %1500 = vmatpush1.msra.mxu0 0.0
        %1501 = vmatprep.subr.mxu0 0.0
        %1502 = vmatpush1.msra.mxu0 0.0
        %1503 = vmatprep.subr.mxu0 0.0
        %1504 = vmatpush1.msra.mxu0 0.0
        %1505 = vmatprep.subr.mxu0 0.0
        %1506 = vmatpush1.msra.mxu0 0.0
        %1507 = vmatprep.subr.mxu0 0.0
        %1508 = vmatpush1.msra.mxu0 0.0
        %1509 = vmatprep.subr.mxu0 0.0
        %v1510 = vand.u32 %v1437, 4294901760
        %1511 = vmatpush1.msra.mxu0 %v1510
        %1512 = vmatprep.subr.mxu0 0.0
        %v1513 = vand.u32 %v1436, 4294901760
        %1514 = vmatpush1.msra.mxu0 %v1513
        %1515 = vmatprep.subr.mxu0 0.0
        %v1516 = vand.u32 %v1435, 4294901760
        %1517 = vmatpush1.msra.mxu0 %v1516
        %1518 = vmatprep.subr.mxu0 0.0
        %v1519 = vand.u32 %v1434, 4294901760
        %1520 = vmatpush1.msra.mxu0 %v1519
        %1521 = vmatprep.subr.mxu0 0.0
        %1522 = vmatpush2.msra.mxu0 0.0
        %1523 = vmatprep.subr.mxu0 0.0
        %1524 = vmatpush2.msra.mxu0 0.0
        %1525 = vmatprep.subr.mxu0 0.0
        %1526 = vmatpush2.msra.mxu0 0.0
        %1527 = vmatprep.subr.mxu0 0.0
        %1528 = vmatpush2.msra.mxu0 0.0
        %1529 = vmatprep.subr.mxu0 0.0
        %1530 = vmatpush2.msra.mxu0 0.0
        %1531 = vmatprep.subr.mxu0 0.0
        %1532 = vmatpush2.msra.mxu0 0.0
        %1533 = vmatprep.subr.mxu0 0.0
        %1534 = vmatpush2.msra.mxu0 0.0
        %1535 = vmatprep.subr.mxu0 0.0
        %1536 = vmatpush2.msra.mxu0 0.0
        %1537 = vmatprep.subr.mxu0 0.0
        %1538 = vmatpush2.msra.mxu0 0.0
        %1539 = vmatprep.subr.mxu0 0.0
        %1540 = vmatpush2.msra.mxu0 0.0
        %1541 = vmatprep.subr.mxu0 0.0
        %1542 = vmatpush2.msra.mxu0 0.0
        %1543 = vmatprep.subr.mxu0 0.0
        %1544 = vmatpush2.msra.mxu0 0.0
        %1545 = vmatprep.subr.mxu0 0.0
        %1546 = vmatpush2.msra.mxu0 0.0
        %1547 = vmatprep.subr.mxu0 0.0
        %1548 = vmatpush2.msra.mxu0 0.0
        %1549 = vmatprep.subr.mxu0 0.0
        %1550 = vmatpush2.msra.mxu0 0.0
        %1551 = vmatprep.subr.mxu0 0.0
        %1552 = vmatpush2.msra.mxu0 0.0
        %1553 = vmatprep.mubr.f32.mxu0 0.0
        %v1554 = vand.u32 %v1447, 4294901760
        %v1555 = vsub.f32 %v1447, %v1554
        %v1556 = vand.u32 %v1555, 4294901760
        %v1557 = vsub.f32 %v1555, %v1556
        %v1558 = vand.u32 %v1557, 4294901760
        %1559 = vmatmul.mubr.f32.gmra.mxu0 %v1558
        %v1560 = vpop.f32.mrf.mxu0
        %v1561 = vadd.f32 %v1443, %v1560
        %v1562 = vpop.f32.mrf.mxu0
        %1563 = vmatprep.mubr.f32.mxu0 0.0
        %v1564 = vand.u32 %v1450, 4294901760
        %v1565 = vsub.f32 %v1450, %v1564
        %v1566 = vand.u32 %v1565, 4294901760
        %v1567 = vsub.f32 %v1565, %v1566
        %v1568 = vand.u32 %v1567, 4294901760
        %1569 = vmatmul.mubr.f32.gmra.mxu0 %v1568
        %v1570 = vpop.f32.mrf.mxu0
        %v1571 = vadd.f32 %v1443, %v1570
        %v1572 = vpop.f32.mrf.mxu0
        %1573 = vmatprep.mubr.f32.mxu0 0.0
        %v1574 = vand.u32 %v1453, 4294901760
        %v1575 = vsub.f32 %v1453, %v1574
        %v1576 = vand.u32 %v1575, 4294901760
        %v1577 = vsub.f32 %v1575, %v1576
        %v1578 = vand.u32 %v1577, 4294901760
        %1579 = vmatmul.mubr.f32.gmra.mxu0 %v1578
        %v1580 = vpop.f32.mrf.mxu0
        %v1581 = vadd.f32 %v1443, %v1580
        %v1582 = vpop.f32.mrf.mxu0
        %1583 = vmatprep.mubr.f32.mxu0 0.0
        %v1584 = vand.u32 %v1456, 4294901760
        %v1585 = vsub.f32 %v1456, %v1584
        %v1586 = vand.u32 %v1585, 4294901760
        %v1587 = vsub.f32 %v1585, %v1586
        %v1588 = vand.u32 %v1587, 4294901760
        %1589 = vmatmul.mubr.f32.gmra.mxu0 %v1588
        %v1590 = vpop.f32.mrf.mxu0
        %v1591 = vadd.f32 %v1443, %v1590
        %v1592 = vpop.f32.mrf.mxu0
        %1593 = vmatprep.mubr.f32.mxu0 0.0
        %v1594 = vand.u32 %v1459, 4294901760
        %v1595 = vsub.f32 %v1459, %v1594
        %v1596 = vand.u32 %v1595, 4294901760
        %v1597 = vsub.f32 %v1595, %v1596
        %v1598 = vand.u32 %v1597, 4294901760
        %1599 = vmatmul.mubr.f32.gmra.mxu0 %v1598
        %v1600 = vpop.f32.mrf.mxu0
        %v1601 = vadd.f32 %v1443, %v1600
        %v1602 = vpop.f32.mrf.mxu0
        %1603 = vmatprep.mubr.f32.mxu0 0.0
        %v1604 = vand.u32 %v1462, 4294901760
        %v1605 = vsub.f32 %v1462, %v1604
        %v1606 = vand.u32 %v1605, 4294901760
        %v1607 = vsub.f32 %v1605, %v1606
        %v1608 = vand.u32 %v1607, 4294901760
        %1609 = vmatmul.mubr.f32.gmra.mxu0 %v1608
        %v1610 = vpop.f32.mrf.mxu0
        %v1611 = vadd.f32 %v1443, %v1610
        %v1612 = vpop.f32.mrf.mxu0
        %1613 = vmatprep.mubr.f32.mxu0 0.0
        %v1614 = vand.u32 %v1465, 4294901760
        %v1615 = vsub.f32 %v1465, %v1614
        %v1616 = vand.u32 %v1615, 4294901760
        %v1617 = vsub.f32 %v1615, %v1616
        %v1618 = vand.u32 %v1617, 4294901760
        %1619 = vmatmul.mubr.f32.gmra.mxu0 %v1618
        %v1620 = vpop.f32.mrf.mxu0
        %v1621 = vadd.f32 %v1443, %v1620
        %v1622 = vpop.f32.mrf.mxu0
        %1623 = vmatprep.mubr.f32.mxu0 0.0
        %v1624 = vand.u32 %v1468, 4294901760
        %v1625 = vsub.f32 %v1468, %v1624
        %v1626 = vand.u32 %v1625, 4294901760
        %v1627 = vsub.f32 %v1625, %v1626
        %v1628 = vand.u32 %v1627, 4294901760
        %1629 = vmatmul.mubr.f32.gmra.mxu0 %v1628
        %v1630 = vpop.f32.mrf.mxu0
        %v1631 = vadd.f32 %v1443, %v1630
        %v1632 = vpop.f32.mrf.mxu0
        %1633 = vmatprep.mubr.f32.mxu0 0.0
        %v1634 = vand.u32 %v1471, 4294901760
        %v1635 = vsub.f32 %v1471, %v1634
        %v1636 = vand.u32 %v1635, 4294901760
        %v1637 = vsub.f32 %v1635, %v1636
        %v1638 = vand.u32 %v1637, 4294901760
        %1639 = vmatmul.mubr.f32.gmra.mxu0 %v1638
        %v1640 = vpop.f32.mrf.mxu0
        %v1641 = vadd.f32 %v1443, %v1640
        %v1642 = vpop.f32.mrf.mxu0
        %1643 = vmatprep.mubr.f32.mxu0 0.0
        %v1644 = vand.u32 %v1474, 4294901760
        %v1645 = vsub.f32 %v1474, %v1644
        %v1646 = vand.u32 %v1645, 4294901760
        %v1647 = vsub.f32 %v1645, %v1646
        %v1648 = vand.u32 %v1647, 4294901760
        %1649 = vmatmul.mubr.f32.gmra.mxu0 %v1648
        %v1650 = vpop.f32.mrf.mxu0
        %v1651 = vadd.f32 %v1443, %v1650
        %v1652 = vpop.f32.mrf.mxu0
        %1653 = vmatprep.mubr.f32.mxu0 0.0
        %v1654 = vand.u32 %v1477, 4294901760
        %v1655 = vsub.f32 %v1477, %v1654
        %v1656 = vand.u32 %v1655, 4294901760
        %v1657 = vsub.f32 %v1655, %v1656
        %v1658 = vand.u32 %v1657, 4294901760
        %1659 = vmatmul.mubr.f32.gmra.mxu0 %v1658
        %v1660 = vpop.f32.mrf.mxu0
        %v1661 = vadd.f32 %v1443, %v1660
        %v1662 = vpop.f32.mrf.mxu0
        %1663 = vmatprep.mubr.f32.mxu0 0.0
        %v1664 = vand.u32 %v1480, 4294901760
        %v1665 = vsub.f32 %v1480, %v1664
        %v1666 = vand.u32 %v1665, 4294901760
        %v1667 = vsub.f32 %v1665, %v1666
        %v1668 = vand.u32 %v1667, 4294901760
        %1669 = vmatmul.mubr.f32.gmra.mxu0 %v1668
        %v1670 = vpop.f32.mrf.mxu0
        %v1671 = vadd.f32 %v1443, %v1670
        %v1672 = vpop.f32.mrf.mxu0
        %1673 = vmatprep.mubr.f32.mxu0 0.0
        %v1674 = vand.u32 %v1483, 4294901760
        %v1675 = vsub.f32 %v1483, %v1674
        %v1676 = vand.u32 %v1675, 4294901760
        %v1677 = vsub.f32 %v1675, %v1676
        %v1678 = vand.u32 %v1677, 4294901760
        %1679 = vmatmul.mubr.f32.gmra.mxu0 %v1678
        %v1680 = vpop.f32.mrf.mxu0
        %v1681 = vadd.f32 %v1443, %v1680
        %v1682 = vpop.f32.mrf.mxu0
        %1683 = vdwg.mxu0
        %1684 = vmatprep.subr.mxu0 0.0
        %1685 = vmatpush1.msra.mxu0 0.0
        %1686 = vmatprep.subr.mxu0 0.0
        %1687 = vmatpush1.msra.mxu0 0.0
        %1688 = vmatprep.subr.mxu0 0.0
        %1689 = vmatpush1.msra.mxu0 0.0
        %1690 = vmatprep.subr.mxu0 0.0
        %1691 = vmatpush1.msra.mxu0 0.0
        %1692 = vmatprep.subr.mxu0 0.0
        %1693 = vmatpush1.msra.mxu0 0.0
        %1694 = vmatprep.subr.mxu0 0.0
        %1695 = vmatpush1.msra.mxu0 0.0
        %1696 = vmatprep.subr.mxu0 0.0
        %1697 = vmatpush1.msra.mxu0 0.0
        %1698 = vmatprep.subr.mxu0 0.0
        %1699 = vmatpush1.msra.mxu0 0.0
        %1700 = vmatprep.subr.mxu0 0.0
        %1701 = vmatpush1.msra.mxu0 0.0
        %1702 = vmatprep.subr.mxu0 0.0
        %1703 = vmatpush1.msra.mxu0 0.0
        %1704 = vmatprep.subr.mxu0 0.0
        %1705 = vmatpush1.msra.mxu0 0.0
        %1706 = vmatprep.subr.mxu0 0.0
        %1707 = vmatpush1.msra.mxu0 0.0
        %1708 = vmatprep.subr.mxu0 0.0
        %v1709 = vand.u32 %v1437, 4294901760
        %v1710 = vsub.f32 %v1437, %v1709
        %v1711 = vand.u32 %v1710, 4294901760
        %v1712 = vsub.f32 %v1710, %v1711
        %v1713 = vand.u32 %v1712, 4294901760
        %1714 = vmatpush1.msra.mxu0 %v1713
        %1715 = vmatprep.subr.mxu0 0.0
        %v1716 = vand.u32 %v1436, 4294901760
        %v1717 = vsub.f32 %v1436, %v1716
        %v1718 = vand.u32 %v1717, 4294901760
        %v1719 = vsub.f32 %v1717, %v1718
        %v1720 = vand.u32 %v1719, 4294901760
        %1721 = vmatpush1.msra.mxu0 %v1720
        %1722 = vmatprep.subr.mxu0 0.0
        %v1723 = vand.u32 %v1435, 4294901760
        %v1724 = vsub.f32 %v1435, %v1723
        %v1725 = vand.u32 %v1724, 4294901760
        %v1726 = vsub.f32 %v1724, %v1725
        %v1727 = vand.u32 %v1726, 4294901760
        %1728 = vmatpush1.msra.mxu0 %v1727
        %1729 = vmatprep.subr.mxu0 0.0
        %v1730 = vand.u32 %v1434, 4294901760
        %v1731 = vsub.f32 %v1434, %v1730
        %v1732 = vand.u32 %v1731, 4294901760
        %v1733 = vsub.f32 %v1731, %v1732
        %v1734 = vand.u32 %v1733, 4294901760
        %1735 = vmatpush1.msra.mxu0 %v1734
        %1736 = vmatprep.subr.mxu0 0.0
        %1737 = vmatpush2.msra.mxu0 0.0
        %1738 = vmatprep.subr.mxu0 0.0
        %1739 = vmatpush2.msra.mxu0 0.0
        %1740 = vmatprep.subr.mxu0 0.0
        %1741 = vmatpush2.msra.mxu0 0.0
        %1742 = vmatprep.subr.mxu0 0.0
        %1743 = vmatpush2.msra.mxu0 0.0
        %1744 = vmatprep.subr.mxu0 0.0
        %1745 = vmatpush2.msra.mxu0 0.0
        %1746 = vmatprep.subr.mxu0 0.0
        %1747 = vmatpush2.msra.mxu0 0.0
        %1748 = vmatprep.subr.mxu0 0.0
        %1749 = vmatpush2.msra.mxu0 0.0
        %1750 = vmatprep.subr.mxu0 0.0
        %1751 = vmatpush2.msra.mxu0 0.0
        %1752 = vmatprep.subr.mxu0 0.0
        %1753 = vmatpush2.msra.mxu0 0.0
        %1754 = vmatprep.subr.mxu0 0.0
        %1755 = vmatpush2.msra.mxu0 0.0
        %1756 = vmatprep.subr.mxu0 0.0
        %1757 = vmatpush2.msra.mxu0 0.0
        %1758 = vmatprep.subr.mxu0 0.0
        %1759 = vmatpush2.msra.mxu0 0.0
        %1760 = vmatprep.subr.mxu0 0.0
        %1761 = vmatpush2.msra.mxu0 0.0
        %1762 = vmatprep.subr.mxu0 0.0
        %1763 = vmatpush2.msra.mxu0 0.0
        %1764 = vmatprep.subr.mxu0 0.0
        %1765 = vmatpush2.msra.mxu0 0.0
        %1766 = vmatprep.subr.mxu0 0.0
        %1767 = vmatpush2.msra.mxu0 0.0
        %1768 = vmatprep.mubr.f32.mxu0 0.0
        %v1769 = vand.u32 %v1447, 4294901760
        %1770 = vmatmul.mubr.f32.gmra.mxu0 %v1769
        %v1771 = vpop.f32.mrf.mxu0
        %v1772 = vadd.f32 %v1561, %v1771
        %v1773 = vpop.f32.mrf.mxu0
        %1774 = vmatprep.mubr.f32.mxu0 0.0
        %v1775 = vand.u32 %v1450, 4294901760
        %1776 = vmatmul.mubr.f32.gmra.mxu0 %v1775
        %v1777 = vpop.f32.mrf.mxu0
        %v1778 = vadd.f32 %v1571, %v1777
        %v1779 = vpop.f32.mrf.mxu0
        %1780 = vmatprep.mubr.f32.mxu0 0.0
        %v1781 = vand.u32 %v1453, 4294901760
        %1782 = vmatmul.mubr.f32.gmra.mxu0 %v1781
        %v1783 = vpop.f32.mrf.mxu0
        %v1784 = vadd.f32 %v1581, %v1783
        %v1785 = vpop.f32.mrf.mxu0
        %1786 = vmatprep.mubr.f32.mxu0 0.0
        %v1787 = vand.u32 %v1456, 4294901760
        %1788 = vmatmul.mubr.f32.gmra.mxu0 %v1787
        %v1789 = vpop.f32.mrf.mxu0
        %v1790 = vadd.f32 %v1591, %v1789
        %v1791 = vpop.f32.mrf.mxu0
        %1792 = vmatprep.mubr.f32.mxu0 0.0
        %v1793 = vand.u32 %v1459, 4294901760
        %1794 = vmatmul.mubr.f32.gmra.mxu0 %v1793
        %v1795 = vpop.f32.mrf.mxu0
        %v1796 = vadd.f32 %v1601, %v1795
        %v1797 = vpop.f32.mrf.mxu0
        %1798 = vmatprep.mubr.f32.mxu0 0.0
        %v1799 = vand.u32 %v1462, 4294901760
        %1800 = vmatmul.mubr.f32.gmra.mxu0 %v1799
        %v1801 = vpop.f32.mrf.mxu0
        %v1802 = vadd.f32 %v1611, %v1801
        %v1803 = vpop.f32.mrf.mxu0
        %1804 = vmatprep.mubr.f32.mxu0 0.0
        %v1805 = vand.u32 %v1465, 4294901760
        %1806 = vmatmul.mubr.f32.gmra.mxu0 %v1805
        %v1807 = vpop.f32.mrf.mxu0
        %v1808 = vadd.f32 %v1621, %v1807
        %v1809 = vpop.f32.mrf.mxu0
        %1810 = vmatprep.mubr.f32.mxu0 0.0
        %v1811 = vand.u32 %v1468, 4294901760
        %1812 = vmatmul.mubr.f32.gmra.mxu0 %v1811
        %v1813 = vpop.f32.mrf.mxu0
        %v1814 = vadd.f32 %v1631, %v1813
        %v1815 = vpop.f32.mrf.mxu0
        %1816 = vmatprep.mubr.f32.mxu0 0.0
        %v1817 = vand.u32 %v1471, 4294901760
        %1818 = vmatmul.mubr.f32.gmra.mxu0 %v1817
        %v1819 = vpop.f32.mrf.mxu0
        %v1820 = vadd.f32 %v1641, %v1819
        %v1821 = vpop.f32.mrf.mxu0
        %1822 = vmatprep.mubr.f32.mxu0 0.0
        %v1823 = vand.u32 %v1474, 4294901760
        %1824 = vmatmul.mubr.f32.gmra.mxu0 %v1823
        %v1825 = vpop.f32.mrf.mxu0
        %v1826 = vadd.f32 %v1651, %v1825
        %v1827 = vpop.f32.mrf.mxu0
        %1828 = vmatprep.mubr.f32.mxu0 0.0
        %v1829 = vand.u32 %v1477, 4294901760
        %1830 = vmatmul.mubr.f32.gmra.mxu0 %v1829
        %v1831 = vpop.f32.mrf.mxu0
        %v1832 = vadd.f32 %v1661, %v1831
        %v1833 = vpop.f32.mrf.mxu0
        %1834 = vmatprep.mubr.f32.mxu0 0.0
        %v1835 = vand.u32 %v1480, 4294901760
        %1836 = vmatmul.mubr.f32.gmra.mxu0 %v1835
        %v1837 = vpop.f32.mrf.mxu0
        %v1838 = vadd.f32 %v1671, %v1837
        %v1839 = vpop.f32.mrf.mxu0
        %1840 = vmatprep.mubr.f32.mxu0 0.0
        %v1841 = vand.u32 %v1483, 4294901760
        %1842 = vmatmul.mubr.f32.gmra.mxu0 %v1841
        %v1843 = vpop.f32.mrf.mxu0
        %v1844 = vadd.f32 %v1681, %v1843
        %v1845 = vpop.f32.mrf.mxu0
        %1846 = vdwg.mxu0
        %1847 = vmatprep.subr.mxu0 0.0
        %1848 = vmatpush1.msra.mxu0 0.0
        %1849 = vmatprep.subr.mxu0 0.0
        %1850 = vmatpush1.msra.mxu0 0.0
        %1851 = vmatprep.subr.mxu0 0.0
        %1852 = vmatpush1.msra.mxu0 0.0
        %1853 = vmatprep.subr.mxu0 0.0
        %1854 = vmatpush1.msra.mxu0 0.0
        %1855 = vmatprep.subr.mxu0 0.0
        %1856 = vmatpush1.msra.mxu0 0.0
        %1857 = vmatprep.subr.mxu0 0.0
        %1858 = vmatpush1.msra.mxu0 0.0
        %1859 = vmatprep.subr.mxu0 0.0
        %1860 = vmatpush1.msra.mxu0 0.0
        %1861 = vmatprep.subr.mxu0 0.0
        %1862 = vmatpush1.msra.mxu0 0.0
        %1863 = vmatprep.subr.mxu0 0.0
        %1864 = vmatpush1.msra.mxu0 0.0
        %1865 = vmatprep.subr.mxu0 0.0
        %1866 = vmatpush1.msra.mxu0 0.0
        %1867 = vmatprep.subr.mxu0 0.0
        %1868 = vmatpush1.msra.mxu0 0.0
        %1869 = vmatprep.subr.mxu0 0.0
        %1870 = vmatpush1.msra.mxu0 0.0
        %1871 = vmatprep.subr.mxu0 0.0
        %v1872 = vand.u32 %v1437, 4294901760
        %v1873 = vsub.f32 %v1437, %v1872
        %1874 = vmatpush1.msra.mxu0 %v1873
        %1875 = vmatprep.subr.mxu0 0.0
        %v1876 = vand.u32 %v1436, 4294901760
        %v1877 = vsub.f32 %v1436, %v1876
        %1878 = vmatpush1.msra.mxu0 %v1877
        %1879 = vmatprep.subr.mxu0 0.0
        %v1880 = vand.u32 %v1435, 4294901760
        %v1881 = vsub.f32 %v1435, %v1880
        %1882 = vmatpush1.msra.mxu0 %v1881
        %1883 = vmatprep.subr.mxu0 0.0
        %v1884 = vand.u32 %v1434, 4294901760
        %v1885 = vsub.f32 %v1434, %v1884
        %1886 = vmatpush1.msra.mxu0 %v1885
        %1887 = vmatprep.subr.mxu0 0.0
        %1888 = vmatpush2.msra.mxu0 0.0
        %1889 = vmatprep.subr.mxu0 0.0
        %1890 = vmatpush2.msra.mxu0 0.0
        %1891 = vmatprep.subr.mxu0 0.0
        %1892 = vmatpush2.msra.mxu0 0.0
        %1893 = vmatprep.subr.mxu0 0.0
        %1894 = vmatpush2.msra.mxu0 0.0
        %1895 = vmatprep.subr.mxu0 0.0
        %1896 = vmatpush2.msra.mxu0 0.0
        %1897 = vmatprep.subr.mxu0 0.0
        %1898 = vmatpush2.msra.mxu0 0.0
        %1899 = vmatprep.subr.mxu0 0.0
        %1900 = vmatpush2.msra.mxu0 0.0
        %1901 = vmatprep.subr.mxu0 0.0
        %1902 = vmatpush2.msra.mxu0 0.0
        %1903 = vmatprep.subr.mxu0 0.0
        %1904 = vmatpush2.msra.mxu0 0.0
        %1905 = vmatprep.subr.mxu0 0.0
        %1906 = vmatpush2.msra.mxu0 0.0
        %1907 = vmatprep.subr.mxu0 0.0
        %1908 = vmatpush2.msra.mxu0 0.0
        %1909 = vmatprep.subr.mxu0 0.0
        %1910 = vmatpush2.msra.mxu0 0.0
        %1911 = vmatprep.subr.mxu0 0.0
        %1912 = vmatpush2.msra.mxu0 0.0
        %1913 = vmatprep.subr.mxu0 0.0
        %1914 = vmatpush2.msra.mxu0 0.0
        %1915 = vmatprep.subr.mxu0 0.0
        %1916 = vmatpush2.msra.mxu0 0.0
        %1917 = vmatprep.subr.mxu0 0.0
        %1918 = vmatpush2.msra.mxu0 0.0
        %1919 = vmatprep.mubr.f32.mxu0 0.0
        %v1920 = vand.u32 %v1447, 4294901760
        %v1921 = vsub.f32 %v1447, %v1920
        %1922 = vmatmul.mubr.f32.gmra.mxu0 %v1921
        %v1923 = vpop.f32.mrf.mxu0
        %v1924 = vadd.f32 %v1772, %v1923
        %v1925 = vpop.f32.mrf.mxu0
        %1926 = vmatprep.mubr.f32.mxu0 0.0
        %v1927 = vand.u32 %v1450, 4294901760
        %v1928 = vsub.f32 %v1450, %v1927
        %1929 = vmatmul.mubr.f32.gmra.mxu0 %v1928
        %v1930 = vpop.f32.mrf.mxu0
        %v1931 = vadd.f32 %v1778, %v1930
        %v1932 = vpop.f32.mrf.mxu0
        %1933 = vmatprep.mubr.f32.mxu0 0.0
        %v1934 = vand.u32 %v1453, 4294901760
        %v1935 = vsub.f32 %v1453, %v1934
        %1936 = vmatmul.mubr.f32.gmra.mxu0 %v1935
        %v1937 = vpop.f32.mrf.mxu0
        %v1938 = vadd.f32 %v1784, %v1937
        %v1939 = vpop.f32.mrf.mxu0
        %1940 = vmatprep.mubr.f32.mxu0 0.0
        %v1941 = vand.u32 %v1456, 4294901760
        %v1942 = vsub.f32 %v1456, %v1941
        %1943 = vmatmul.mubr.f32.gmra.mxu0 %v1942
        %v1944 = vpop.f32.mrf.mxu0
        %v1945 = vadd.f32 %v1790, %v1944
        %v1946 = vpop.f32.mrf.mxu0
        %1947 = vmatprep.mubr.f32.mxu0 0.0
        %v1948 = vand.u32 %v1459, 4294901760
        %v1949 = vsub.f32 %v1459, %v1948
        %1950 = vmatmul.mubr.f32.gmra.mxu0 %v1949
        %v1951 = vpop.f32.mrf.mxu0
        %v1952 = vadd.f32 %v1796, %v1951
        %v1953 = vpop.f32.mrf.mxu0
        %1954 = vmatprep.mubr.f32.mxu0 0.0
        %v1955 = vand.u32 %v1462, 4294901760
        %v1956 = vsub.f32 %v1462, %v1955
        %1957 = vmatmul.mubr.f32.gmra.mxu0 %v1956
        %v1958 = vpop.f32.mrf.mxu0
        %v1959 = vadd.f32 %v1802, %v1958
        %v1960 = vpop.f32.mrf.mxu0
        %1961 = vmatprep.mubr.f32.mxu0 0.0
        %v1962 = vand.u32 %v1465, 4294901760
        %v1963 = vsub.f32 %v1465, %v1962
        %1964 = vmatmul.mubr.f32.gmra.mxu0 %v1963
        %v1965 = vpop.f32.mrf.mxu0
        %v1966 = vadd.f32 %v1808, %v1965
        %v1967 = vpop.f32.mrf.mxu0
        %1968 = vmatprep.mubr.f32.mxu0 0.0
        %v1969 = vand.u32 %v1468, 4294901760
        %v1970 = vsub.f32 %v1468, %v1969
        %1971 = vmatmul.mubr.f32.gmra.mxu0 %v1970
        %v1972 = vpop.f32.mrf.mxu0
        %v1973 = vadd.f32 %v1814, %v1972
        %v1974 = vpop.f32.mrf.mxu0
        %1975 = vmatprep.mubr.f32.mxu0 0.0
        %v1976 = vand.u32 %v1471, 4294901760
        %v1977 = vsub.f32 %v1471, %v1976
        %1978 = vmatmul.mubr.f32.gmra.mxu0 %v1977
        %v1979 = vpop.f32.mrf.mxu0
        %v1980 = vadd.f32 %v1820, %v1979
        %v1981 = vpop.f32.mrf.mxu0
        %1982 = vmatprep.mubr.f32.mxu0 0.0
        %v1983 = vand.u32 %v1474, 4294901760
        %v1984 = vsub.f32 %v1474, %v1983
        %1985 = vmatmul.mubr.f32.gmra.mxu0 %v1984
        %v1986 = vpop.f32.mrf.mxu0
        %v1987 = vadd.f32 %v1826, %v1986
        %v1988 = vpop.f32.mrf.mxu0
        %1989 = vmatprep.mubr.f32.mxu0 0.0
        %v1990 = vand.u32 %v1477, 4294901760
        %v1991 = vsub.f32 %v1477, %v1990
        %1992 = vmatmul.mubr.f32.gmra.mxu0 %v1991
        %v1993 = vpop.f32.mrf.mxu0
        %v1994 = vadd.f32 %v1832, %v1993
        %v1995 = vpop.f32.mrf.mxu0
        %1996 = vmatprep.mubr.f32.mxu0 0.0
        %v1997 = vand.u32 %v1480, 4294901760
        %v1998 = vsub.f32 %v1480, %v1997
        %1999 = vmatmul.mubr.f32.gmra.mxu0 %v1998
        %v2000 = vpop.f32.mrf.mxu0
        %v2001 = vadd.f32 %v1838, %v2000
        %v2002 = vpop.f32.mrf.mxu0
        %2003 = vmatprep.mubr.f32.mxu0 0.0
        %v2004 = vand.u32 %v1483, 4294901760
        %v2005 = vsub.f32 %v1483, %v2004
        %2006 = vmatmul.mubr.f32.gmra.mxu0 %v2005
        %v2007 = vpop.f32.mrf.mxu0
        %v2008 = vadd.f32 %v1844, %v2007
        %v2009 = vpop.f32.mrf.mxu0
        %2010 = vdwg.mxu0
        %2011 = vmatprep.subr.mxu0 0.0
        %2012 = vmatpush1.msra.mxu0 0.0
        %2013 = vmatprep.subr.mxu0 0.0
        %2014 = vmatpush1.msra.mxu0 0.0
        %2015 = vmatprep.subr.mxu0 0.0
        %2016 = vmatpush1.msra.mxu0 0.0
        %2017 = vmatprep.subr.mxu0 0.0
        %2018 = vmatpush1.msra.mxu0 0.0
        %2019 = vmatprep.subr.mxu0 0.0
        %2020 = vmatpush1.msra.mxu0 0.0
        %2021 = vmatprep.subr.mxu0 0.0
        %2022 = vmatpush1.msra.mxu0 0.0
        %2023 = vmatprep.subr.mxu0 0.0
        %2024 = vmatpush1.msra.mxu0 0.0
        %2025 = vmatprep.subr.mxu0 0.0
        %2026 = vmatpush1.msra.mxu0 0.0
        %2027 = vmatprep.subr.mxu0 0.0
        %2028 = vmatpush1.msra.mxu0 0.0
        %2029 = vmatprep.subr.mxu0 0.0
        %2030 = vmatpush1.msra.mxu0 0.0
        %2031 = vmatprep.subr.mxu0 0.0
        %2032 = vmatpush1.msra.mxu0 0.0
        %2033 = vmatprep.subr.mxu0 0.0
        %2034 = vmatpush1.msra.mxu0 0.0
        %2035 = vmatprep.subr.mxu0 0.0
        %v2036 = vand.u32 %v1437, 4294901760
        %2037 = vmatpush1.msra.mxu0 %v2036
        %2038 = vmatprep.subr.mxu0 0.0
        %v2039 = vand.u32 %v1436, 4294901760
        %2040 = vmatpush1.msra.mxu0 %v2039
        %2041 = vmatprep.subr.mxu0 0.0
        %v2042 = vand.u32 %v1435, 4294901760
        %2043 = vmatpush1.msra.mxu0 %v2042
        %2044 = vmatprep.subr.mxu0 0.0
        %v2045 = vand.u32 %v1434, 4294901760
        %2046 = vmatpush1.msra.mxu0 %v2045
        %2047 = vmatprep.subr.mxu0 0.0
        %2048 = vmatpush2.msra.mxu0 0.0
        %2049 = vmatprep.subr.mxu0 0.0
        %2050 = vmatpush2.msra.mxu0 0.0
        %2051 = vmatprep.subr.mxu0 0.0
        %2052 = vmatpush2.msra.mxu0 0.0
        %2053 = vmatprep.subr.mxu0 0.0
        %2054 = vmatpush2.msra.mxu0 0.0
        %2055 = vmatprep.subr.mxu0 0.0
        %2056 = vmatpush2.msra.mxu0 0.0
        %2057 = vmatprep.subr.mxu0 0.0
        %2058 = vmatpush2.msra.mxu0 0.0
        %2059 = vmatprep.subr.mxu0 0.0
        %2060 = vmatpush2.msra.mxu0 0.0
        %2061 = vmatprep.subr.mxu0 0.0
        %2062 = vmatpush2.msra.mxu0 0.0
        %2063 = vmatprep.subr.mxu0 0.0
        %2064 = vmatpush2.msra.mxu0 0.0
        %2065 = vmatprep.subr.mxu0 0.0
        %2066 = vmatpush2.msra.mxu0 0.0
        %2067 = vmatprep.subr.mxu0 0.0
        %2068 = vmatpush2.msra.mxu0 0.0
        %2069 = vmatprep.subr.mxu0 0.0
        %2070 = vmatpush2.msra.mxu0 0.0
        %2071 = vmatprep.subr.mxu0 0.0
        %2072 = vmatpush2.msra.mxu0 0.0
        %2073 = vmatprep.subr.mxu0 0.0
        %2074 = vmatpush2.msra.mxu0 0.0
        %2075 = vmatprep.subr.mxu0 0.0
        %2076 = vmatpush2.msra.mxu0 0.0
        %2077 = vmatprep.subr.mxu0 0.0
        %2078 = vmatpush2.msra.mxu0 0.0
        %2079 = vmatprep.mubr.f32.mxu0 0.0
        %v2080 = vand.u32 %v1447, 4294901760
        %v2081 = vsub.f32 %v1447, %v2080
        %v2082 = vand.u32 %v2081, 4294901760
        %2083 = vmatmul.mubr.f32.gmra.mxu0 %v2082
        %v2084 = vpop.f32.mrf.mxu0
        %v2085 = vadd.f32 %v1924, %v2084
        %v2086 = vpop.f32.mrf.mxu0
        %2087 = vmatprep.mubr.f32.mxu0 0.0
        %v2088 = vand.u32 %v1450, 4294901760
        %v2089 = vsub.f32 %v1450, %v2088
        %v2090 = vand.u32 %v2089, 4294901760
        %2091 = vmatmul.mubr.f32.gmra.mxu0 %v2090
        %v2092 = vpop.f32.mrf.mxu0
        %v2093 = vadd.f32 %v1931, %v2092
        %v2094 = vpop.f32.mrf.mxu0
        %2095 = vmatprep.mubr.f32.mxu0 0.0
        %v2096 = vand.u32 %v1453, 4294901760
        %v2097 = vsub.f32 %v1453, %v2096
        %v2098 = vand.u32 %v2097, 4294901760
        %2099 = vmatmul.mubr.f32.gmra.mxu0 %v2098
        %v2100 = vpop.f32.mrf.mxu0
        %v2101 = vadd.f32 %v1938, %v2100
        %v2102 = vpop.f32.mrf.mxu0
        %2103 = vmatprep.mubr.f32.mxu0 0.0
        %v2104 = vand.u32 %v1456, 4294901760
        %v2105 = vsub.f32 %v1456, %v2104
        %v2106 = vand.u32 %v2105, 4294901760
        %2107 = vmatmul.mubr.f32.gmra.mxu0 %v2106
        %v2108 = vpop.f32.mrf.mxu0
        %v2109 = vadd.f32 %v1945, %v2108
        %v2110 = vpop.f32.mrf.mxu0
        %2111 = vmatprep.mubr.f32.mxu0 0.0
        %v2112 = vand.u32 %v1459, 4294901760
        %v2113 = vsub.f32 %v1459, %v2112
        %v2114 = vand.u32 %v2113, 4294901760
        %2115 = vmatmul.mubr.f32.gmra.mxu0 %v2114
        %v2116 = vpop.f32.mrf.mxu0
        %v2117 = vadd.f32 %v1952, %v2116
        %v2118 = vpop.f32.mrf.mxu0
        %2119 = vmatprep.mubr.f32.mxu0 0.0
        %v2120 = vand.u32 %v1462, 4294901760
        %v2121 = vsub.f32 %v1462, %v2120
        %v2122 = vand.u32 %v2121, 4294901760
        %2123 = vmatmul.mubr.f32.gmra.mxu0 %v2122
        %v2124 = vpop.f32.mrf.mxu0
        %v2125 = vadd.f32 %v1959, %v2124
        %v2126 = vpop.f32.mrf.mxu0
        %2127 = vmatprep.mubr.f32.mxu0 0.0
        %v2128 = vand.u32 %v1465, 4294901760
        %v2129 = vsub.f32 %v1465, %v2128
        %v2130 = vand.u32 %v2129, 4294901760
        %2131 = vmatmul.mubr.f32.gmra.mxu0 %v2130
        %v2132 = vpop.f32.mrf.mxu0
        %v2133 = vadd.f32 %v1966, %v2132
        %v2134 = vpop.f32.mrf.mxu0
        %2135 = vmatprep.mubr.f32.mxu0 0.0
        %v2136 = vand.u32 %v1468, 4294901760
        %v2137 = vsub.f32 %v1468, %v2136
        %v2138 = vand.u32 %v2137, 4294901760
        %2139 = vmatmul.mubr.f32.gmra.mxu0 %v2138
        %v2140 = vpop.f32.mrf.mxu0
        %v2141 = vadd.f32 %v1973, %v2140
        %v2142 = vpop.f32.mrf.mxu0
        %2143 = vmatprep.mubr.f32.mxu0 0.0
        %v2144 = vand.u32 %v1471, 4294901760
        %v2145 = vsub.f32 %v1471, %v2144
        %v2146 = vand.u32 %v2145, 4294901760
        %2147 = vmatmul.mubr.f32.gmra.mxu0 %v2146
        %v2148 = vpop.f32.mrf.mxu0
        %v2149 = vadd.f32 %v1980, %v2148
        %v2150 = vpop.f32.mrf.mxu0
        %2151 = vmatprep.mubr.f32.mxu0 0.0
        %v2152 = vand.u32 %v1474, 4294901760
        %v2153 = vsub.f32 %v1474, %v2152
        %v2154 = vand.u32 %v2153, 4294901760
        %2155 = vmatmul.mubr.f32.gmra.mxu0 %v2154
        %v2156 = vpop.f32.mrf.mxu0
        %v2157 = vadd.f32 %v1987, %v2156
        %v2158 = vpop.f32.mrf.mxu0
        %2159 = vmatprep.mubr.f32.mxu0 0.0
        %v2160 = vand.u32 %v1477, 4294901760
        %v2161 = vsub.f32 %v1477, %v2160
        %v2162 = vand.u32 %v2161, 4294901760
        %2163 = vmatmul.mubr.f32.gmra.mxu0 %v2162
        %v2164 = vpop.f32.mrf.mxu0
        %v2165 = vadd.f32 %v1994, %v2164
        %v2166 = vpop.f32.mrf.mxu0
        %2167 = vmatprep.mubr.f32.mxu0 0.0
        %v2168 = vand.u32 %v1480, 4294901760
        %v2169 = vsub.f32 %v1480, %v2168
        %v2170 = vand.u32 %v2169, 4294901760
        %2171 = vmatmul.mubr.f32.gmra.mxu0 %v2170
        %v2172 = vpop.f32.mrf.mxu0
        %v2173 = vadd.f32 %v2001, %v2172
        %v2174 = vpop.f32.mrf.mxu0
        %2175 = vmatprep.mubr.f32.mxu0 0.0
        %v2176 = vand.u32 %v1483, 4294901760
        %v2177 = vsub.f32 %v1483, %v2176
        %v2178 = vand.u32 %v2177, 4294901760
        %2179 = vmatmul.mubr.f32.gmra.mxu0 %v2178
        %v2180 = vpop.f32.mrf.mxu0
        %v2181 = vadd.f32 %v2008, %v2180
        %v2182 = vpop.f32.mrf.mxu0
        %2183 = vdwg.mxu0
        %2184 = vmatprep.subr.mxu0 0.0
        %2185 = vmatpush1.msra.mxu0 0.0
        %2186 = vmatprep.subr.mxu0 0.0
        %2187 = vmatpush1.msra.mxu0 0.0
        %2188 = vmatprep.subr.mxu0 0.0
        %2189 = vmatpush1.msra.mxu0 0.0
        %2190 = vmatprep.subr.mxu0 0.0
        %2191 = vmatpush1.msra.mxu0 0.0
        %2192 = vmatprep.subr.mxu0 0.0
        %2193 = vmatpush1.msra.mxu0 0.0
        %2194 = vmatprep.subr.mxu0 0.0
        %2195 = vmatpush1.msra.mxu0 0.0
        %2196 = vmatprep.subr.mxu0 0.0
        %2197 = vmatpush1.msra.mxu0 0.0
        %2198 = vmatprep.subr.mxu0 0.0
        %2199 = vmatpush1.msra.mxu0 0.0
        %2200 = vmatprep.subr.mxu0 0.0
        %2201 = vmatpush1.msra.mxu0 0.0
        %2202 = vmatprep.subr.mxu0 0.0
        %2203 = vmatpush1.msra.mxu0 0.0
        %2204 = vmatprep.subr.mxu0 0.0
        %2205 = vmatpush1.msra.mxu0 0.0
        %2206 = vmatprep.subr.mxu0 0.0
        %2207 = vmatpush1.msra.mxu0 0.0
        %2208 = vmatprep.subr.mxu0 0.0
        %v2209 = vand.u32 %v1437, 4294901760
        %v2210 = vsub.f32 %v1437, %v2209
        %v2211 = vand.u32 %v2210, 4294901760
        %2212 = vmatpush1.msra.mxu0 %v2211
        %2213 = vmatprep.subr.mxu0 0.0
        %v2214 = vand.u32 %v1436, 4294901760
        %v2215 = vsub.f32 %v1436, %v2214
        %v2216 = vand.u32 %v2215, 4294901760
        %2217 = vmatpush1.msra.mxu0 %v2216
        %2218 = vmatprep.subr.mxu0 0.0
        %v2219 = vand.u32 %v1435, 4294901760
        %v2220 = vsub.f32 %v1435, %v2219
        %v2221 = vand.u32 %v2220, 4294901760
        %2222 = vmatpush1.msra.mxu0 %v2221
        %2223 = vmatprep.subr.mxu0 0.0
        %v2224 = vand.u32 %v1434, 4294901760
        %v2225 = vsub.f32 %v1434, %v2224
        %v2226 = vand.u32 %v2225, 4294901760
        %2227 = vmatpush1.msra.mxu0 %v2226
        %2228 = vmatprep.subr.mxu0 0.0
        %2229 = vmatpush2.msra.mxu0 0.0
        %2230 = vmatprep.subr.mxu0 0.0
        %2231 = vmatpush2.msra.mxu0 0.0
        %2232 = vmatprep.subr.mxu0 0.0
        %2233 = vmatpush2.msra.mxu0 0.0
        %2234 = vmatprep.subr.mxu0 0.0
        %2235 = vmatpush2.msra.mxu0 0.0
        %2236 = vmatprep.subr.mxu0 0.0
        %2237 = vmatpush2.msra.mxu0 0.0
        %2238 = vmatprep.subr.mxu0 0.0
        %2239 = vmatpush2.msra.mxu0 0.0
        %2240 = vmatprep.subr.mxu0 0.0
        %2241 = vmatpush2.msra.mxu0 0.0
        %2242 = vmatprep.subr.mxu0 0.0
        %2243 = vmatpush2.msra.mxu0 0.0
        %2244 = vmatprep.subr.mxu0 0.0
        %2245 = vmatpush2.msra.mxu0 0.0
        %2246 = vmatprep.subr.mxu0 0.0
        %2247 = vmatpush2.msra.mxu0 0.0
        %2248 = vmatprep.subr.mxu0 0.0
        %2249 = vmatpush2.msra.mxu0 0.0
        %2250 = vmatprep.subr.mxu0 0.0
        %2251 = vmatpush2.msra.mxu0 0.0
        %2252 = vmatprep.subr.mxu0 0.0
        %2253 = vmatpush2.msra.mxu0 0.0
        %2254 = vmatprep.subr.mxu0 0.0
        %2255 = vmatpush2.msra.mxu0 0.0
        %2256 = vmatprep.subr.mxu0 0.0
        %2257 = vmatpush2.msra.mxu0 0.0
        %2258 = vmatprep.subr.mxu0 0.0
        %2259 = vmatpush2.msra.mxu0 0.0
        %2260 = vmatprep.mubr.f32.mxu0 0.0
        %v2261 = vand.u32 %v1447, 4294901760
        %2262 = vmatmul.mubr.f32.gmra.mxu0 %v2261
        %v2263 = vpop.f32.mrf.mxu0
        %v2264 = vadd.f32 %v2085, %v2263
        %v2265 = vpop.f32.mrf.mxu0
        %2266 = vmatprep.mubr.f32.mxu0 0.0
        %v2267 = vand.u32 %v1450, 4294901760
        %2268 = vmatmul.mubr.f32.gmra.mxu0 %v2267
        %v2269 = vpop.f32.mrf.mxu0
        %v2270 = vadd.f32 %v2093, %v2269
        %v2271 = vpop.f32.mrf.mxu0
        %2272 = vmatprep.mubr.f32.mxu0 0.0
        %v2273 = vand.u32 %v1453, 4294901760
        %2274 = vmatmul.mubr.f32.gmra.mxu0 %v2273
        %v2275 = vpop.f32.mrf.mxu0
        %v2276 = vadd.f32 %v2101, %v2275
        %v2277 = vpop.f32.mrf.mxu0
        %2278 = vmatprep.mubr.f32.mxu0 0.0
        %v2279 = vand.u32 %v1456, 4294901760
        %2280 = vmatmul.mubr.f32.gmra.mxu0 %v2279
        %v2281 = vpop.f32.mrf.mxu0
        %v2282 = vadd.f32 %v2109, %v2281
        %v2283 = vpop.f32.mrf.mxu0
        %2284 = vmatprep.mubr.f32.mxu0 0.0
        %v2285 = vand.u32 %v1459, 4294901760
        %2286 = vmatmul.mubr.f32.gmra.mxu0 %v2285
        %v2287 = vpop.f32.mrf.mxu0
        %v2288 = vadd.f32 %v2117, %v2287
        %v2289 = vpop.f32.mrf.mxu0
        %2290 = vmatprep.mubr.f32.mxu0 0.0
        %v2291 = vand.u32 %v1462, 4294901760
        %2292 = vmatmul.mubr.f32.gmra.mxu0 %v2291
        %v2293 = vpop.f32.mrf.mxu0
        %v2294 = vadd.f32 %v2125, %v2293
        %v2295 = vpop.f32.mrf.mxu0
        %2296 = vmatprep.mubr.f32.mxu0 0.0
        %v2297 = vand.u32 %v1465, 4294901760
        %2298 = vmatmul.mubr.f32.gmra.mxu0 %v2297
        %v2299 = vpop.f32.mrf.mxu0
        %v2300 = vadd.f32 %v2133, %v2299
        %v2301 = vpop.f32.mrf.mxu0
        %2302 = vmatprep.mubr.f32.mxu0 0.0
        %v2303 = vand.u32 %v1468, 4294901760
        %2304 = vmatmul.mubr.f32.gmra.mxu0 %v2303
        %v2305 = vpop.f32.mrf.mxu0
        %v2306 = vadd.f32 %v2141, %v2305
        %v2307 = vpop.f32.mrf.mxu0
        %2308 = vmatprep.mubr.f32.mxu0 0.0
        %v2309 = vand.u32 %v1471, 4294901760
        %2310 = vmatmul.mubr.f32.gmra.mxu0 %v2309
        %v2311 = vpop.f32.mrf.mxu0
        %v2312 = vadd.f32 %v2149, %v2311
        %v2313 = vpop.f32.mrf.mxu0
        %2314 = vmatprep.mubr.f32.mxu0 0.0
        %v2315 = vand.u32 %v1474, 4294901760
        %2316 = vmatmul.mubr.f32.gmra.mxu0 %v2315
        %v2317 = vpop.f32.mrf.mxu0
        %v2318 = vadd.f32 %v2157, %v2317
        %v2319 = vpop.f32.mrf.mxu0
        %2320 = vmatprep.mubr.f32.mxu0 0.0
        %v2321 = vand.u32 %v1477, 4294901760
        %2322 = vmatmul.mubr.f32.gmra.mxu0 %v2321
        %v2323 = vpop.f32.mrf.mxu0
        %v2324 = vadd.f32 %v2165, %v2323
        %v2325 = vpop.f32.mrf.mxu0
        %2326 = vmatprep.mubr.f32.mxu0 0.0
        %v2327 = vand.u32 %v1480, 4294901760
        %2328 = vmatmul.mubr.f32.gmra.mxu0 %v2327
        %v2329 = vpop.f32.mrf.mxu0
        %v2330 = vadd.f32 %v2173, %v2329
        %v2331 = vpop.f32.mrf.mxu0
        %2332 = vmatprep.mubr.f32.mxu0 0.0
        %v2333 = vand.u32 %v1483, 4294901760
        %2334 = vmatmul.mubr.f32.gmra.mxu0 %v2333
        %v2335 = vpop.f32.mrf.mxu0
        %v2336 = vadd.f32 %v2181, %v2335
        %v2337 = vpop.f32.mrf.mxu0
        %2338 = vdwg.mxu0
        %2339 = vmatprep.subr.mxu0 0.0
        %2340 = vmatpush1.msra.mxu0 0.0
        %2341 = vmatprep.subr.mxu0 0.0
        %2342 = vmatpush1.msra.mxu0 0.0
        %2343 = vmatprep.subr.mxu0 0.0
        %2344 = vmatpush1.msra.mxu0 0.0
        %2345 = vmatprep.subr.mxu0 0.0
        %2346 = vmatpush1.msra.mxu0 0.0
        %2347 = vmatprep.subr.mxu0 0.0
        %2348 = vmatpush1.msra.mxu0 0.0
        %2349 = vmatprep.subr.mxu0 0.0
        %2350 = vmatpush1.msra.mxu0 0.0
        %2351 = vmatprep.subr.mxu0 0.0
        %2352 = vmatpush1.msra.mxu0 0.0
        %2353 = vmatprep.subr.mxu0 0.0
        %2354 = vmatpush1.msra.mxu0 0.0
        %2355 = vmatprep.subr.mxu0 0.0
        %2356 = vmatpush1.msra.mxu0 0.0
        %2357 = vmatprep.subr.mxu0 0.0
        %2358 = vmatpush1.msra.mxu0 0.0
        %2359 = vmatprep.subr.mxu0 0.0
        %2360 = vmatpush1.msra.mxu0 0.0
        %2361 = vmatprep.subr.mxu0 0.0
        %2362 = vmatpush1.msra.mxu0 0.0
        %2363 = vmatprep.subr.mxu0 0.0
        %v2364 = vand.u32 %v1437, 4294901760
        %2365 = vmatpush1.msra.mxu0 %v2364
        %2366 = vmatprep.subr.mxu0 0.0
        %v2367 = vand.u32 %v1436, 4294901760
        %2368 = vmatpush1.msra.mxu0 %v2367
        %2369 = vmatprep.subr.mxu0 0.0
        %v2370 = vand.u32 %v1435, 4294901760
        %2371 = vmatpush1.msra.mxu0 %v2370
        %2372 = vmatprep.subr.mxu0 0.0
        %v2373 = vand.u32 %v1434, 4294901760
        %2374 = vmatpush1.msra.mxu0 %v2373
        %2375 = vmatprep.subr.mxu0 0.0
        %2376 = vmatpush2.msra.mxu0 0.0
        %2377 = vmatprep.subr.mxu0 0.0
        %2378 = vmatpush2.msra.mxu0 0.0
        %2379 = vmatprep.subr.mxu0 0.0
        %2380 = vmatpush2.msra.mxu0 0.0
        %2381 = vmatprep.subr.mxu0 0.0
        %2382 = vmatpush2.msra.mxu0 0.0
        %2383 = vmatprep.subr.mxu0 0.0
        %2384 = vmatpush2.msra.mxu0 0.0
        %2385 = vmatprep.subr.mxu0 0.0
        %2386 = vmatpush2.msra.mxu0 0.0
        %2387 = vmatprep.subr.mxu0 0.0
        %2388 = vmatpush2.msra.mxu0 0.0
        %2389 = vmatprep.subr.mxu0 0.0
        %2390 = vmatpush2.msra.mxu0 0.0
        %2391 = vmatprep.subr.mxu0 0.0
        %2392 = vmatpush2.msra.mxu0 0.0
        %2393 = vmatprep.subr.mxu0 0.0
        %2394 = vmatpush2.msra.mxu0 0.0
        %2395 = vmatprep.subr.mxu0 0.0
        %2396 = vmatpush2.msra.mxu0 0.0
        %2397 = vmatprep.subr.mxu0 0.0
        %2398 = vmatpush2.msra.mxu0 0.0
        %2399 = vmatprep.subr.mxu0 0.0
        %2400 = vmatpush2.msra.mxu0 0.0
        %2401 = vmatprep.subr.mxu0 0.0
        %2402 = vmatpush2.msra.mxu0 0.0
        %2403 = vmatprep.subr.mxu0 0.0
        %2404 = vmatpush2.msra.mxu0 0.0
        %2405 = vmatprep.subr.mxu0 0.0
        %2406 = vmatpush2.msra.mxu0 0.0
        %2407 = vmatprep.mubr.f32.mxu0 0.0
        %v2408 = vand.u32 %v1447, 4294901760
        %2409 = vmatmul.mubr.f32.gmra.mxu0 %v2408
        %v2410 = vpop.f32.mrf.mxu0
        %v2411 = vadd.f32 %v2264, %v2410
        %v2412 = vpop.f32.mrf.mxu0
        %2413 = vmatprep.mubr.f32.mxu0 0.0
        %v2414 = vand.u32 %v1450, 4294901760
        %2415 = vmatmul.mubr.f32.gmra.mxu0 %v2414
        %v2416 = vpop.f32.mrf.mxu0
        %v2417 = vadd.f32 %v2270, %v2416
        %v2418 = vpop.f32.mrf.mxu0
        %2419 = vmatprep.mubr.f32.mxu0 0.0
        %v2420 = vand.u32 %v1453, 4294901760
        %2421 = vmatmul.mubr.f32.gmra.mxu0 %v2420
        %v2422 = vpop.f32.mrf.mxu0
        %v2423 = vadd.f32 %v2276, %v2422
        %v2424 = vpop.f32.mrf.mxu0
        %2425 = vmatprep.mubr.f32.mxu0 0.0
        %v2426 = vand.u32 %v1456, 4294901760
        %2427 = vmatmul.mubr.f32.gmra.mxu0 %v2426
        %v2428 = vpop.f32.mrf.mxu0
        %v2429 = vadd.f32 %v2282, %v2428
        %v2430 = vpop.f32.mrf.mxu0
        %2431 = vmatprep.mubr.f32.mxu0 0.0
        %v2432 = vand.u32 %v1459, 4294901760
        %2433 = vmatmul.mubr.f32.gmra.mxu0 %v2432
        %v2434 = vpop.f32.mrf.mxu0
        %v2435 = vadd.f32 %v2288, %v2434
        %v2436 = vpop.f32.mrf.mxu0
        %2437 = vmatprep.mubr.f32.mxu0 0.0
        %v2438 = vand.u32 %v1462, 4294901760
        %2439 = vmatmul.mubr.f32.gmra.mxu0 %v2438
        %v2440 = vpop.f32.mrf.mxu0
        %v2441 = vadd.f32 %v2294, %v2440
        %v2442 = vpop.f32.mrf.mxu0
        %2443 = vmatprep.mubr.f32.mxu0 0.0
        %v2444 = vand.u32 %v1465, 4294901760
        %2445 = vmatmul.mubr.f32.gmra.mxu0 %v2444
        %v2446 = vpop.f32.mrf.mxu0
        %v2447 = vadd.f32 %v2300, %v2446
        %v2448 = vpop.f32.mrf.mxu0
        %2449 = vmatprep.mubr.f32.mxu0 0.0
        %v2450 = vand.u32 %v1468, 4294901760
        %2451 = vmatmul.mubr.f32.gmra.mxu0 %v2450
        %v2452 = vpop.f32.mrf.mxu0
        %v2453 = vadd.f32 %v2306, %v2452
        %v2454 = vpop.f32.mrf.mxu0
        %2455 = vmatprep.mubr.f32.mxu0 0.0
        %v2456 = vand.u32 %v1471, 4294901760
        %2457 = vmatmul.mubr.f32.gmra.mxu0 %v2456
        %v2458 = vpop.f32.mrf.mxu0
        %v2459 = vadd.f32 %v2312, %v2458
        %v2460 = vpop.f32.mrf.mxu0
        %2461 = vmatprep.mubr.f32.mxu0 0.0
        %v2462 = vand.u32 %v1474, 4294901760
        %2463 = vmatmul.mubr.f32.gmra.mxu0 %v2462
        %v2464 = vpop.f32.mrf.mxu0
        %v2465 = vadd.f32 %v2318, %v2464
        %v2466 = vpop.f32.mrf.mxu0
        %2467 = vmatprep.mubr.f32.mxu0 0.0
        %v2468 = vand.u32 %v1477, 4294901760
        %2469 = vmatmul.mubr.f32.gmra.mxu0 %v2468
        %v2470 = vpop.f32.mrf.mxu0
        %v2471 = vadd.f32 %v2324, %v2470
        %v2472 = vpop.f32.mrf.mxu0
        %2473 = vmatprep.mubr.f32.mxu0 0.0
        %v2474 = vand.u32 %v1480, 4294901760
        %2475 = vmatmul.mubr.f32.gmra.mxu0 %v2474
        %v2476 = vpop.f32.mrf.mxu0
        %v2477 = vadd.f32 %v2330, %v2476
        %v2478 = vpop.f32.mrf.mxu0
        %2479 = vmatprep.mubr.f32.mxu0 0.0
        %v2480 = vand.u32 %v1483, 4294901760
        %2481 = vmatmul.mubr.f32.gmra.mxu0 %v2480
        %v2482 = vpop.f32.mrf.mxu0
        %v2483 = vadd.f32 %v2336, %v2482
        %v2484 = vpop.f32.mrf.mxu0
        %2485 = vdwg.mxu0
        %v2486 = vmax.f32 %v2411, 0.0
        %v2487 = vmax.f32 %v2417, 0.0
        %v2488 = vmax.f32 %v2423, 0.0
        %v2489 = vmax.f32 %v2429, 0.0
        %v2490 = vmax.f32 %v2435, 0.0
        %v2491 = vmax.f32 %v2441, 0.0
        %v2492 = vmax.f32 %v2447, 0.0
        %v2493 = vmax.f32 %v2453, 0.0
        %v2494 = vmax.f32 %v2459, 0.0
        %v2495 = vmax.f32 %v2465, 0.0
        %v2496 = vmax.f32 %v2471, 0.0
        %v2497 = vmax.f32 %v2477, 0.0
        %v2498 = vmax.f32 %v2483, 0.0
        %v2499 = vld [vmem:[%s5] sm:$0xff]
        %v2500 = vld [vmem:[%s5 + $0x8] sm:$0xff]
        %v2501 = vld [vmem:[%s5 + $0x10] sm:$0xff]
        %v2502 = vld [vmem:[%s5 + $0x18] sm:$0xff]
        %v2503 = vld [vmem:[%s6] sm:$0x1]
        %v2505 = vlaneseq
        %v2506 = vshrl.u32 %v2505, 7
        %v2507 = vsub.s32 0, %v2506
        %v2508 = vrot.slane %v2503, %v2507
        %v2511 = vsel %vm1445, %v2486, 0
        %v2514 = vsel %vm1445, %v2487, 0
        %v2517 = vsel %vm1445, %v2488, 0
        %v2520 = vsel %vm1445, %v2489, 0
        %v2523 = vsel %vm1445, %v2490, 0
        %v2526 = vsel %vm1445, %v2491, 0
        %v2529 = vsel %vm1445, %v2492, 0
        %v2532 = vsel %vm1445, %v2493, 0
        %v2535 = vsel %vm1445, %v2494, 0
        %v2538 = vsel %vm1445, %v2495, 0
        %v2541 = vsel %vm1445, %v2496, 0
        %v2544 = vsel %vm1445, %v2497, 0
        %v2547 = vsel %vm1445, %v2498, 0
        %2549 = vmatprep.subr.mxu0 0.0
        %2550 = vmatpush1.msra.mxu0 0.0
        %2551 = vmatprep.subr.mxu0 0.0
        %2552 = vmatpush1.msra.mxu0 0.0
        %2553 = vmatprep.subr.mxu0 0.0
        %2554 = vmatpush1.msra.mxu0 0.0
        %2555 = vmatprep.subr.mxu0 0.0
        %2556 = vmatpush1.msra.mxu0 0.0
        %2557 = vmatprep.subr.mxu0 0.0
        %2558 = vmatpush1.msra.mxu0 0.0
        %2559 = vmatprep.subr.mxu0 0.0
        %2560 = vmatpush1.msra.mxu0 0.0
        %2561 = vmatprep.subr.mxu0 0.0
        %2562 = vmatpush1.msra.mxu0 0.0
        %2563 = vmatprep.subr.mxu0 0.0
        %2564 = vmatpush1.msra.mxu0 0.0
        %2565 = vmatprep.subr.mxu0 0.0
        %2566 = vmatpush1.msra.mxu0 0.0
        %2567 = vmatprep.subr.mxu0 0.0
        %2568 = vmatpush1.msra.mxu0 0.0
        %2569 = vmatprep.subr.mxu0 0.0
        %2570 = vmatpush1.msra.mxu0 0.0
        %2571 = vmatprep.subr.mxu0 0.0
        %2572 = vmatpush1.msra.mxu0 0.0
        %2573 = vmatprep.subr.mxu0 0.0
        %v2574 = vand.u32 %v2502, 4294901760
        %2575 = vmatpush1.msra.mxu0 %v2574
        %2576 = vmatprep.subr.mxu0 0.0
        %v2577 = vand.u32 %v2501, 4294901760
        %2578 = vmatpush1.msra.mxu0 %v2577
        %2579 = vmatprep.subr.mxu0 0.0
        %v2580 = vand.u32 %v2500, 4294901760
        %2581 = vmatpush1.msra.mxu0 %v2580
        %2582 = vmatprep.subr.mxu0 0.0
        %v2583 = vand.u32 %v2499, 4294901760
        %2584 = vmatpush1.msra.mxu0 %v2583
        %2585 = vmatprep.subr.mxu0 0.0
        %2586 = vmatpush2.msra.mxu0 0.0
        %2587 = vmatprep.subr.mxu0 0.0
        %2588 = vmatpush2.msra.mxu0 0.0
        %2589 = vmatprep.subr.mxu0 0.0
        %2590 = vmatpush2.msra.mxu0 0.0
        %2591 = vmatprep.subr.mxu0 0.0
        %2592 = vmatpush2.msra.mxu0 0.0
        %2593 = vmatprep.subr.mxu0 0.0
        %2594 = vmatpush2.msra.mxu0 0.0
        %2595 = vmatprep.subr.mxu0 0.0
        %2596 = vmatpush2.msra.mxu0 0.0
        %2597 = vmatprep.subr.mxu0 0.0
        %2598 = vmatpush2.msra.mxu0 0.0
        %2599 = vmatprep.subr.mxu0 0.0
        %2600 = vmatpush2.msra.mxu0 0.0
        %2601 = vmatprep.subr.mxu0 0.0
        %2602 = vmatpush2.msra.mxu0 0.0
        %2603 = vmatprep.subr.mxu0 0.0
        %2604 = vmatpush2.msra.mxu0 0.0
        %2605 = vmatprep.subr.mxu0 0.0
        %2606 = vmatpush2.msra.mxu0 0.0
        %2607 = vmatprep.subr.mxu0 0.0
        %2608 = vmatpush2.msra.mxu0 0.0
        %2609 = vmatprep.subr.mxu0 0.0
        %2610 = vmatpush2.msra.mxu0 0.0
        %2611 = vmatprep.subr.mxu0 0.0
        %2612 = vmatpush2.msra.mxu0 0.0
        %2613 = vmatprep.subr.mxu0 0.0
        %2614 = vmatpush2.msra.mxu0 0.0
        %2615 = vmatprep.subr.mxu0 0.0
        %2616 = vmatpush2.msra.mxu0 0.0
        %2617 = vmatprep.mubr.f32.mxu0 0.0
        %v2618 = vand.u32 %v2511, 4294901760
        %v2619 = vsub.f32 %v2511, %v2618
        %v2620 = vand.u32 %v2619, 4294901760
        %v2621 = vsub.f32 %v2619, %v2620
        %v2622 = vand.u32 %v2621, 4294901760
        %2623 = vmatmul.mubr.f32.gmra.mxu0 %v2622
        %v2624 = vpop.f32.mrf.mxu0
        %v2625 = vadd.f32 %v2508, %v2624
        %v2626 = vpop.f32.mrf.mxu0
        %2627 = vmatprep.mubr.f32.mxu0 0.0
        %v2628 = vand.u32 %v2514, 4294901760
        %v2629 = vsub.f32 %v2514, %v2628
        %v2630 = vand.u32 %v2629, 4294901760
        %v2631 = vsub.f32 %v2629, %v2630
        %v2632 = vand.u32 %v2631, 4294901760
        %2633 = vmatmul.mubr.f32.gmra.mxu0 %v2632
        %v2634 = vpop.f32.mrf.mxu0
        %v2635 = vadd.f32 %v2508, %v2634
        %v2636 = vpop.f32.mrf.mxu0
        %2637 = vmatprep.mubr.f32.mxu0 0.0
        %v2638 = vand.u32 %v2517, 4294901760
        %v2639 = vsub.f32 %v2517, %v2638
        %v2640 = vand.u32 %v2639, 4294901760
        %v2641 = vsub.f32 %v2639, %v2640
        %v2642 = vand.u32 %v2641, 4294901760
        %2643 = vmatmul.mubr.f32.gmra.mxu0 %v2642
        %v2644 = vpop.f32.mrf.mxu0
        %v2645 = vadd.f32 %v2508, %v2644
        %v2646 = vpop.f32.mrf.mxu0
        %2647 = vmatprep.mubr.f32.mxu0 0.0
        %v2648 = vand.u32 %v2520, 4294901760
        %v2649 = vsub.f32 %v2520, %v2648
        %v2650 = vand.u32 %v2649, 4294901760
        %v2651 = vsub.f32 %v2649, %v2650
        %v2652 = vand.u32 %v2651, 4294901760
        %2653 = vmatmul.mubr.f32.gmra.mxu0 %v2652
        %v2654 = vpop.f32.mrf.mxu0
        %v2655 = vadd.f32 %v2508, %v2654
        %v2656 = vpop.f32.mrf.mxu0
        %2657 = vmatprep.mubr.f32.mxu0 0.0
        %v2658 = vand.u32 %v2523, 4294901760
        %v2659 = vsub.f32 %v2523, %v2658
        %v2660 = vand.u32 %v2659, 4294901760
        %v2661 = vsub.f32 %v2659, %v2660
        %v2662 = vand.u32 %v2661, 4294901760
        %2663 = vmatmul.mubr.f32.gmra.mxu0 %v2662
        %v2664 = vpop.f32.mrf.mxu0
        %v2665 = vadd.f32 %v2508, %v2664
        %v2666 = vpop.f32.mrf.mxu0
        %2667 = vmatprep.mubr.f32.mxu0 0.0
        %v2668 = vand.u32 %v2526, 4294901760
        %v2669 = vsub.f32 %v2526, %v2668
        %v2670 = vand.u32 %v2669, 4294901760
        %v2671 = vsub.f32 %v2669, %v2670
        %v2672 = vand.u32 %v2671, 4294901760
        %2673 = vmatmul.mubr.f32.gmra.mxu0 %v2672
        %v2674 = vpop.f32.mrf.mxu0
        %v2675 = vadd.f32 %v2508, %v2674
        %v2676 = vpop.f32.mrf.mxu0
        %2677 = vmatprep.mubr.f32.mxu0 0.0
        %v2678 = vand.u32 %v2529, 4294901760
        %v2679 = vsub.f32 %v2529, %v2678
        %v2680 = vand.u32 %v2679, 4294901760
        %v2681 = vsub.f32 %v2679, %v2680
        %v2682 = vand.u32 %v2681, 4294901760
        %2683 = vmatmul.mubr.f32.gmra.mxu0 %v2682
        %v2684 = vpop.f32.mrf.mxu0
        %v2685 = vadd.f32 %v2508, %v2684
        %v2686 = vpop.f32.mrf.mxu0
        %2687 = vmatprep.mubr.f32.mxu0 0.0
        %v2688 = vand.u32 %v2532, 4294901760
        %v2689 = vsub.f32 %v2532, %v2688
        %v2690 = vand.u32 %v2689, 4294901760
        %v2691 = vsub.f32 %v2689, %v2690
        %v2692 = vand.u32 %v2691, 4294901760
        %2693 = vmatmul.mubr.f32.gmra.mxu0 %v2692
        %v2694 = vpop.f32.mrf.mxu0
        %v2695 = vadd.f32 %v2508, %v2694
        %v2696 = vpop.f32.mrf.mxu0
        %2697 = vmatprep.mubr.f32.mxu0 0.0
        %v2698 = vand.u32 %v2535, 4294901760
        %v2699 = vsub.f32 %v2535, %v2698
        %v2700 = vand.u32 %v2699, 4294901760
        %v2701 = vsub.f32 %v2699, %v2700
        %v2702 = vand.u32 %v2701, 4294901760
        %2703 = vmatmul.mubr.f32.gmra.mxu0 %v2702
        %v2704 = vpop.f32.mrf.mxu0
        %v2705 = vadd.f32 %v2508, %v2704
        %v2706 = vpop.f32.mrf.mxu0
        %2707 = vmatprep.mubr.f32.mxu0 0.0
        %v2708 = vand.u32 %v2538, 4294901760
        %v2709 = vsub.f32 %v2538, %v2708
        %v2710 = vand.u32 %v2709, 4294901760
        %v2711 = vsub.f32 %v2709, %v2710
        %v2712 = vand.u32 %v2711, 4294901760
        %2713 = vmatmul.mubr.f32.gmra.mxu0 %v2712
        %v2714 = vpop.f32.mrf.mxu0
        %v2715 = vadd.f32 %v2508, %v2714
        %v2716 = vpop.f32.mrf.mxu0
        %2717 = vmatprep.mubr.f32.mxu0 0.0
        %v2718 = vand.u32 %v2541, 4294901760
        %v2719 = vsub.f32 %v2541, %v2718
        %v2720 = vand.u32 %v2719, 4294901760
        %v2721 = vsub.f32 %v2719, %v2720
        %v2722 = vand.u32 %v2721, 4294901760
        %2723 = vmatmul.mubr.f32.gmra.mxu0 %v2722
        %v2724 = vpop.f32.mrf.mxu0
        %v2725 = vadd.f32 %v2508, %v2724
        %v2726 = vpop.f32.mrf.mxu0
        %2727 = vmatprep.mubr.f32.mxu0 0.0
        %v2728 = vand.u32 %v2544, 4294901760
        %v2729 = vsub.f32 %v2544, %v2728
        %v2730 = vand.u32 %v2729, 4294901760
        %v2731 = vsub.f32 %v2729, %v2730
        %v2732 = vand.u32 %v2731, 4294901760
        %2733 = vmatmul.mubr.f32.gmra.mxu0 %v2732
        %v2734 = vpop.f32.mrf.mxu0
        %v2735 = vadd.f32 %v2508, %v2734
        %v2736 = vpop.f32.mrf.mxu0
        %2737 = vmatprep.mubr.f32.mxu0 0.0
        %v2738 = vand.u32 %v2547, 4294901760
        %v2739 = vsub.f32 %v2547, %v2738
        %v2740 = vand.u32 %v2739, 4294901760
        %v2741 = vsub.f32 %v2739, %v2740
        %v2742 = vand.u32 %v2741, 4294901760
        %2743 = vmatmul.mubr.f32.gmra.mxu0 %v2742
        %v2744 = vpop.f32.mrf.mxu0
        %v2745 = vadd.f32 %v2508, %v2744
        %v2746 = vpop.f32.mrf.mxu0
        %2747 = vdwg.mxu0
        %2748 = vmatprep.subr.mxu0 0.0
        %2749 = vmatpush1.msra.mxu0 0.0
        %2750 = vmatprep.subr.mxu0 0.0
        %2751 = vmatpush1.msra.mxu0 0.0
        %2752 = vmatprep.subr.mxu0 0.0
        %2753 = vmatpush1.msra.mxu0 0.0
        %2754 = vmatprep.subr.mxu0 0.0
        %2755 = vmatpush1.msra.mxu0 0.0
        %2756 = vmatprep.subr.mxu0 0.0
        %2757 = vmatpush1.msra.mxu0 0.0
        %2758 = vmatprep.subr.mxu0 0.0
        %2759 = vmatpush1.msra.mxu0 0.0
        %2760 = vmatprep.subr.mxu0 0.0
        %2761 = vmatpush1.msra.mxu0 0.0
        %2762 = vmatprep.subr.mxu0 0.0
        %2763 = vmatpush1.msra.mxu0 0.0
        %2764 = vmatprep.subr.mxu0 0.0
        %2765 = vmatpush1.msra.mxu0 0.0
        %2766 = vmatprep.subr.mxu0 0.0
        %2767 = vmatpush1.msra.mxu0 0.0
        %2768 = vmatprep.subr.mxu0 0.0
        %2769 = vmatpush1.msra.mxu0 0.0
        %2770 = vmatprep.subr.mxu0 0.0
        %2771 = vmatpush1.msra.mxu0 0.0
        %2772 = vmatprep.subr.mxu0 0.0
        %v2773 = vand.u32 %v2502, 4294901760
        %v2774 = vsub.f32 %v2502, %v2773
        %v2775 = vand.u32 %v2774, 4294901760
        %v2776 = vsub.f32 %v2774, %v2775
        %v2777 = vand.u32 %v2776, 4294901760
        %2778 = vmatpush1.msra.mxu0 %v2777
        %2779 = vmatprep.subr.mxu0 0.0
        %v2780 = vand.u32 %v2501, 4294901760
        %v2781 = vsub.f32 %v2501, %v2780
        %v2782 = vand.u32 %v2781, 4294901760
        %v2783 = vsub.f32 %v2781, %v2782
        %v2784 = vand.u32 %v2783, 4294901760
        %2785 = vmatpush1.msra.mxu0 %v2784
        %2786 = vmatprep.subr.mxu0 0.0
        %v2787 = vand.u32 %v2500, 4294901760
        %v2788 = vsub.f32 %v2500, %v2787
        %v2789 = vand.u32 %v2788, 4294901760
        %v2790 = vsub.f32 %v2788, %v2789
        %v2791 = vand.u32 %v2790, 4294901760
        %2792 = vmatpush1.msra.mxu0 %v2791
        %2793 = vmatprep.subr.mxu0 0.0
        %v2794 = vand.u32 %v2499, 4294901760
        %v2795 = vsub.f32 %v2499, %v2794
        %v2796 = vand.u32 %v2795, 4294901760
        %v2797 = vsub.f32 %v2795, %v2796
        %v2798 = vand.u32 %v2797, 4294901760
        %2799 = vmatpush1.msra.mxu0 %v2798
        %2800 = vmatprep.subr.mxu0 0.0
        %2801 = vmatpush2.msra.mxu0 0.0
        %2802 = vmatprep.subr.mxu0 0.0
        %2803 = vmatpush2.msra.mxu0 0.0
        %2804 = vmatprep.subr.mxu0 0.0
        %2805 = vmatpush2.msra.mxu0 0.0
        %2806 = vmatprep.subr.mxu0 0.0
        %2807 = vmatpush2.msra.mxu0 0.0
        %2808 = vmatprep.subr.mxu0 0.0
        %2809 = vmatpush2.msra.mxu0 0.0
        %2810 = vmatprep.subr.mxu0 0.0
        %2811 = vmatpush2.msra.mxu0 0.0
        %2812 = vmatprep.subr.mxu0 0.0
        %2813 = vmatpush2.msra.mxu0 0.0
        %2814 = vmatprep.subr.mxu0 0.0
        %2815 = vmatpush2.msra.mxu0 0.0
        %2816 = vmatprep.subr.mxu0 0.0
        %2817 = vmatpush2.msra.mxu0 0.0
        %2818 = vmatprep.subr.mxu0 0.0
        %2819 = vmatpush2.msra.mxu0 0.0
        %2820 = vmatprep.subr.mxu0 0.0
        %2821 = vmatpush2.msra.mxu0 0.0
        %2822 = vmatprep.subr.mxu0 0.0
        %2823 = vmatpush2.msra.mxu0 0.0
        %2824 = vmatprep.subr.mxu0 0.0
        %2825 = vmatpush2.msra.mxu0 0.0
        %2826 = vmatprep.subr.mxu0 0.0
        %2827 = vmatpush2.msra.mxu0 0.0
        %2828 = vmatprep.subr.mxu0 0.0
        %2829 = vmatpush2.msra.mxu0 0.0
        %2830 = vmatprep.subr.mxu0 0.0
        %2831 = vmatpush2.msra.mxu0 0.0
        %2832 = vmatprep.mubr.f32.mxu0 0.0
        %v2833 = vand.u32 %v2511, 4294901760
        %2834 = vmatmul.mubr.f32.gmra.mxu0 %v2833
        %v2835 = vpop.f32.mrf.mxu0
        %v2836 = vadd.f32 %v2625, %v2835
        %v2837 = vpop.f32.mrf.mxu0
        %2838 = vmatprep.mubr.f32.mxu0 0.0
        %v2839 = vand.u32 %v2514, 4294901760
        %2840 = vmatmul.mubr.f32.gmra.mxu0 %v2839
        %v2841 = vpop.f32.mrf.mxu0
        %v2842 = vadd.f32 %v2635, %v2841
        %v2843 = vpop.f32.mrf.mxu0
        %2844 = vmatprep.mubr.f32.mxu0 0.0
        %v2845 = vand.u32 %v2517, 4294901760
        %2846 = vmatmul.mubr.f32.gmra.mxu0 %v2845
        %v2847 = vpop.f32.mrf.mxu0
        %v2848 = vadd.f32 %v2645, %v2847
        %v2849 = vpop.f32.mrf.mxu0
        %2850 = vmatprep.mubr.f32.mxu0 0.0
        %v2851 = vand.u32 %v2520, 4294901760
        %2852 = vmatmul.mubr.f32.gmra.mxu0 %v2851
        %v2853 = vpop.f32.mrf.mxu0
        %v2854 = vadd.f32 %v2655, %v2853
        %v2855 = vpop.f32.mrf.mxu0
        %2856 = vmatprep.mubr.f32.mxu0 0.0
        %v2857 = vand.u32 %v2523, 4294901760
        %2858 = vmatmul.mubr.f32.gmra.mxu0 %v2857
        %v2859 = vpop.f32.mrf.mxu0
        %v2860 = vadd.f32 %v2665, %v2859
        %v2861 = vpop.f32.mrf.mxu0
        %2862 = vmatprep.mubr.f32.mxu0 0.0
        %v2863 = vand.u32 %v2526, 4294901760
        %2864 = vmatmul.mubr.f32.gmra.mxu0 %v2863
        %v2865 = vpop.f32.mrf.mxu0
        %v2866 = vadd.f32 %v2675, %v2865
        %v2867 = vpop.f32.mrf.mxu0
        %2868 = vmatprep.mubr.f32.mxu0 0.0
        %v2869 = vand.u32 %v2529, 4294901760
        %2870 = vmatmul.mubr.f32.gmra.mxu0 %v2869
        %v2871 = vpop.f32.mrf.mxu0
        %v2872 = vadd.f32 %v2685, %v2871
        %v2873 = vpop.f32.mrf.mxu0
        %2874 = vmatprep.mubr.f32.mxu0 0.0
        %v2875 = vand.u32 %v2532, 4294901760
        %2876 = vmatmul.mubr.f32.gmra.mxu0 %v2875
        %v2877 = vpop.f32.mrf.mxu0
        %v2878 = vadd.f32 %v2695, %v2877
        %v2879 = vpop.f32.mrf.mxu0
        %2880 = vmatprep.mubr.f32.mxu0 0.0
        %v2881 = vand.u32 %v2535, 4294901760
        %2882 = vmatmul.mubr.f32.gmra.mxu0 %v2881
        %v2883 = vpop.f32.mrf.mxu0
        %v2884 = vadd.f32 %v2705, %v2883
        %v2885 = vpop.f32.mrf.mxu0
        %2886 = vmatprep.mubr.f32.mxu0 0.0
        %v2887 = vand.u32 %v2538, 4294901760
        %2888 = vmatmul.mubr.f32.gmra.mxu0 %v2887
        %v2889 = vpop.f32.mrf.mxu0
        %v2890 = vadd.f32 %v2715, %v2889
        %v2891 = vpop.f32.mrf.mxu0
        %2892 = vmatprep.mubr.f32.mxu0 0.0
        %v2893 = vand.u32 %v2541, 4294901760
        %2894 = vmatmul.mubr.f32.gmra.mxu0 %v2893
        %v2895 = vpop.f32.mrf.mxu0
        %v2896 = vadd.f32 %v2725, %v2895
        %v2897 = vpop.f32.mrf.mxu0
        %2898 = vmatprep.mubr.f32.mxu0 0.0
        %v2899 = vand.u32 %v2544, 4294901760
        %2900 = vmatmul.mubr.f32.gmra.mxu0 %v2899
        %v2901 = vpop.f32.mrf.mxu0
        %v2902 = vadd.f32 %v2735, %v2901
        %v2903 = vpop.f32.mrf.mxu0
        %2904 = vmatprep.mubr.f32.mxu0 0.0
        %v2905 = vand.u32 %v2547, 4294901760
        %2906 = vmatmul.mubr.f32.gmra.mxu0 %v2905
        %v2907 = vpop.f32.mrf.mxu0
        %v2908 = vadd.f32 %v2745, %v2907
        %v2909 = vpop.f32.mrf.mxu0
        %2910 = vdwg.mxu0
        %2911 = vmatprep.subr.mxu0 0.0
        %2912 = vmatpush1.msra.mxu0 0.0
        %2913 = vmatprep.subr.mxu0 0.0
        %2914 = vmatpush1.msra.mxu0 0.0
        %2915 = vmatprep.subr.mxu0 0.0
        %2916 = vmatpush1.msra.mxu0 0.0
        %2917 = vmatprep.subr.mxu0 0.0
        %2918 = vmatpush1.msra.mxu0 0.0
        %2919 = vmatprep.subr.mxu0 0.0
        %2920 = vmatpush1.msra.mxu0 0.0
        %2921 = vmatprep.subr.mxu0 0.0
        %2922 = vmatpush1.msra.mxu0 0.0
        %2923 = vmatprep.subr.mxu0 0.0
        %2924 = vmatpush1.msra.mxu0 0.0
        %2925 = vmatprep.subr.mxu0 0.0
        %2926 = vmatpush1.msra.mxu0 0.0
        %2927 = vmatprep.subr.mxu0 0.0
        %2928 = vmatpush1.msra.mxu0 0.0
        %2929 = vmatprep.subr.mxu0 0.0
        %2930 = vmatpush1.msra.mxu0 0.0
        %2931 = vmatprep.subr.mxu0 0.0
        %2932 = vmatpush1.msra.mxu0 0.0
        %2933 = vmatprep.subr.mxu0 0.0
        %2934 = vmatpush1.msra.mxu0 0.0
        %2935 = vmatprep.subr.mxu0 0.0
        %v2936 = vand.u32 %v2502, 4294901760
        %v2937 = vsub.f32 %v2502, %v2936
        %2938 = vmatpush1.msra.mxu0 %v2937
        %2939 = vmatprep.subr.mxu0 0.0
        %v2940 = vand.u32 %v2501, 4294901760
        %v2941 = vsub.f32 %v2501, %v2940
        %2942 = vmatpush1.msra.mxu0 %v2941
        %2943 = vmatprep.subr.mxu0 0.0
        %v2944 = vand.u32 %v2500, 4294901760
        %v2945 = vsub.f32 %v2500, %v2944
        %2946 = vmatpush1.msra.mxu0 %v2945
        %2947 = vmatprep.subr.mxu0 0.0
        %v2948 = vand.u32 %v2499, 4294901760
        %v2949 = vsub.f32 %v2499, %v2948
        %2950 = vmatpush1.msra.mxu0 %v2949
        %2951 = vmatprep.subr.mxu0 0.0
        %2952 = vmatpush2.msra.mxu0 0.0
        %2953 = vmatprep.subr.mxu0 0.0
        %2954 = vmatpush2.msra.mxu0 0.0
        %2955 = vmatprep.subr.mxu0 0.0
        %2956 = vmatpush2.msra.mxu0 0.0
        %2957 = vmatprep.subr.mxu0 0.0
        %2958 = vmatpush2.msra.mxu0 0.0
        %2959 = vmatprep.subr.mxu0 0.0
        %2960 = vmatpush2.msra.mxu0 0.0
        %2961 = vmatprep.subr.mxu0 0.0
        %2962 = vmatpush2.msra.mxu0 0.0
        %2963 = vmatprep.subr.mxu0 0.0
        %2964 = vmatpush2.msra.mxu0 0.0
        %2965 = vmatprep.subr.mxu0 0.0
        %2966 = vmatpush2.msra.mxu0 0.0
        %2967 = vmatprep.subr.mxu0 0.0
        %2968 = vmatpush2.msra.mxu0 0.0
        %2969 = vmatprep.subr.mxu0 0.0
        %2970 = vmatpush2.msra.mxu0 0.0
        %2971 = vmatprep.subr.mxu0 0.0
        %2972 = vmatpush2.msra.mxu0 0.0
        %2973 = vmatprep.subr.mxu0 0.0
        %2974 = vmatpush2.msra.mxu0 0.0
        %2975 = vmatprep.subr.mxu0 0.0
        %2976 = vmatpush2.msra.mxu0 0.0
        %2977 = vmatprep.subr.mxu0 0.0
        %2978 = vmatpush2.msra.mxu0 0.0
        %2979 = vmatprep.subr.mxu0 0.0
        %2980 = vmatpush2.msra.mxu0 0.0
        %2981 = vmatprep.subr.mxu0 0.0
        %2982 = vmatpush2.msra.mxu0 0.0
        %2983 = vmatprep.mubr.f32.mxu0 0.0
        %v2984 = vand.u32 %v2511, 4294901760
        %v2985 = vsub.f32 %v2511, %v2984
        %2986 = vmatmul.mubr.f32.gmra.mxu0 %v2985
        %v2987 = vpop.f32.mrf.mxu0
        %v2988 = vadd.f32 %v2836, %v2987
        %v2989 = vpop.f32.mrf.mxu0
        %2990 = vmatprep.mubr.f32.mxu0 0.0
        %v2991 = vand.u32 %v2514, 4294901760
        %v2992 = vsub.f32 %v2514, %v2991
        %2993 = vmatmul.mubr.f32.gmra.mxu0 %v2992
        %v2994 = vpop.f32.mrf.mxu0
        %v2995 = vadd.f32 %v2842, %v2994
        %v2996 = vpop.f32.mrf.mxu0
        %2997 = vmatprep.mubr.f32.mxu0 0.0
        %v2998 = vand.u32 %v2517, 4294901760
        %v2999 = vsub.f32 %v2517, %v2998
        %3000 = vmatmul.mubr.f32.gmra.mxu0 %v2999
        %v3001 = vpop.f32.mrf.mxu0
        %v3002 = vadd.f32 %v2848, %v3001
        %v3003 = vpop.f32.mrf.mxu0
        %3004 = vmatprep.mubr.f32.mxu0 0.0
        %v3005 = vand.u32 %v2520, 4294901760
        %v3006 = vsub.f32 %v2520, %v3005
        %3007 = vmatmul.mubr.f32.gmra.mxu0 %v3006
        %v3008 = vpop.f32.mrf.mxu0
        %v3009 = vadd.f32 %v2854, %v3008
        %v3010 = vpop.f32.mrf.mxu0
        %3011 = vmatprep.mubr.f32.mxu0 0.0
        %v3012 = vand.u32 %v2523, 4294901760
        %v3013 = vsub.f32 %v2523, %v3012
        %3014 = vmatmul.mubr.f32.gmra.mxu0 %v3013
        %v3015 = vpop.f32.mrf.mxu0
        %v3016 = vadd.f32 %v2860, %v3015
        %v3017 = vpop.f32.mrf.mxu0
        %3018 = vmatprep.mubr.f32.mxu0 0.0
        %v3019 = vand.u32 %v2526, 4294901760
        %v3020 = vsub.f32 %v2526, %v3019
        %3021 = vmatmul.mubr.f32.gmra.mxu0 %v3020
        %v3022 = vpop.f32.mrf.mxu0
        %v3023 = vadd.f32 %v2866, %v3022
        %v3024 = vpop.f32.mrf.mxu0
        %3025 = vmatprep.mubr.f32.mxu0 0.0
        %v3026 = vand.u32 %v2529, 4294901760
        %v3027 = vsub.f32 %v2529, %v3026
        %3028 = vmatmul.mubr.f32.gmra.mxu0 %v3027
        %v3029 = vpop.f32.mrf.mxu0
        %v3030 = vadd.f32 %v2872, %v3029
        %v3031 = vpop.f32.mrf.mxu0
        %3032 = vmatprep.mubr.f32.mxu0 0.0
        %v3033 = vand.u32 %v2532, 4294901760
        %v3034 = vsub.f32 %v2532, %v3033
        %3035 = vmatmul.mubr.f32.gmra.mxu0 %v3034
        %v3036 = vpop.f32.mrf.mxu0
        %v3037 = vadd.f32 %v2878, %v3036
        %v3038 = vpop.f32.mrf.mxu0
        %3039 = vmatprep.mubr.f32.mxu0 0.0
        %v3040 = vand.u32 %v2535, 4294901760
        %v3041 = vsub.f32 %v2535, %v3040
        %3042 = vmatmul.mubr.f32.gmra.mxu0 %v3041
        %v3043 = vpop.f32.mrf.mxu0
        %v3044 = vadd.f32 %v2884, %v3043
        %v3045 = vpop.f32.mrf.mxu0
        %3046 = vmatprep.mubr.f32.mxu0 0.0
        %v3047 = vand.u32 %v2538, 4294901760
        %v3048 = vsub.f32 %v2538, %v3047
        %3049 = vmatmul.mubr.f32.gmra.mxu0 %v3048
        %v3050 = vpop.f32.mrf.mxu0
        %v3051 = vadd.f32 %v2890, %v3050
        %v3052 = vpop.f32.mrf.mxu0
        %3053 = vmatprep.mubr.f32.mxu0 0.0
        %v3054 = vand.u32 %v2541, 4294901760
        %v3055 = vsub.f32 %v2541, %v3054
        %3056 = vmatmul.mubr.f32.gmra.mxu0 %v3055
        %v3057 = vpop.f32.mrf.mxu0
        %v3058 = vadd.f32 %v2896, %v3057
        %v3059 = vpop.f32.mrf.mxu0
        %3060 = vmatprep.mubr.f32.mxu0 0.0
        %v3061 = vand.u32 %v2544, 4294901760
        %v3062 = vsub.f32 %v2544, %v3061
        %3063 = vmatmul.mubr.f32.gmra.mxu0 %v3062
        %v3064 = vpop.f32.mrf.mxu0
        %v3065 = vadd.f32 %v2902, %v3064
        %v3066 = vpop.f32.mrf.mxu0
        %3067 = vmatprep.mubr.f32.mxu0 0.0
        %v3068 = vand.u32 %v2547, 4294901760
        %v3069 = vsub.f32 %v2547, %v3068
        %3070 = vmatmul.mubr.f32.gmra.mxu0 %v3069
        %v3071 = vpop.f32.mrf.mxu0
        %v3072 = vadd.f32 %v2908, %v3071
        %v3073 = vpop.f32.mrf.mxu0
        %3074 = vdwg.mxu0
        %3075 = vmatprep.subr.mxu0 0.0
        %3076 = vmatpush1.msra.mxu0 0.0
        %3077 = vmatprep.subr.mxu0 0.0
        %3078 = vmatpush1.msra.mxu0 0.0
        %3079 = vmatprep.subr.mxu0 0.0
        %3080 = vmatpush1.msra.mxu0 0.0
        %3081 = vmatprep.subr.mxu0 0.0
        %3082 = vmatpush1.msra.mxu0 0.0
        %3083 = vmatprep.subr.mxu0 0.0
        %3084 = vmatpush1.msra.mxu0 0.0
        %3085 = vmatprep.subr.mxu0 0.0
        %3086 = vmatpush1.msra.mxu0 0.0
        %3087 = vmatprep.subr.mxu0 0.0
        %3088 = vmatpush1.msra.mxu0 0.0
        %3089 = vmatprep.subr.mxu0 0.0
        %3090 = vmatpush1.msra.mxu0 0.0
        %3091 = vmatprep.subr.mxu0 0.0
        %3092 = vmatpush1.msra.mxu0 0.0
        %3093 = vmatprep.subr.mxu0 0.0
        %3094 = vmatpush1.msra.mxu0 0.0
        %3095 = vmatprep.subr.mxu0 0.0
        %3096 = vmatpush1.msra.mxu0 0.0
        %3097 = vmatprep.subr.mxu0 0.0
        %3098 = vmatpush1.msra.mxu0 0.0
        %3099 = vmatprep.subr.mxu0 0.0
        %v3100 = vand.u32 %v2502, 4294901760
        %3101 = vmatpush1.msra.mxu0 %v3100
        %3102 = vmatprep.subr.mxu0 0.0
        %v3103 = vand.u32 %v2501, 4294901760
        %3104 = vmatpush1.msra.mxu0 %v3103
        %3105 = vmatprep.subr.mxu0 0.0
        %v3106 = vand.u32 %v2500, 4294901760
        %3107 = vmatpush1.msra.mxu0 %v3106
        %3108 = vmatprep.subr.mxu0 0.0
        %v3109 = vand.u32 %v2499, 4294901760
        %3110 = vmatpush1.msra.mxu0 %v3109
        %3111 = vmatprep.subr.mxu0 0.0
        %3112 = vmatpush2.msra.mxu0 0.0
        %3113 = vmatprep.subr.mxu0 0.0
        %3114 = vmatpush2.msra.mxu0 0.0
        %3115 = vmatprep.subr.mxu0 0.0
        %3116 = vmatpush2.msra.mxu0 0.0
        %3117 = vmatprep.subr.mxu0 0.0
        %3118 = vmatpush2.msra.mxu0 0.0
        %3119 = vmatprep.subr.mxu0 0.0
        %3120 = vmatpush2.msra.mxu0 0.0
        %3121 = vmatprep.subr.mxu0 0.0
        %3122 = vmatpush2.msra.mxu0 0.0
        %3123 = vmatprep.subr.mxu0 0.0
        %3124 = vmatpush2.msra.mxu0 0.0
        %3125 = vmatprep.subr.mxu0 0.0
        %3126 = vmatpush2.msra.mxu0 0.0
        %3127 = vmatprep.subr.mxu0 0.0
        %3128 = vmatpush2.msra.mxu0 0.0
        %3129 = vmatprep.subr.mxu0 0.0
        %3130 = vmatpush2.msra.mxu0 0.0
        %3131 = vmatprep.subr.mxu0 0.0
        %3132 = vmatpush2.msra.mxu0 0.0
        %3133 = vmatprep.subr.mxu0 0.0
        %3134 = vmatpush2.msra.mxu0 0.0
        %3135 = vmatprep.subr.mxu0 0.0
        %3136 = vmatpush2.msra.mxu0 0.0
        %3137 = vmatprep.subr.mxu0 0.0
        %3138 = vmatpush2.msra.mxu0 0.0
        %3139 = vmatprep.subr.mxu0 0.0
        %3140 = vmatpush2.msra.mxu0 0.0
        %3141 = vmatprep.subr.mxu0 0.0
        %3142 = vmatpush2.msra.mxu0 0.0
        %3143 = vmatprep.mubr.f32.mxu0 0.0
        %v3144 = vand.u32 %v2511, 4294901760
        %v3145 = vsub.f32 %v2511, %v3144
        %v3146 = vand.u32 %v3145, 4294901760
        %3147 = vmatmul.mubr.f32.gmra.mxu0 %v3146
        %v3148 = vpop.f32.mrf.mxu0
        %v3149 = vadd.f32 %v2988, %v3148
        %v3150 = vpop.f32.mrf.mxu0
        %3151 = vmatprep.mubr.f32.mxu0 0.0
        %v3152 = vand.u32 %v2514, 4294901760
        %v3153 = vsub.f32 %v2514, %v3152
        %v3154 = vand.u32 %v3153, 4294901760
        %3155 = vmatmul.mubr.f32.gmra.mxu0 %v3154
        %v3156 = vpop.f32.mrf.mxu0
        %v3157 = vadd.f32 %v2995, %v3156
        %v3158 = vpop.f32.mrf.mxu0
        %3159 = vmatprep.mubr.f32.mxu0 0.0
        %v3160 = vand.u32 %v2517, 4294901760
        %v3161 = vsub.f32 %v2517, %v3160
        %v3162 = vand.u32 %v3161, 4294901760
        %3163 = vmatmul.mubr.f32.gmra.mxu0 %v3162
        %v3164 = vpop.f32.mrf.mxu0
        %v3165 = vadd.f32 %v3002, %v3164
        %v3166 = vpop.f32.mrf.mxu0
        %3167 = vmatprep.mubr.f32.mxu0 0.0
        %v3168 = vand.u32 %v2520, 4294901760
        %v3169 = vsub.f32 %v2520, %v3168
        %v3170 = vand.u32 %v3169, 4294901760
        %3171 = vmatmul.mubr.f32.gmra.mxu0 %v3170
        %v3172 = vpop.f32.mrf.mxu0
        %v3173 = vadd.f32 %v3009, %v3172
        %v3174 = vpop.f32.mrf.mxu0
        %3175 = vmatprep.mubr.f32.mxu0 0.0
        %v3176 = vand.u32 %v2523, 4294901760
        %v3177 = vsub.f32 %v2523, %v3176
        %v3178 = vand.u32 %v3177, 4294901760
        %3179 = vmatmul.mubr.f32.gmra.mxu0 %v3178
        %v3180 = vpop.f32.mrf.mxu0
        %v3181 = vadd.f32 %v3016, %v3180
        %v3182 = vpop.f32.mrf.mxu0
        %3183 = vmatprep.mubr.f32.mxu0 0.0
        %v3184 = vand.u32 %v2526, 4294901760
        %v3185 = vsub.f32 %v2526, %v3184
        %v3186 = vand.u32 %v3185, 4294901760
        %3187 = vmatmul.mubr.f32.gmra.mxu0 %v3186
        %v3188 = vpop.f32.mrf.mxu0
        %v3189 = vadd.f32 %v3023, %v3188
        %v3190 = vpop.f32.mrf.mxu0
        %3191 = vmatprep.mubr.f32.mxu0 0.0
        %v3192 = vand.u32 %v2529, 4294901760
        %v3193 = vsub.f32 %v2529, %v3192
        %v3194 = vand.u32 %v3193, 4294901760
        %3195 = vmatmul.mubr.f32.gmra.mxu0 %v3194
        %v3196 = vpop.f32.mrf.mxu0
        %v3197 = vadd.f32 %v3030, %v3196
        %v3198 = vpop.f32.mrf.mxu0
        %3199 = vmatprep.mubr.f32.mxu0 0.0
        %v3200 = vand.u32 %v2532, 4294901760
        %v3201 = vsub.f32 %v2532, %v3200
        %v3202 = vand.u32 %v3201, 4294901760
        %3203 = vmatmul.mubr.f32.gmra.mxu0 %v3202
        %v3204 = vpop.f32.mrf.mxu0
        %v3205 = vadd.f32 %v3037, %v3204
        %v3206 = vpop.f32.mrf.mxu0
        %3207 = vmatprep.mubr.f32.mxu0 0.0
        %v3208 = vand.u32 %v2535, 4294901760
        %v3209 = vsub.f32 %v2535, %v3208
        %v3210 = vand.u32 %v3209, 4294901760
        %3211 = vmatmul.mubr.f32.gmra.mxu0 %v3210
        %v3212 = vpop.f32.mrf.mxu0
        %v3213 = vadd.f32 %v3044, %v3212
        %v3214 = vpop.f32.mrf.mxu0
        %3215 = vmatprep.mubr.f32.mxu0 0.0
        %v3216 = vand.u32 %v2538, 4294901760
        %v3217 = vsub.f32 %v2538, %v3216
        %v3218 = vand.u32 %v3217, 4294901760
        %3219 = vmatmul.mubr.f32.gmra.mxu0 %v3218
        %v3220 = vpop.f32.mrf.mxu0
        %v3221 = vadd.f32 %v3051, %v3220
        %v3222 = vpop.f32.mrf.mxu0
        %3223 = vmatprep.mubr.f32.mxu0 0.0
        %v3224 = vand.u32 %v2541, 4294901760
        %v3225 = vsub.f32 %v2541, %v3224
        %v3226 = vand.u32 %v3225, 4294901760
        %3227 = vmatmul.mubr.f32.gmra.mxu0 %v3226
        %v3228 = vpop.f32.mrf.mxu0
        %v3229 = vadd.f32 %v3058, %v3228
        %v3230 = vpop.f32.mrf.mxu0
        %3231 = vmatprep.mubr.f32.mxu0 0.0
        %v3232 = vand.u32 %v2544, 4294901760
        %v3233 = vsub.f32 %v2544, %v3232
        %v3234 = vand.u32 %v3233, 4294901760
        %3235 = vmatmul.mubr.f32.gmra.mxu0 %v3234
        %v3236 = vpop.f32.mrf.mxu0
        %v3237 = vadd.f32 %v3065, %v3236
        %v3238 = vpop.f32.mrf.mxu0
        %3239 = vmatprep.mubr.f32.mxu0 0.0
        %v3240 = vand.u32 %v2547, 4294901760
        %v3241 = vsub.f32 %v2547, %v3240
        %v3242 = vand.u32 %v3241, 4294901760
        %3243 = vmatmul.mubr.f32.gmra.mxu0 %v3242
        %v3244 = vpop.f32.mrf.mxu0
        %v3245 = vadd.f32 %v3072, %v3244
        %v3246 = vpop.f32.mrf.mxu0
        %3247 = vdwg.mxu0
        %3248 = vmatprep.subr.mxu0 0.0
        %3249 = vmatpush1.msra.mxu0 0.0
        %3250 = vmatprep.subr.mxu0 0.0
        %3251 = vmatpush1.msra.mxu0 0.0
        %3252 = vmatprep.subr.mxu0 0.0
        %3253 = vmatpush1.msra.mxu0 0.0
        %3254 = vmatprep.subr.mxu0 0.0
        %3255 = vmatpush1.msra.mxu0 0.0
        %3256 = vmatprep.subr.mxu0 0.0
        %3257 = vmatpush1.msra.mxu0 0.0
        %3258 = vmatprep.subr.mxu0 0.0
        %3259 = vmatpush1.msra.mxu0 0.0
        %3260 = vmatprep.subr.mxu0 0.0
        %3261 = vmatpush1.msra.mxu0 0.0
        %3262 = vmatprep.subr.mxu0 0.0
        %3263 = vmatpush1.msra.mxu0 0.0
        %3264 = vmatprep.subr.mxu0 0.0
        %3265 = vmatpush1.msra.mxu0 0.0
        %3266 = vmatprep.subr.mxu0 0.0
        %3267 = vmatpush1.msra.mxu0 0.0
        %3268 = vmatprep.subr.mxu0 0.0
        %3269 = vmatpush1.msra.mxu0 0.0
        %3270 = vmatprep.subr.mxu0 0.0
        %3271 = vmatpush1.msra.mxu0 0.0
        %3272 = vmatprep.subr.mxu0 0.0
        %v3273 = vand.u32 %v2502, 4294901760
        %v3274 = vsub.f32 %v2502, %v3273
        %v3275 = vand.u32 %v3274, 4294901760
        %3276 = vmatpush1.msra.mxu0 %v3275
        %3277 = vmatprep.subr.mxu0 0.0
        %v3278 = vand.u32 %v2501, 4294901760
        %v3279 = vsub.f32 %v2501, %v3278
        %v3280 = vand.u32 %v3279, 4294901760
        %3281 = vmatpush1.msra.mxu0 %v3280
        %3282 = vmatprep.subr.mxu0 0.0
        %v3283 = vand.u32 %v2500, 4294901760
        %v3284 = vsub.f32 %v2500, %v3283
        %v3285 = vand.u32 %v3284, 4294901760
        %3286 = vmatpush1.msra.mxu0 %v3285
        %3287 = vmatprep.subr.mxu0 0.0
        %v3288 = vand.u32 %v2499, 4294901760
        %v3289 = vsub.f32 %v2499, %v3288
        %v3290 = vand.u32 %v3289, 4294901760
        %3291 = vmatpush1.msra.mxu0 %v3290
        %3292 = vmatprep.subr.mxu0 0.0
        %3293 = vmatpush2.msra.mxu0 0.0
        %3294 = vmatprep.subr.mxu0 0.0
        %3295 = vmatpush2.msra.mxu0 0.0
        %3296 = vmatprep.subr.mxu0 0.0
        %3297 = vmatpush2.msra.mxu0 0.0
        %3298 = vmatprep.subr.mxu0 0.0
        %3299 = vmatpush2.msra.mxu0 0.0
        %3300 = vmatprep.subr.mxu0 0.0
        %3301 = vmatpush2.msra.mxu0 0.0
        %3302 = vmatprep.subr.mxu0 0.0
        %3303 = vmatpush2.msra.mxu0 0.0
        %3304 = vmatprep.subr.mxu0 0.0
        %3305 = vmatpush2.msra.mxu0 0.0
        %3306 = vmatprep.subr.mxu0 0.0
        %3307 = vmatpush2.msra.mxu0 0.0
        %3308 = vmatprep.subr.mxu0 0.0
        %3309 = vmatpush2.msra.mxu0 0.0
        %3310 = vmatprep.subr.mxu0 0.0
        %3311 = vmatpush2.msra.mxu0 0.0
        %3312 = vmatprep.subr.mxu0 0.0
        %3313 = vmatpush2.msra.mxu0 0.0
        %3314 = vmatprep.subr.mxu0 0.0
        %3315 = vmatpush2.msra.mxu0 0.0
        %3316 = vmatprep.subr.mxu0 0.0
        %3317 = vmatpush2.msra.mxu0 0.0
        %3318 = vmatprep.subr.mxu0 0.0
        %3319 = vmatpush2.msra.mxu0 0.0
        %3320 = vmatprep.subr.mxu0 0.0
        %3321 = vmatpush2.msra.mxu0 0.0
        %3322 = vmatprep.subr.mxu0 0.0
        %3323 = vmatpush2.msra.mxu0 0.0
        %3324 = vmatprep.mubr.f32.mxu0 0.0
        %v3325 = vand.u32 %v2511, 4294901760
        %3326 = vmatmul.mubr.f32.gmra.mxu0 %v3325
        %v3327 = vpop.f32.mrf.mxu0
        %v3328 = vadd.f32 %v3149, %v3327
        %v3329 = vpop.f32.mrf.mxu0
        %3330 = vmatprep.mubr.f32.mxu0 0.0
        %v3331 = vand.u32 %v2514, 4294901760
        %3332 = vmatmul.mubr.f32.gmra.mxu0 %v3331
        %v3333 = vpop.f32.mrf.mxu0
        %v3334 = vadd.f32 %v3157, %v3333
        %v3335 = vpop.f32.mrf.mxu0
        %3336 = vmatprep.mubr.f32.mxu0 0.0
        %v3337 = vand.u32 %v2517, 4294901760
        %3338 = vmatmul.mubr.f32.gmra.mxu0 %v3337
        %v3339 = vpop.f32.mrf.mxu0
        %v3340 = vadd.f32 %v3165, %v3339
        %v3341 = vpop.f32.mrf.mxu0
        %3342 = vmatprep.mubr.f32.mxu0 0.0
        %v3343 = vand.u32 %v2520, 4294901760
        %3344 = vmatmul.mubr.f32.gmra.mxu0 %v3343
        %v3345 = vpop.f32.mrf.mxu0
        %v3346 = vadd.f32 %v3173, %v3345
        %v3347 = vpop.f32.mrf.mxu0
        %3348 = vmatprep.mubr.f32.mxu0 0.0
        %v3349 = vand.u32 %v2523, 4294901760
        %3350 = vmatmul.mubr.f32.gmra.mxu0 %v3349
        %v3351 = vpop.f32.mrf.mxu0
        %v3352 = vadd.f32 %v3181, %v3351
        %v3353 = vpop.f32.mrf.mxu0
        %3354 = vmatprep.mubr.f32.mxu0 0.0
        %v3355 = vand.u32 %v2526, 4294901760
        %3356 = vmatmul.mubr.f32.gmra.mxu0 %v3355
        %v3357 = vpop.f32.mrf.mxu0
        %v3358 = vadd.f32 %v3189, %v3357
        %v3359 = vpop.f32.mrf.mxu0
        %3360 = vmatprep.mubr.f32.mxu0 0.0
        %v3361 = vand.u32 %v2529, 4294901760
        %3362 = vmatmul.mubr.f32.gmra.mxu0 %v3361
        %v3363 = vpop.f32.mrf.mxu0
        %v3364 = vadd.f32 %v3197, %v3363
        %v3365 = vpop.f32.mrf.mxu0
        %3366 = vmatprep.mubr.f32.mxu0 0.0
        %v3367 = vand.u32 %v2532, 4294901760
        %3368 = vmatmul.mubr.f32.gmra.mxu0 %v3367
        %v3369 = vpop.f32.mrf.mxu0
        %v3370 = vadd.f32 %v3205, %v3369
        %v3371 = vpop.f32.mrf.mxu0
        %3372 = vmatprep.mubr.f32.mxu0 0.0
        %v3373 = vand.u32 %v2535, 4294901760
        %3374 = vmatmul.mubr.f32.gmra.mxu0 %v3373
        %v3375 = vpop.f32.mrf.mxu0
        %v3376 = vadd.f32 %v3213, %v3375
        %v3377 = vpop.f32.mrf.mxu0
        %3378 = vmatprep.mubr.f32.mxu0 0.0
        %v3379 = vand.u32 %v2538, 4294901760
        %3380 = vmatmul.mubr.f32.gmra.mxu0 %v3379
        %v3381 = vpop.f32.mrf.mxu0
        %v3382 = vadd.f32 %v3221, %v3381
        %v3383 = vpop.f32.mrf.mxu0
        %3384 = vmatprep.mubr.f32.mxu0 0.0
        %v3385 = vand.u32 %v2541, 4294901760
        %3386 = vmatmul.mubr.f32.gmra.mxu0 %v3385
        %v3387 = vpop.f32.mrf.mxu0
        %v3388 = vadd.f32 %v3229, %v3387
        %v3389 = vpop.f32.mrf.mxu0
        %3390 = vmatprep.mubr.f32.mxu0 0.0
        %v3391 = vand.u32 %v2544, 4294901760
        %3392 = vmatmul.mubr.f32.gmra.mxu0 %v3391
        %v3393 = vpop.f32.mrf.mxu0
        %v3394 = vadd.f32 %v3237, %v3393
        %v3395 = vpop.f32.mrf.mxu0
        %3396 = vmatprep.mubr.f32.mxu0 0.0
        %v3397 = vand.u32 %v2547, 4294901760
        %3398 = vmatmul.mubr.f32.gmra.mxu0 %v3397
        %v3399 = vpop.f32.mrf.mxu0
        %v3400 = vadd.f32 %v3245, %v3399
        %v3401 = vpop.f32.mrf.mxu0
        %3402 = vdwg.mxu0
        %3403 = vmatprep.subr.mxu0 0.0
        %3404 = vmatpush1.msra.mxu0 0.0
        %3405 = vmatprep.subr.mxu0 0.0
        %3406 = vmatpush1.msra.mxu0 0.0
        %3407 = vmatprep.subr.mxu0 0.0
        %3408 = vmatpush1.msra.mxu0 0.0
        %3409 = vmatprep.subr.mxu0 0.0
        %3410 = vmatpush1.msra.mxu0 0.0
        %3411 = vmatprep.subr.mxu0 0.0
        %3412 = vmatpush1.msra.mxu0 0.0
        %3413 = vmatprep.subr.mxu0 0.0
        %3414 = vmatpush1.msra.mxu0 0.0
        %3415 = vmatprep.subr.mxu0 0.0
        %3416 = vmatpush1.msra.mxu0 0.0
        %3417 = vmatprep.subr.mxu0 0.0
        %3418 = vmatpush1.msra.mxu0 0.0
        %3419 = vmatprep.subr.mxu0 0.0
        %3420 = vmatpush1.msra.mxu0 0.0
        %3421 = vmatprep.subr.mxu0 0.0
        %3422 = vmatpush1.msra.mxu0 0.0
        %3423 = vmatprep.subr.mxu0 0.0
        %3424 = vmatpush1.msra.mxu0 0.0
        %3425 = vmatprep.subr.mxu0 0.0
        %3426 = vmatpush1.msra.mxu0 0.0
        %3427 = vmatprep.subr.mxu0 0.0
        %v3428 = vand.u32 %v2502, 4294901760
        %3429 = vmatpush1.msra.mxu0 %v3428
        %3430 = vmatprep.subr.mxu0 0.0
        %v3431 = vand.u32 %v2501, 4294901760
        %3432 = vmatpush1.msra.mxu0 %v3431
        %3433 = vmatprep.subr.mxu0 0.0
        %v3434 = vand.u32 %v2500, 4294901760
        %3435 = vmatpush1.msra.mxu0 %v3434
        %3436 = vmatprep.subr.mxu0 0.0
        %v3437 = vand.u32 %v2499, 4294901760
        %3438 = vmatpush1.msra.mxu0 %v3437
        %3439 = vmatprep.subr.mxu0 0.0
        %3440 = vmatpush2.msra.mxu0 0.0
        %3441 = vmatprep.subr.mxu0 0.0
        %3442 = vmatpush2.msra.mxu0 0.0
        %3443 = vmatprep.subr.mxu0 0.0
        %3444 = vmatpush2.msra.mxu0 0.0
        %3445 = vmatprep.subr.mxu0 0.0
        %3446 = vmatpush2.msra.mxu0 0.0
        %3447 = vmatprep.subr.mxu0 0.0
        %3448 = vmatpush2.msra.mxu0 0.0
        %3449 = vmatprep.subr.mxu0 0.0
        %3450 = vmatpush2.msra.mxu0 0.0
        %3451 = vmatprep.subr.mxu0 0.0
        %3452 = vmatpush2.msra.mxu0 0.0
        %3453 = vmatprep.subr.mxu0 0.0
        %3454 = vmatpush2.msra.mxu0 0.0
        %3455 = vmatprep.subr.mxu0 0.0
        %3456 = vmatpush2.msra.mxu0 0.0
        %3457 = vmatprep.subr.mxu0 0.0
        %3458 = vmatpush2.msra.mxu0 0.0
        %3459 = vmatprep.subr.mxu0 0.0
        %3460 = vmatpush2.msra.mxu0 0.0
        %3461 = vmatprep.subr.mxu0 0.0
        %3462 = vmatpush2.msra.mxu0 0.0
        %3463 = vmatprep.subr.mxu0 0.0
        %3464 = vmatpush2.msra.mxu0 0.0
        %3465 = vmatprep.subr.mxu0 0.0
        %3466 = vmatpush2.msra.mxu0 0.0
        %3467 = vmatprep.subr.mxu0 0.0
        %3468 = vmatpush2.msra.mxu0 0.0
        %3469 = vmatprep.subr.mxu0 0.0
        %3470 = vmatpush2.msra.mxu0 0.0
        %3471 = vmatprep.mubr.f32.mxu0 0.0
        %v3472 = vand.u32 %v2511, 4294901760
        %3473 = vmatmul.mubr.f32.gmra.mxu0 %v3472
        %v3474 = vpop.f32.mrf.mxu0
        %v3475 = vadd.f32 %v3328, %v3474
        %v3476 = vpop.f32.mrf.mxu0
        %3477 = vmatprep.mubr.f32.mxu0 0.0
        %v3478 = vand.u32 %v2514, 4294901760
        %3479 = vmatmul.mubr.f32.gmra.mxu0 %v3478
        %v3480 = vpop.f32.mrf.mxu0
        %v3481 = vadd.f32 %v3334, %v3480
        %v3482 = vpop.f32.mrf.mxu0
        %3483 = vmatprep.mubr.f32.mxu0 0.0
        %v3484 = vand.u32 %v2517, 4294901760
        %3485 = vmatmul.mubr.f32.gmra.mxu0 %v3484
        %v3486 = vpop.f32.mrf.mxu0
        %v3487 = vadd.f32 %v3340, %v3486
        %v3488 = vpop.f32.mrf.mxu0
        %3489 = vmatprep.mubr.f32.mxu0 0.0
        %v3490 = vand.u32 %v2520, 4294901760
        %3491 = vmatmul.mubr.f32.gmra.mxu0 %v3490
        %v3492 = vpop.f32.mrf.mxu0
        %v3493 = vadd.f32 %v3346, %v3492
        %v3494 = vpop.f32.mrf.mxu0
        %3495 = vmatprep.mubr.f32.mxu0 0.0
        %v3496 = vand.u32 %v2523, 4294901760
        %3497 = vmatmul.mubr.f32.gmra.mxu0 %v3496
        %v3498 = vpop.f32.mrf.mxu0
        %v3499 = vadd.f32 %v3352, %v3498
        %v3500 = vpop.f32.mrf.mxu0
        %3501 = vmatprep.mubr.f32.mxu0 0.0
        %v3502 = vand.u32 %v2526, 4294901760
        %3503 = vmatmul.mubr.f32.gmra.mxu0 %v3502
        %v3504 = vpop.f32.mrf.mxu0
        %v3505 = vadd.f32 %v3358, %v3504
        %v3506 = vpop.f32.mrf.mxu0
        %3507 = vmatprep.mubr.f32.mxu0 0.0
        %v3508 = vand.u32 %v2529, 4294901760
        %3509 = vmatmul.mubr.f32.gmra.mxu0 %v3508
        %v3510 = vpop.f32.mrf.mxu0
        %v3511 = vadd.f32 %v3364, %v3510
        %v3512 = vpop.f32.mrf.mxu0
        %3513 = vmatprep.mubr.f32.mxu0 0.0
        %v3514 = vand.u32 %v2532, 4294901760
        %3515 = vmatmul.mubr.f32.gmra.mxu0 %v3514
        %v3516 = vpop.f32.mrf.mxu0
        %v3517 = vadd.f32 %v3370, %v3516
        %v3518 = vpop.f32.mrf.mxu0
        %3519 = vmatprep.mubr.f32.mxu0 0.0
        %v3520 = vand.u32 %v2535, 4294901760
        %3521 = vmatmul.mubr.f32.gmra.mxu0 %v3520
        %v3522 = vpop.f32.mrf.mxu0
        %v3523 = vadd.f32 %v3376, %v3522
        %v3524 = vpop.f32.mrf.mxu0
        %3525 = vmatprep.mubr.f32.mxu0 0.0
        %v3526 = vand.u32 %v2538, 4294901760
        %3527 = vmatmul.mubr.f32.gmra.mxu0 %v3526
        %v3528 = vpop.f32.mrf.mxu0
        %v3529 = vadd.f32 %v3382, %v3528
        %v3530 = vpop.f32.mrf.mxu0
        %3531 = vmatprep.mubr.f32.mxu0 0.0
        %v3532 = vand.u32 %v2541, 4294901760
        %3533 = vmatmul.mubr.f32.gmra.mxu0 %v3532
        %v3534 = vpop.f32.mrf.mxu0
        %v3535 = vadd.f32 %v3388, %v3534
        %v3536 = vpop.f32.mrf.mxu0
        %3537 = vmatprep.mubr.f32.mxu0 0.0
        %v3538 = vand.u32 %v2544, 4294901760
        %3539 = vmatmul.mubr.f32.gmra.mxu0 %v3538
        %v3540 = vpop.f32.mrf.mxu0
        %v3541 = vadd.f32 %v3394, %v3540
        %v3542 = vpop.f32.mrf.mxu0
        %3543 = vmatprep.mubr.f32.mxu0 0.0
        %v3544 = vand.u32 %v2547, 4294901760
        %3545 = vmatmul.mubr.f32.gmra.mxu0 %v3544
        %v3546 = vpop.f32.mrf.mxu0
        %v3547 = vadd.f32 %v3400, %v3546
        %v3548 = vpop.f32.mrf.mxu0
        %3549 = vdwg.mxu0
        %3550 = vst.msk [vmem:[%s280] sm:$0xff] %vm328, %v3475
        %3551 = vst.msk [vmem:[%s280 + $0x8] sm:$0xff] %vm328, %v3481
        %3552 = vst.msk [vmem:[%s280 + $0x10] sm:$0xff] %vm328, %v3487
        %3553 = vst.msk [vmem:[%s280 + $0x18] sm:$0xff] %vm328, %v3493
        %3554 = vst.msk [vmem:[%s280 + $0x20] sm:$0xff] %vm328, %v3499
        %3555 = vst.msk [vmem:[%s280 + $0x28] sm:$0xff] %vm328, %v3505
        %3556 = vst.msk [vmem:[%s280 + $0x30] sm:$0xff] %vm328, %v3511
        %3557 = vst.msk [vmem:[%s280 + $0x38] sm:$0xff] %vm328, %v3517
        %3558 = vst.msk [vmem:[%s280 + $0x40] sm:$0xff] %vm328, %v3523
        %3559 = vst.msk [vmem:[%s280 + $0x48] sm:$0xff] %vm328, %v3529
        %3560 = vst.msk [vmem:[%s280 + $0x50] sm:$0xff] %vm328, %v3535
        %3561 = vst.msk [vmem:[%s280 + $0x58] sm:$0xff] %vm328, %v3541
        %3562 = vst.msk [vmem:[%s280 + $0x60] sm:$0xff] %vm328, %v3547
        %s3563 = sand.u32 %s178, 1
        %s3564 = sand.u32 %s178, 1
        %s3565 = smul.addr %s3564, 104
        %s3566 = scalar_lea.vmem [#allocation2], %s3565
        // Predicated region
        $region49: #{simple_autoencoder.1} parent=47 // pred_check
          %p3567 = pneg %p188
        $region50: #{simple_autoencoder.1} parent=47 // pred_check_branch
          %3569 = sbr.rel (%p3567) target = $region52
        $region51: #{simple_autoencoder.1} parent=47 // pred_region
          %s3570 = smul.u32 13, %s18
          %s3571 = ssub.s32 25, %s3570
          %p3572 = scmp.lt.s32.totalorder %s3571, 13
          %s3573 = scalar_select %p3572, %s3571, 13
          %s3574 = smul.u32 128, %s3573
          %p3575 = scmp.ne.s32.totalorder 0, %s3574
          %s3576 = smul.addr %s3570, 8
          %s3577 = scalar_lea.vmem %s7, %s3576
          // Predicated region
          $region53: #{simple_autoencoder.1} parent=51 // pred_check
            %p3578 = pneg %p3575
          $region54: #{simple_autoencoder.1} parent=51 // pred_check_branch
            %3580 = sbr.rel (%p3578) target = $region56
          $region55: #{simple_autoencoder.1} parent=51 // pred_region
            // Predicated region
            $region57: #{simple_autoencoder.1} parent=55 // pred_check
              _
            $region58: #{simple_autoencoder.1} parent=55 // pred_check_branch
              %3582 = sbr.rel (0) target = $region60
            $region59: #{simple_autoencoder.1} parent=55 // pred_region
              // Predicated region
              $region79: #{simple_autoencoder.1} parent=59 // pred_check
                _
              $region80: #{simple_autoencoder.1} parent=59 // pred_check_branch
                %3657 = sbr.rel (0) target = $region82
              $region81: #{simple_autoencoder.1} parent=59 // pred_region
                %s3658 = sdiv.u32.pop %s3573, 13
                %s3659 = srem.u32.pop %s3573, 13
                // While loop
                $region83: #{simple_autoencoder.1} parent=81 // loop_pre_header
                  _
                $region84: #{simple_autoencoder.1} parent=81 // loop_header
                  %s3661 = sphi 0, %s3663
                  %p3662 = scmp.ge.s32.totalorder %s3661, %s3658
                  %s3666 = sphi 0, %s3697
                  %s3667 = sphi %s3566, %s3700
                  %s3668 = sphi %s3577, %s3701
                $region85: #{simple_autoencoder.1} parent=81 // loop_header_branch
                  %3665 = sbr.rel (%p3662) target = $region89
                $region86: #{simple_autoencoder.1} parent=81 // loop_body
                  %v3669 = vld [vmem:[%s3667] sm:$0xff]
                  %3670 = vst [vmem:[%s3668] sm:$0xff] %v3669
                  %v3671 = vld [vmem:[%s3667 + $0x8] sm:$0xff]
                  %3672 = vst [vmem:[%s3668 + $0x8] sm:$0xff] %v3671
                  %v3673 = vld [vmem:[%s3667 + $0x10] sm:$0xff]
                  %3674 = vst [vmem:[%s3668 + $0x10] sm:$0xff] %v3673
                  %v3675 = vld [vmem:[%s3667 + $0x18] sm:$0xff]
                  %3676 = vst [vmem:[%s3668 + $0x18] sm:$0xff] %v3675
                  %v3677 = vld [vmem:[%s3667 + $0x20] sm:$0xff]
                  %3678 = vst [vmem:[%s3668 + $0x20] sm:$0xff] %v3677
                  %v3679 = vld [vmem:[%s3667 + $0x28] sm:$0xff]
                  %3680 = vst [vmem:[%s3668 + $0x28] sm:$0xff] %v3679
                  %v3681 = vld [vmem:[%s3667 + $0x30] sm:$0xff]
                  %3682 = vst [vmem:[%s3668 + $0x30] sm:$0xff] %v3681
                  %v3683 = vld [vmem:[%s3667 + $0x38] sm:$0xff]
                  %3684 = vst [vmem:[%s3668 + $0x38] sm:$0xff] %v3683
                  %v3685 = vld [vmem:[%s3667 + $0x40] sm:$0xff]
                  %3686 = vst [vmem:[%s3668 + $0x40] sm:$0xff] %v3685
                  %v3687 = vld [vmem:[%s3667 + $0x48] sm:$0xff]
                  %3688 = vst [vmem:[%s3668 + $0x48] sm:$0xff] %v3687
                  %v3689 = vld [vmem:[%s3667 + $0x50] sm:$0xff]
                  %3690 = vst [vmem:[%s3668 + $0x50] sm:$0xff] %v3689
                  %v3691 = vld [vmem:[%s3667 + $0x58] sm:$0xff]
                  %3692 = vst [vmem:[%s3668 + $0x58] sm:$0xff] %v3691
                  %v3693 = vld [vmem:[%s3667 + $0x60] sm:$0xff]
                  %3694 = vst [vmem:[%s3668 + $0x60] sm:$0xff] %v3693
                  %s3695 = sadd.s32 1, %s3666
                  %p3696 = scmp.ge.s32.totalorder %s3695, %s3658
                  %s3697 = scalar_select %p3696, 0, %s3695
                  %s3698 = smul.u32 %s3697, 104
                  %s3699 = smul.u32 %s3697, 104
                  %s3700 = scalar_lea.vmem %s3566, %s3698 [#allocation2]
                  %s3701 = scalar_lea.vmem %s3577, %s3699
                $region87: #{simple_autoencoder.1} parent=81 // loop_footer
                  %s3663 = sadd.s32 %s3661, 1
                $region88: #{simple_autoencoder.1} parent=81 // loop_footer_branch
                  %3660 = sbr.rel target = $region84
                $region89: #{simple_autoencoder.1} parent=81 // loop_exit
                  _
                %s3702 = sdiv.u32.pop %s3573, 13
                %s3703 = srem.u32.pop %s3573, 13
                %s3704 = smul.u32 %s3702, 13
                %s3705 = smul.u32 8, %s3704
                %s3706 = scalar_lea.vmem %s3566, %s3705 [#allocation2]
                %s3707 = smul.u32 8, %s3704
                %s3708 = scalar_lea.vmem %s3577, %s3707
                // While loop
                $region90: #{simple_autoencoder.1} parent=81 // loop_pre_header
                  _
                $region91: #{simple_autoencoder.1} parent=81 // loop_header
                  %s3710 = sphi 0, %s3712
                  %p3711 = scmp.ge.s32.totalorder %s3710, %s3703
                  %s3715 = sphi 0, %s3722
                  %s3716 = sphi %s3706, %s3725
                  %s3717 = sphi %s3708, %s3726
                $region92: #{simple_autoencoder.1} parent=81 // loop_header_branch
                  %3714 = sbr.rel (%p3711) target = $region96
                $region93: #{simple_autoencoder.1} parent=81 // loop_body
                  %v3718 = vld [vmem:[%s3716] sm:$0xff]
                  %3719 = vst [vmem:[%s3717] sm:$0xff] %v3718
                  %s3720 = sadd.s32 1, %s3715
                  %p3721 = scmp.ge.s32.totalorder %s3720, %s3703
                  %s3722 = scalar_select %p3721, 0, %s3720
                  %s3723 = smul.u32 %s3722, 8
                  %s3724 = smul.u32 %s3722, 8
                  %s3725 = scalar_lea.vmem %s3706, %s3723 [#allocation2]
                  %s3726 = scalar_lea.vmem %s3708, %s3724
                $region94: #{simple_autoencoder.1} parent=81 // loop_footer
                  %s3712 = sadd.s32 %s3710, 1
                $region95: #{simple_autoencoder.1} parent=81 // loop_footer_branch
                  %3709 = sbr.rel target = $region91
                $region96: #{simple_autoencoder.1} parent=81 // loop_exit
                  _
              $region82: #{simple_autoencoder.1} parent=59 // pred_fallthru
                _
              // Predicated region
              $region97: #{simple_autoencoder.1} parent=59 // pred_check
                _
              $region98: #{simple_autoencoder.1} parent=59 // pred_check_branch
                %3728 = sbr.rel target = $region100
              $region99: #{simple_autoencoder.1} parent=59 // pred_region
                _
              $region100: #{simple_autoencoder.1} parent=59 // pred_fallthru
                _
            $region60: #{simple_autoencoder.1} parent=55 // pred_fallthru
              _
            // Predicated region
            $region61: #{simple_autoencoder.1} parent=55 // pred_check
              _
            $region62: #{simple_autoencoder.1} parent=55 // pred_check_branch
              %3584 = sbr.rel target = $region64
            $region63: #{simple_autoencoder.1} parent=55 // pred_region
              %s3586 = ssub.s32 256, 1
              %s3587 = sdiv.u32.pop %s3573, 13
              %s3588 = srem.u32.pop %s3573, 13
              // While loop
              $region65: #{simple_autoencoder.1} parent=63 // loop_pre_header
                _
              $region66: #{simple_autoencoder.1} parent=63 // loop_header
                %s3590 = sphi 0, %s3592
                %p3591 = scmp.ge.s32.totalorder %s3590, %s3587
                %s3595 = sphi 0, %s3626
                %s3596 = sphi %s3566, %s3629
                %s3597 = sphi %s3577, %s3630
              $region67: #{simple_autoencoder.1} parent=63 // loop_header_branch
                %3594 = sbr.rel (%p3591) target = $region71
              $region68: #{simple_autoencoder.1} parent=63 // loop_body
                %v3598 = vld [vmem:[%s3596] sm:%s3586]
                %3599 = vst [vmem:[%s3597] sm:%s3586] %v3598
                %v3600 = vld [vmem:[%s3596 + $0x8] sm:%s3586]
                %3601 = vst [vmem:[%s3597 + $0x8] sm:%s3586] %v3600
                %v3602 = vld [vmem:[%s3596 + $0x10] sm:%s3586]
                %3603 = vst [vmem:[%s3597 + $0x10] sm:%s3586] %v3602
                %v3604 = vld [vmem:[%s3596 + $0x18] sm:%s3586]
                %3605 = vst [vmem:[%s3597 + $0x18] sm:%s3586] %v3604
                %v3606 = vld [vmem:[%s3596 + $0x20] sm:%s3586]
                %3607 = vst [vmem:[%s3597 + $0x20] sm:%s3586] %v3606
                %v3608 = vld [vmem:[%s3596 + $0x28] sm:%s3586]
                %3609 = vst [vmem:[%s3597 + $0x28] sm:%s3586] %v3608
                %v3610 = vld [vmem:[%s3596 + $0x30] sm:%s3586]
                %3611 = vst [vmem:[%s3597 + $0x30] sm:%s3586] %v3610
                %v3612 = vld [vmem:[%s3596 + $0x38] sm:%s3586]
                %3613 = vst [vmem:[%s3597 + $0x38] sm:%s3586] %v3612
                %v3614 = vld [vmem:[%s3596 + $0x40] sm:%s3586]
                %3615 = vst [vmem:[%s3597 + $0x40] sm:%s3586] %v3614
                %v3616 = vld [vmem:[%s3596 + $0x48] sm:%s3586]
                %3617 = vst [vmem:[%s3597 + $0x48] sm:%s3586] %v3616
                %v3618 = vld [vmem:[%s3596 + $0x50] sm:%s3586]
                %3619 = vst [vmem:[%s3597 + $0x50] sm:%s3586] %v3618
                %v3620 = vld [vmem:[%s3596 + $0x58] sm:%s3586]
                %3621 = vst [vmem:[%s3597 + $0x58] sm:%s3586] %v3620
                %v3622 = vld [vmem:[%s3596 + $0x60] sm:%s3586]
                %3623 = vst [vmem:[%s3597 + $0x60] sm:%s3586] %v3622
                %s3624 = sadd.s32 1, %s3595
                %p3625 = scmp.ge.s32.totalorder %s3624, %s3587
                %s3626 = scalar_select %p3625, 0, %s3624
                %s3627 = smul.u32 %s3626, 104
                %s3628 = smul.u32 %s3626, 104
                %s3629 = scalar_lea.vmem %s3566, %s3627 [#allocation2]
                %s3630 = scalar_lea.vmem %s3577, %s3628
              $region69: #{simple_autoencoder.1} parent=63 // loop_footer
                %s3592 = sadd.s32 %s3590, 1
              $region70: #{simple_autoencoder.1} parent=63 // loop_footer_branch
                %3589 = sbr.rel target = $region66
              $region71: #{simple_autoencoder.1} parent=63 // loop_exit
                _
              %s3631 = sdiv.u32.pop %s3573, 13
              %s3632 = srem.u32.pop %s3573, 13
              %s3633 = smul.u32 %s3631, 13
              %s3634 = smul.u32 8, %s3633
              %s3635 = scalar_lea.vmem %s3566, %s3634 [#allocation2]
              %s3636 = smul.u32 8, %s3633
              %s3637 = scalar_lea.vmem %s3577, %s3636
              // While loop
              $region72: #{simple_autoencoder.1} parent=63 // loop_pre_header
                _
              $region73: #{simple_autoencoder.1} parent=63 // loop_header
                %s3639 = sphi 0, %s3641
                %p3640 = scmp.ge.s32.totalorder %s3639, %s3632
                %s3644 = sphi 0, %s3651
                %s3645 = sphi %s3635, %s3654
                %s3646 = sphi %s3637, %s3655
              $region74: #{simple_autoencoder.1} parent=63 // loop_header_branch
                %3643 = sbr.rel (%p3640) target = $region78
              $region75: #{simple_autoencoder.1} parent=63 // loop_body
                %v3647 = vld [vmem:[%s3645] sm:%s3586]
                %3648 = vst [vmem:[%s3646] sm:%s3586] %v3647
                %s3649 = sadd.s32 1, %s3644
                %p3650 = scmp.ge.s32.totalorder %s3649, %s3632
                %s3651 = scalar_select %p3650, 0, %s3649
                %s3652 = smul.u32 %s3651, 8
                %s3653 = smul.u32 %s3651, 8
                %s3654 = scalar_lea.vmem %s3635, %s3652 [#allocation2]
                %s3655 = scalar_lea.vmem %s3637, %s3653
              $region76: #{simple_autoencoder.1} parent=63 // loop_footer
                %s3641 = sadd.s32 %s3639, 1
              $region77: #{simple_autoencoder.1} parent=63 // loop_footer_branch
                %3638 = sbr.rel target = $region73
              $region78: #{simple_autoencoder.1} parent=63 // loop_exit
                _
            $region64: #{simple_autoencoder.1} parent=55 // pred_fallthru
              _
          $region56: #{simple_autoencoder.1} parent=51 // pred_fallthru
            _
          %3729 = vnop
        $region52: #{simple_autoencoder.1} parent=47 // pred_fallthru
          _
      $region48: #{simple_autoencoder.1} parent=5 // pred_fallthru
        _
      %p3730 = scmp.le.s32.totalorder 2, %s13
      // Predicated region
      $region101: #{simple_autoencoder.1} parent=5 // pred_check
        %p3731 = pneg %p3730
      $region102: #{simple_autoencoder.1} parent=5 // pred_check_branch
        %3733 = sbr.rel (%p3731) target = $region104
      $region103: #{simple_autoencoder.1} parent=5 // pred_region
        %s3734 = ssub.s32 %s13, 2
        // Predicated region
        $region105: #{simple_autoencoder.1} parent=103 // pred_check
          %p3735 = pneg %p194
        $region106: #{simple_autoencoder.1} parent=103 // pred_check_branch
          %3737 = sbr.rel (%p3735) target = $region108
        $region107: #{simple_autoencoder.1} parent=103 // pred_region
          %s3738 = sand.u32 %s179, 1
          %s3739 = sand.u32 %s179, 1
          %s3740 = smul.addr %s3739, 104
          %s3741 = scalar_lea.vmem [#allocation2], %s3740
        $region108: #{simple_autoencoder.1} parent=103 // pred_fallthru
          _
      $region104: #{simple_autoencoder.1} parent=5 // pred_fallthru
        _
    $region6: #{simple_autoencoder.1} parent=1 // loop_footer
      %s17 = sadd.s32 1, %s13
    $region7: #{simple_autoencoder.1} parent=1 // loop_footer_branch
      %12 = sbr.rel target = $region3
    $region8: #{simple_autoencoder.1} parent=1 // loop_exit
      _

</llo_original>
